<compile_context>
chip_gen: v5e
topology: v5e:2x2
jax: 0.10.0
libtpu: 0.0.40
codegen_flags: <defaults>
</compile_context>

<pallas_src>
import functools

import jax
import jax.numpy as jnp
from jax import lax
from jax.experimental import pallas as pl
from jax.experimental.pallas import tpu as pltpu

K = 3      # conv kernel size
POOL = 2   # max-pool kernel / stride


def _make_contracting_kernel(H):
    H1 = H - K + 1
    H2 = H1 - K + 1
    dot = functools.partial(jnp.dot, preferred_element_type=jnp.float32,
                            precision=lax.Precision.HIGHEST)

    def kernel(x_ref, m1_ref, b1_ref, m2_ref, b2_ref, tw_ref, sh_ref, o_ref):
        # x_ref : (1, H, W*Cin)          m1_ref: (K, W*Cin,  W1*Cmid)
        # b1_ref: (1, W1*Cmid)           m2_ref: (K, W1*Cmid, W2*Cmid)
        # b2_ref: (1, W2*Cmid)           tw_ref: (2, W2*Cmid, Wp*Cmid)
        # sh_ref: (2, Hp, H2)            o_ref : (1, Hp, Wp*Cmid)
        x = x_ref[0]                                           # (H, W*Cin)

        # ---- conv1: sum of K row-shifted MXU matmuls + bias + ReLU ----
        acc1 = dot(x[0:H1, :], m1_ref[0])
        for di in range(1, K):
            acc1 = acc1 + dot(x[di:di + H1, :], m1_ref[di])
        a1 = jnp.maximum(acc1 + b1_ref[...], 0.0)              # (H1, W1*Cmid)

        # ---- conv2: same scheme on the lane-dense slab ----
        acc2 = dot(a1[0:H2, :], m2_ref[0])
        for di in range(1, K):
            acc2 = acc2 + dot(a1[di:di + H2, :], m2_ref[di])
        a2 = jnp.maximum(acc2 + b2_ref[...], 0.0)              # (H2, W2*Cmid)

        # ---- 2x2 max-pool, fully vectorized ----
        # even/odd column (W) groups selected by right-matmul with 0/1 matrices
        wmax = jnp.maximum(dot(a2, tw_ref[0]), dot(a2, tw_ref[1]))        # (H2, Wp*Cmid)
        # even/odd rows (H) selected by left-matmul with 0/1 matrices
        pooled = jnp.maximum(dot(sh_ref[0], wmax), dot(sh_ref[1], wmax))  # (Hp, Wp*Cmid)

        o_ref[0] = pooled                                      # single full-block store

    return kernel


@jax.jit
def contracting_pallas(x_nhwc, w1, b1, w2, b2):
    """x_nhwc: (N,H,W,Cin) f32; w1/w2 in HWIO; returns NHWC (N, Hp, Wp, Cmid)."""
    N, H, W, Cin = x_nhwc.shape
    Cmid = w1.shape[-1]
    H1, W1 = H - K + 1, W - K + 1
    H2, W2 = H1 - K + 1, W1 - K + 1
    Hp, Wp = H2 // POOL, W2 // POOL
    f32 = jnp.float32

    # ---------- wrapper-side packing (pure layout, no conv compute) ----------
    x2d = x_nhwc.reshape(N, H, W * Cin)                        # lane-dense input slab

    # Block-Toeplitz weights: row-shift di of the input times m{1,2}[di] realizes the
    # 3x3 VALID conv as K matmuls per conv.
    m1 = jnp.stack([
        sum(jnp.kron(jnp.eye(W, W1, k=-dj, dtype=f32), w1[di, dj].astype(f32))
            for dj in range(K))
        for di in range(K)])                                   # (K, W*Cin,  W1*Cmid)
    m2 = jnp.stack([
        sum(jnp.kron(jnp.eye(W1, W2, k=-dj, dtype=f32), w2[di, dj].astype(f32))
            for dj in range(K))
        for di in range(K)])                                   # (K, W1*Cmid, W2*Cmid)
    b1_row = jnp.tile(b1.astype(f32), W1)[None, :]             # (1, W1*Cmid)
    b2_row = jnp.tile(b2.astype(f32), W2)[None, :]             # (1, W2*Cmid)

    # 0/1 selection matrices for the 2x2 max-pool.
    eyec = jnp.eye(Cmid, dtype=f32)
    e_even = (jnp.arange(W2)[:, None] == 2 * jnp.arange(Wp)[None, :]).astype(f32)
    e_odd = (jnp.arange(W2)[:, None] == 2 * jnp.arange(Wp)[None, :] + 1).astype(f32)
    tw = jnp.stack([jnp.kron(e_even, eyec), jnp.kron(e_odd, eyec)])   # (2, W2*Cmid, Wp*Cmid)
    sh = jnp.stack([
        (2 * jnp.arange(Hp)[:, None] == jnp.arange(H2)[None, :]).astype(f32),
        (2 * jnp.arange(Hp)[:, None] + 1 == jnp.arange(H2)[None, :]).astype(f32),
    ])                                                                 # (2, Hp, H2)

    kernel = _make_contracting_kernel(H)

    grid_spec = pltpu.PrefetchScalarGridSpec(
        num_scalar_prefetch=0,
        grid=(N,),
        in_specs=[
            pl.BlockSpec((1, H, W * Cin), lambda n: (n, 0, 0)),
            pl.BlockSpec((K, W * Cin, W1 * Cmid), lambda n: (0, 0, 0)),
            pl.BlockSpec((1, W1 * Cmid), lambda n: (0, 0)),
            pl.BlockSpec((K, W1 * Cmid, W2 * Cmid), lambda n: (0, 0, 0)),
            pl.BlockSpec((1, W2 * Cmid), lambda n: (0, 0)),
            pl.BlockSpec((2, W2 * Cmid, Wp * Cmid), lambda n: (0, 0, 0)),
            pl.BlockSpec((2, Hp, H2), lambda n: (0, 0, 0)),
        ],
        out_specs=pl.BlockSpec((1, Hp, Wp * Cmid), lambda n: (n, 0, 0)),
    )

    out_flat = pl.pallas_call(
        kernel,
        out_shape=jax.ShapeDtypeStruct((N, Hp, Wp * Cmid), f32),
        grid_spec=grid_spec,
        compiler_params=pltpu.CompilerParams(
            dimension_semantics=("parallel",)),   # batch axis shardable across v7x TCs
    )(x2d, m1, b1_row, m2, b2_row, tw, sh)

    return out_flat.reshape(N, Hp, Wp, Cmid)


def contracting_reference(x_nhwc, w1, b1, w2, b2):
    dn = ("NHWC", "HWIO", "NHWC")
    y = lax.conv_general_dilated(x_nhwc, w1, (1, 1), "VALID", dimension_numbers=dn,
                                 precision=lax.Precision.HIGHEST)
    y = jnp.maximum(y + b1.reshape(1, 1, 1, -1), 0.0)
    y = lax.conv_general_dilated(y, w2, (1, 1), "VALID", dimension_numbers=dn,
                                 precision=lax.Precision.HIGHEST)
    y = jnp.maximum(y + b2.reshape(1, 1, 1, -1), 0.0)
    y = lax.reduce_window(y, -jnp.inf, lax.max,
                          (1, POOL, POOL, 1), (1, POOL, POOL, 1), "VALID")
    return y


if __name__ == "__main__":
    # PyTorch-layout inputs consistent with the module: batch=2, C_in=3, spatial=16.
    N, Cin, H, W = 2, 3, 16, 16
    Cmid = Cin * 2

    key = jax.random.PRNGKey(0)
    kx, kw1, kb1, kw2, kb2 = jax.random.split(key, 5)

    x_nchw = jax.random.normal(kx, (N, Cin, H, W), dtype=jnp.float32)

    # PyTorch-style init (uniform +-1/sqrt(fan_in)), OIHW weights.
    fan1, fan2 = Cin * K * K, Cmid * K * K
    w1_oihw = jax.random.uniform(kw1, (Cmid, Cin, K, K), jnp.float32,
                                 -1.0 / fan1 ** 0.5, 1.0 / fan1 ** 0.5)
    b1 = jax.random.uniform(kb1, (Cmid,), jnp.float32,
                            -1.0 / fan1 ** 0.5, 1.0 / fan1 ** 0.5)
    w2_oihw = jax.random.uniform(kw2, (Cmid, Cmid, K, K), jnp.float32,
                                 -1.0 / fan2 ** 0.5, 1.0 / fan2 ** 0.5)
    b2 = jax.random.uniform(kb2, (Cmid,), jnp.float32,
                            -1.0 / fan2 ** 0.5, 1.0 / fan2 ** 0.5)

    # NCHW / OIHW (PyTorch) -> NHWC / HWIO (kernel layout).
    x_nhwc = jnp.transpose(x_nchw, (0, 2, 3, 1))
    w1 = jnp.transpose(w1_oihw, (2, 3, 1, 0))
    w2 = jnp.transpose(w2_oihw, (2, 3, 1, 0))

    out_nhwc = jax.block_until_ready(contracting_pallas(x_nhwc, w1, b1, w2, b2))

    ref_nhwc = contracting_reference(x_nhwc, w1, b1, w2, b2)
    Hp, Wp = (H - 2 * (K - 1)) // POOL, (W - 2 * (K - 1)) // POOL
    assert out_nhwc.shape == (N, Hp, Wp, Cmid)
    assert jnp.allclose(out_nhwc, ref_nhwc, atol=1e-2, rtol=1e-2), "mismatch vs reference"

    # PyTorch axis convention (NCHW) view of the result.
    out_nchw = jnp.transpose(out_nhwc, (0, 3, 1, 2))
    assert out_nchw.shape == (N, Cmid, Hp, Wp)

    print("KERNEL_OK")
</pallas_src>

<mosaic_0001>
module attributes {stable_mosaic.version = 11 : i64} {
  func.func @kernel(%arg0: i32, %arg1: memref<1x16x48xf32, #tpu.memory_space<vmem>>, %arg2: memref<3x48x84xf32, #tpu.memory_space<vmem>>, %arg3: memref<1x84xf32, #tpu.memory_space<vmem>>, %arg4: memref<3x84x72xf32, #tpu.memory_space<vmem>>, %arg5: memref<1x72xf32, #tpu.memory_space<vmem>>, %arg6: memref<2x72x36xf32, #tpu.memory_space<vmem>>, %arg7: memref<2x6x12xf32, #tpu.memory_space<vmem>>, %arg8: memref<1x6x36xf32, #tpu.memory_space<vmem>>) attributes {dimension_semantics = [#tpu.dimension_semantics<parallel>], iteration_bounds = array<i64: 2>, scalar_prefetch = 0 : i64, scratch_operands = 0 : i64, tpu.core_type = #tpu.core_type<tc>, window_params = [{transform_indices = @transform_0, window_bounds = array<i64: 1, 16, 48>}, {pipeline_mode = #tpu.pipeline_mode<synchronous>, transform_indices = @transform_1, window_bounds = array<i64: 3, 48, 84>}, {pipeline_mode = #tpu.pipeline_mode<synchronous>, transform_indices = @transform_2, window_bounds = array<i64: 1, 84>}, {pipeline_mode = #tpu.pipeline_mode<synchronous>, transform_indices = @transform_3, window_bounds = array<i64: 3, 84, 72>}, {pipeline_mode = #tpu.pipeline_mode<synchronous>, transform_indices = @transform_4, window_bounds = array<i64: 1, 72>}, {pipeline_mode = #tpu.pipeline_mode<synchronous>, transform_indices = @transform_5, window_bounds = array<i64: 2, 72, 36>}, {pipeline_mode = #tpu.pipeline_mode<synchronous>, transform_indices = @transform_6, window_bounds = array<i64: 2, 6, 12>}, {transform_indices = @transform_7, window_bounds = array<i64: 1, 6, 36>}]} {
    %c0 = arith.constant 0 : index
    %c0_0 = arith.constant 0 : index
    %c0_1 = arith.constant 0 : index
    %0 = vector.load %arg1[%c0, %c0_0, %c0_1] : memref<1x16x48xf32, #tpu.memory_space<vmem>>, vector<1x16x48xf32>
    %1 = vector.shape_cast %0 : vector<1x16x48xf32> to vector<16x48xf32>
    %2 = vector.extract_strided_slice %1 {offsets = [0, 0], sizes = [14, 48], strides = [1, 1]} : vector<16x48xf32> to vector<14x48xf32>
    %c0_2 = arith.constant 0 : index
    %c0_3 = arith.constant 0 : index
    %c0_4 = arith.constant 0 : index
    %3 = vector.load %arg2[%c0_2, %c0_3, %c0_4] : memref<3x48x84xf32, #tpu.memory_space<vmem>>, vector<1x48x84xf32>
    %4 = vector.shape_cast %3 : vector<1x48x84xf32> to vector<48x84xf32>
    %cst = arith.constant dense<0.000000e+00> : vector<14x84xf32>
    %5 = tpu.matmul %2, %4, %cst {dimension_numbers = #tpu.dot_dimension_numbers<[1], [0], [0], [1], [0, 0, 1, 1], [], []>, precision = #tpu.contract_precision<fp32>} : vector<14x48xf32>, vector<48x84xf32>, vector<14x84xf32> -> vector<14x84xf32>
    %6 = vector.extract_strided_slice %1 {offsets = [1, 0], sizes = [14, 48], strides = [1, 1]} : vector<16x48xf32> to vector<14x48xf32>
    %c1 = arith.constant 1 : index
    %c0_5 = arith.constant 0 : index
    %c0_6 = arith.constant 0 : index
    %7 = vector.load %arg2[%c1, %c0_5, %c0_6] : memref<3x48x84xf32, #tpu.memory_space<vmem>>, vector<1x48x84xf32>
    %8 = vector.shape_cast %7 : vector<1x48x84xf32> to vector<48x84xf32>
    %cst_7 = arith.constant dense<0.000000e+00> : vector<14x84xf32>
    %9 = tpu.matmul %6, %8, %cst_7 {dimension_numbers = #tpu.dot_dimension_numbers<[1], [0], [0], [1], [0, 0, 1, 1], [], []>, precision = #tpu.contract_precision<fp32>} : vector<14x48xf32>, vector<48x84xf32>, vector<14x84xf32> -> vector<14x84xf32>
    %10 = arith.addf %5, %9 : vector<14x84xf32>
    %11 = vector.extract_strided_slice %1 {offsets = [2, 0], sizes = [14, 48], strides = [1, 1]} : vector<16x48xf32> to vector<14x48xf32>
    %c2 = arith.constant 2 : index
    %c0_8 = arith.constant 0 : index
    %c0_9 = arith.constant 0 : index
    %12 = vector.load %arg2[%c2, %c0_8, %c0_9] : memref<3x48x84xf32, #tpu.memory_space<vmem>>, vector<1x48x84xf32>
    %13 = vector.shape_cast %12 : vector<1x48x84xf32> to vector<48x84xf32>
    %cst_10 = arith.constant dense<0.000000e+00> : vector<14x84xf32>
    %14 = tpu.matmul %11, %13, %cst_10 {dimension_numbers = #tpu.dot_dimension_numbers<[1], [0], [0], [1], [0, 0, 1, 1], [], []>, precision = #tpu.contract_precision<fp32>} : vector<14x48xf32>, vector<48x84xf32>, vector<14x84xf32> -> vector<14x84xf32>
    %15 = arith.addf %10, %14 : vector<14x84xf32>
    %c0_11 = arith.constant 0 : index
    %c0_12 = arith.constant 0 : index
    %16 = vector.load %arg3[%c0_11, %c0_12] : memref<1x84xf32, #tpu.memory_space<vmem>>, vector<1x84xf32>
    %17 = vector.broadcast %16 : vector<1x84xf32> to vector<14x84xf32>
    %18 = arith.addf %15, %17 : vector<14x84xf32>
    %cst_13 = arith.constant 0.000000e+00 : f32
    %19 = vector.broadcast %cst_13 : f32 to vector<14x84xf32>
    %20 = arith.maximumf %18, %19 : vector<14x84xf32>
    %21 = vector.extract_strided_slice %20 {offsets = [0, 0], sizes = [12, 84], strides = [1, 1]} : vector<14x84xf32> to vector<12x84xf32>
    %c0_14 = arith.constant 0 : index
    %c0_15 = arith.constant 0 : index
    %c0_16 = arith.constant 0 : index
    %22 = vector.load %arg4[%c0_14, %c0_15, %c0_16] : memref<3x84x72xf32, #tpu.memory_space<vmem>>, vector<1x84x72xf32>
    %23 = vector.shape_cast %22 : vector<1x84x72xf32> to vector<84x72xf32>
    %cst_17 = arith.constant dense<0.000000e+00> : vector<12x72xf32>
    %24 = tpu.matmul %21, %23, %cst_17 {dimension_numbers = #tpu.dot_dimension_numbers<[1], [0], [0], [1], [0, 0, 1, 1], [], []>, precision = #tpu.contract_precision<fp32>} : vector<12x84xf32>, vector<84x72xf32>, vector<12x72xf32> -> vector<12x72xf32>
    %25 = vector.extract_strided_slice %20 {offsets = [1, 0], sizes = [12, 84], strides = [1, 1]} : vector<14x84xf32> to vector<12x84xf32>
    %c1_18 = arith.constant 1 : index
    %c0_19 = arith.constant 0 : index
    %c0_20 = arith.constant 0 : index
    %26 = vector.load %arg4[%c1_18, %c0_19, %c0_20] : memref<3x84x72xf32, #tpu.memory_space<vmem>>, vector<1x84x72xf32>
    %27 = vector.shape_cast %26 : vector<1x84x72xf32> to vector<84x72xf32>
    %cst_21 = arith.constant dense<0.000000e+00> : vector<12x72xf32>
    %28 = tpu.matmul %25, %27, %cst_21 {dimension_numbers = #tpu.dot_dimension_numbers<[1], [0], [0], [1], [0, 0, 1, 1], [], []>, precision = #tpu.contract_precision<fp32>} : vector<12x84xf32>, vector<84x72xf32>, vector<12x72xf32> -> vector<12x72xf32>
    %29 = arith.addf %24, %28 : vector<12x72xf32>
    %30 = vector.extract_strided_slice %20 {offsets = [2, 0], sizes = [12, 84], strides = [1, 1]} : vector<14x84xf32> to vector<12x84xf32>
    %c2_22 = arith.constant 2 : index
    %c0_23 = arith.constant 0 : index
    %c0_24 = arith.constant 0 : index
    %31 = vector.load %arg4[%c2_22, %c0_23, %c0_24] : memref<3x84x72xf32, #tpu.memory_space<vmem>>, vector<1x84x72xf32>
    %32 = vector.shape_cast %31 : vector<1x84x72xf32> to vector<84x72xf32>
    %cst_25 = arith.constant dense<0.000000e+00> : vector<12x72xf32>
    %33 = tpu.matmul %30, %32, %cst_25 {dimension_numbers = #tpu.dot_dimension_numbers<[1], [0], [0], [1], [0, 0, 1, 1], [], []>, precision = #tpu.contract_precision<fp32>} : vector<12x84xf32>, vector<84x72xf32>, vector<12x72xf32> -> vector<12x72xf32>
    %34 = arith.addf %29, %33 : vector<12x72xf32>
    %c0_26 = arith.constant 0 : index
    %c0_27 = arith.constant 0 : index
    %35 = vector.load %arg5[%c0_26, %c0_27] : memref<1x72xf32, #tpu.memory_space<vmem>>, vector<1x72xf32>
    %36 = vector.broadcast %35 : vector<1x72xf32> to vector<12x72xf32>
    %37 = arith.addf %34, %36 : vector<12x72xf32>
    %cst_28 = arith.constant 0.000000e+00 : f32
    %38 = vector.broadcast %cst_28 : f32 to vector<12x72xf32>
    %39 = arith.maximumf %37, %38 : vector<12x72xf32>
    %c0_29 = arith.constant 0 : index
    %c0_30 = arith.constant 0 : index
    %c0_31 = arith.constant 0 : index
    %40 = vector.load %arg6[%c0_29, %c0_30, %c0_31] : memref<2x72x36xf32, #tpu.memory_space<vmem>>, vector<1x72x36xf32>
    %41 = vector.shape_cast %40 : vector<1x72x36xf32> to vector<72x36xf32>
    %cst_32 = arith.constant dense<0.000000e+00> : vector<12x36xf32>
    %42 = tpu.matmul %39, %41, %cst_32 {dimension_numbers = #tpu.dot_dimension_numbers<[1], [0], [0], [1], [0, 0, 1, 1], [], []>, precision = #tpu.contract_precision<fp32>} : vector<12x72xf32>, vector<72x36xf32>, vector<12x36xf32> -> vector<12x36xf32>
    %c1_33 = arith.constant 1 : index
    %c0_34 = arith.constant 0 : index
    %c0_35 = arith.constant 0 : index
    %43 = vector.load %arg6[%c1_33, %c0_34, %c0_35] : memref<2x72x36xf32, #tpu.memory_space<vmem>>, vector<1x72x36xf32>
    %44 = vector.shape_cast %43 : vector<1x72x36xf32> to vector<72x36xf32>
    %cst_36 = arith.constant dense<0.000000e+00> : vector<12x36xf32>
    %45 = tpu.matmul %39, %44, %cst_36 {dimension_numbers = #tpu.dot_dimension_numbers<[1], [0], [0], [1], [0, 0, 1, 1], [], []>, precision = #tpu.contract_precision<fp32>} : vector<12x72xf32>, vector<72x36xf32>, vector<12x36xf32> -> vector<12x36xf32>
    %46 = arith.maximumf %42, %45 : vector<12x36xf32>
    %c0_37 = arith.constant 0 : index
    %c0_38 = arith.constant 0 : index
    %c0_39 = arith.constant 0 : index
    %47 = vector.load %arg7[%c0_37, %c0_38, %c0_39] : memref<2x6x12xf32, #tpu.memory_space<vmem>>, vector<1x6x12xf32>
    %48 = vector.shape_cast %47 : vector<1x6x12xf32> to vector<6x12xf32>
    %cst_40 = arith.constant dense<0.000000e+00> : vector<6x36xf32>
    %49 = tpu.matmul %48, %46, %cst_40 {dimension_numbers = #tpu.dot_dimension_numbers<[1], [0], [0], [1], [0, 0, 1, 1], [], []>, precision = #tpu.contract_precision<fp32>} : vector<6x12xf32>, vector<12x36xf32>, vector<6x36xf32> -> vector<6x36xf32>
    %c1_41 = arith.constant 1 : index
    %c0_42 = arith.constant 0 : index
    %c0_43 = arith.constant 0 : index
    %50 = vector.load %arg7[%c1_41, %c0_42, %c0_43] : memref<2x6x12xf32, #tpu.memory_space<vmem>>, vector<1x6x12xf32>
    %51 = vector.shape_cast %50 : vector<1x6x12xf32> to vector<6x12xf32>
    %cst_44 = arith.constant dense<0.000000e+00> : vector<6x36xf32>
    %52 = tpu.matmul %51, %46, %cst_44 {dimension_numbers = #tpu.dot_dimension_numbers<[1], [0], [0], [1], [0, 0, 1, 1], [], []>, precision = #tpu.contract_precision<fp32>} : vector<6x12xf32>, vector<12x36xf32>, vector<6x36xf32> -> vector<6x36xf32>
    %53 = arith.maximumf %49, %52 : vector<6x36xf32>
    %c0_45 = arith.constant 0 : index
    %c0_46 = arith.constant 0 : index
    %c0_47 = arith.constant 0 : index
    %54 = vector.load %arg8[%c0_45, %c0_46, %c0_47] : memref<1x6x36xf32, #tpu.memory_space<vmem>>, vector<1x6x36xf32>
    %55 = vector.shape_cast %54 : vector<1x6x36xf32> to vector<6x36xf32>
    %56 = vector.shape_cast %53 : vector<6x36xf32> to vector<1x6x36xf32>
    tpu.vector_store %arg8[%c0_45, %c0_46, %c0_47], %56 {strides = array<i32>} : memref<1x6x36xf32, #tpu.memory_space<vmem>>, vector<1x6x36xf32>,
    return
  }
  func.func @transform_0(%arg0: i32) -> (i32, i32, i32) {
    %c0_i32 = arith.constant 0 : i32
    %c0_i32_0 = arith.constant 0 : i32
    %c0_i32_1 = arith.constant 0 : i32
    return %arg0, %c0_i32, %c0_i32_0 : i32, i32, i32
  }
  func.func @transform_1(%arg0: i32) -> (i32, i32, i32) {
    %c0_i32 = arith.constant 0 : i32
    %c0_i32_0 = arith.constant 0 : i32
    %c0_i32_1 = arith.constant 0 : i32
    %c0_i32_2 = arith.constant 0 : i32
    return %c0_i32, %c0_i32_0, %c0_i32_1 : i32, i32, i32
  }
  func.func @transform_2(%arg0: i32) -> (i32, i32) {
    %c0_i32 = arith.constant 0 : i32
    %c0_i32_0 = arith.constant 0 : i32
    %c0_i32_1 = arith.constant 0 : i32
    return %c0_i32, %c0_i32_0 : i32, i32
  }
  func.func @transform_3(%arg0: i32) -> (i32, i32, i32) {
    %c0_i32 = arith.constant 0 : i32
    %c0_i32_0 = arith.constant 0 : i32
    %c0_i32_1 = arith.constant 0 : i32
    %c0_i32_2 = arith.constant 0 : i32
    return %c0_i32, %c0_i32_0, %c0_i32_1 : i32, i32, i32
  }
  func.func @transform_4(%arg0: i32) -> (i32, i32) {
    %c0_i32 = arith.constant 0 : i32
    %c0_i32_0 = arith.constant 0 : i32
    %c0_i32_1 = arith.constant 0 : i32
    return %c0_i32, %c0_i32_0 : i32, i32
  }
  func.func @transform_5(%arg0: i32) -> (i32, i32, i32) {
    %c0_i32 = arith.constant 0 : i32
    %c0_i32_0 = arith.constant 0 : i32
    %c0_i32_1 = arith.constant 0 : i32
    %c0_i32_2 = arith.constant 0 : i32
    return %c0_i32, %c0_i32_0, %c0_i32_1 : i32, i32, i32
  }
  func.func @transform_6(%arg0: i32) -> (i32, i32, i32) {
    %c0_i32 = arith.constant 0 : i32
    %c0_i32_0 = arith.constant 0 : i32
    %c0_i32_1 = arith.constant 0 : i32
    %c0_i32_2 = arith.constant 0 : i32
    return %c0_i32, %c0_i32_0, %c0_i32_1 : i32, i32, i32
  }
  func.func @transform_7(%arg0: i32) -> (i32, i32, i32) {
    %c0_i32 = arith.constant 0 : i32
    %c0_i32_0 = arith.constant 0 : i32
    %c0_i32_1 = arith.constant 0 : i32
    return %arg0, %c0_i32, %c0_i32_0 : i32, i32, i32
  }
}

</mosaic_0001>

<llo_original>
// kernel: tile.13
$region0: #{tile.13}
  #allocation0 [shape = 's32[1]{0}', space=sflag, size = 0x4, scoped, tag = 'scoped memory for tile.13']
  %s0 = inlined_call_operand.vmem [shape: f32[6], index: 0, kind: input, shape index: {}]
  %s1 = inlined_call_operand.vmem [shape: f32[14,6], index: 1, kind: output, shape index: {}]
  // Predicated region
  $region2: #{tile.13} parent=0 // pred_check
    _
  $region3: #{tile.13} parent=0 // pred_check_branch
    %3 = sbr.rel (0) target = $region5
  $region4: #{tile.13} parent=0 // pred_region
    _
  $region5: #{tile.13} parent=0 // pred_fallthru
    _
  %v4 = vld [vmem:[%s0] ss:$0 sm:$0xff]
  %5 = vst [vmem:[%s1] sm:$0xff] %v4
  %s6 = scalar_lea.vmem %s1, 8
  %7 = vst [vmem:[%s6] sm:$0xff] %v4

// kernel: tile.14
$region0: #{tile.14}
  %s0 = inlined_call_operand.vmem [shape: f32[14,6], index: 0, kind: input, shape index: {}]
  %s1 = inlined_call_operand.vmem [shape: f32[1,84], index: 1, kind: output, shape index: {}]
  $region1: #{tile.14} parent=0
    #allocation0 [shape = 'u8[4096]{0}', space=vmem, size = 0x1000, scoped, tag = 'scoped mem for output reshape']
    %v2 = vld [vmem:[%s0] sm:$0x1]
    %vm3 = vcmask 48128
    %4 = vst.msk [vmem:[#allocation0] sm:$0x1] %vm3, %v2
    %s5 = scalar_lea.vmem %s0, 13
    %v6 = vld [vmem:[%s5] sm:$0x1]
    %7 = vrot.lane.b32.xlu0 %v6, 78
    %v8 = vpop.permute.xlu0 %7
    %vm9 = vcmask 687728
    %10 = vst.msk [vmem:[#allocation0] sm:$0x1] %vm9, %v8
    %s11 = scalar_lea.vmem %s0, 12
    %v12 = vld [vmem:[%s11] sm:$0x1]
    %13 = vrot.lane.b32.xlu0 %v12, 72
    %v14 = vpop.permute.xlu0 %13
    %vm15 = vcmask 638528
    %16 = vst.msk [vmem:[#allocation0] sm:$0x1] %vm15, %v14
    %s17 = scalar_lea.vmem %s0, 11
    %v18 = vld [vmem:[%s17] sm:$0x1]
    %19 = vrot.lane.b32.xlu0 %v18, 66
    %v20 = vpop.permute.xlu0 %19
    %vm21 = vcmask 589328
    %22 = vst.msk [vmem:[#allocation0] sm:$0x1] %vm21, %v20
    %s23 = scalar_lea.vmem %s0, 10
    %v24 = vld [vmem:[%s23] sm:$0x1]
    %25 = vrot.lane.b32.xlu0 %v24, 60
    %v26 = vpop.permute.xlu0 %25
    %vm27 = vcmask 540128
    %28 = vst.msk [vmem:[#allocation0] sm:$0x1] %vm27, %v26
    %s29 = scalar_lea.vmem %s0, 9
    %v30 = vld [vmem:[%s29] sm:$0x1]
    %31 = vrot.lane.b32.xlu0 %v30, 54
    %v32 = vpop.permute.xlu0 %31
    %vm33 = vcmask 490928
    %34 = vst.msk [vmem:[#allocation0] sm:$0x1] %vm33, %v32
    %s35 = scalar_lea.vmem %s0, 8
    %v36 = vld [vmem:[%s35] sm:$0x1]
    %37 = vrot.lane.b32.xlu0 %v36, 48
    %v38 = vpop.permute.xlu0 %37
    %vm39 = vcmask 441728
    %40 = vst.msk [vmem:[#allocation0] sm:$0x1] %vm39, %v38
    %s41 = scalar_lea.vmem %s0, 7
    %v42 = vld [vmem:[%s41] sm:$0x1]
    %43 = vrot.lane.b32.xlu0 %v42, 42
    %v44 = vpop.permute.xlu0 %43
    %vm45 = vcmask 392528
    %46 = vst.msk [vmem:[#allocation0] sm:$0x1] %vm45, %v44
    %s47 = scalar_lea.vmem %s0, 6
    %v48 = vld [vmem:[%s47] sm:$0x1]
    %49 = vrot.lane.b32.xlu0 %v48, 36
    %v50 = vpop.permute.xlu0 %49
    %vm51 = vcmask 343328
    %52 = vst.msk [vmem:[#allocation0] sm:$0x1] %vm51, %v50
    %s53 = scalar_lea.vmem %s0, 5
    %v54 = vld [vmem:[%s53] sm:$0x1]
    %55 = vrot.lane.b32.xlu0 %v54, 30
    %v56 = vpop.permute.xlu0 %55
    %vm57 = vcmask 294128
    %58 = vst.msk [vmem:[#allocation0] sm:$0x1] %vm57, %v56
    %s59 = scalar_lea.vmem %s0, 4
    %v60 = vld [vmem:[%s59] sm:$0x1]
    %61 = vrot.lane.b32.xlu0 %v60, 24
    %v62 = vpop.permute.xlu0 %61
    %vm63 = vcmask 244928
    %64 = vst.msk [vmem:[#allocation0] sm:$0x1] %vm63, %v62
    %s65 = scalar_lea.vmem %s0, 3
    %v66 = vld [vmem:[%s65] sm:$0x1]
    %67 = vrot.lane.b32.xlu0 %v66, 18
    %v68 = vpop.permute.xlu0 %67
    %vm69 = vcmask 195728
    %70 = vst.msk [vmem:[#allocation0] sm:$0x1] %vm69, %v68
    %s71 = scalar_lea.vmem %s0, 2
    %v72 = vld [vmem:[%s71] sm:$0x1]
    %73 = vrot.lane.b32.xlu0 %v72, 12
    %v74 = vpop.permute.xlu0 %73
    %vm75 = vcmask 146528
    %76 = vst.msk [vmem:[#allocation0] sm:$0x1] %vm75, %v74
    %s77 = scalar_lea.vmem %s0, 1
    %v78 = vld [vmem:[%s77] sm:$0x1]
    %79 = vrot.lane.b32.xlu0 %v78, 6
    %v80 = vpop.permute.xlu0 %79
    %vm81 = vcmask 97328
    %82 = vst.msk [vmem:[#allocation0] sm:$0x1] %vm81, %v80
    %s84 = ssub.s32 2, 1
    %v85 = vld [vmem:[#allocation0] sm:%s84]
    %s87 = ssub.s32 2, 1
    %88 = vst [vmem:[%s1] sm:%s87] %v85

// kernel: tile.18
$region0: #{tile.18}
  #allocation0 [shape = 's32[1]{0}', space=sflag, size = 0x4, scoped, tag = 'scoped memory for tile.18']
  %s0 = inlined_call_operand.vmem [shape: f32[6], index: 0, kind: input, shape index: {}]
  %s1 = inlined_call_operand.vmem [shape: f32[12,6], index: 1, kind: output, shape index: {}]
  // Predicated region
  $region2: #{tile.18} parent=0 // pred_check
    _
  $region3: #{tile.18} parent=0 // pred_check_branch
    %3 = sbr.rel (0) target = $region5
  $region4: #{tile.18} parent=0 // pred_region
    _
  $region5: #{tile.18} parent=0 // pred_fallthru
    _
  %v4 = vld [vmem:[%s0] ss:$0 sm:$0xff]
  %5 = vst [vmem:[%s1] sm:$0xff] %v4
  %s6 = scalar_lea.vmem %s1, 8
  %7 = vst [vmem:[%s6] sm:$0xff] %v4

// kernel: tile.19
$region0: #{tile.19}
  %s0 = inlined_call_operand.vmem [shape: f32[12,6], index: 0, kind: input, shape index: {}]
  %s1 = inlined_call_operand.vmem [shape: f32[1,72], index: 1, kind: output, shape index: {}]
  $region1: #{tile.19} parent=0
    #allocation0 [shape = 'u8[4096]{0}', space=vmem, size = 0x1000, scoped, tag = 'scoped mem for output reshape']
    %v2 = vld [vmem:[%s0] sm:$0x1]
    %vm3 = vcmask 48128
    %4 = vst.msk [vmem:[#allocation0] sm:$0x1] %vm3, %v2
    %s5 = scalar_lea.vmem %s0, 11
    %v6 = vld [vmem:[%s5] sm:$0x1]
    %7 = vrot.lane.b32.xlu0 %v6, 66
    %v8 = vpop.permute.xlu0 %7
    %vm9 = vcmask 589328
    %10 = vst.msk [vmem:[#allocation0] sm:$0x1] %vm9, %v8
    %s11 = scalar_lea.vmem %s0, 10
    %v12 = vld [vmem:[%s11] sm:$0x1]
    %13 = vrot.lane.b32.xlu0 %v12, 60
    %v14 = vpop.permute.xlu0 %13
    %vm15 = vcmask 540128
    %16 = vst.msk [vmem:[#allocation0] sm:$0x1] %vm15, %v14
    %s17 = scalar_lea.vmem %s0, 9
    %v18 = vld [vmem:[%s17] sm:$0x1]
    %19 = vrot.lane.b32.xlu0 %v18, 54
    %v20 = vpop.permute.xlu0 %19
    %vm21 = vcmask 490928
    %22 = vst.msk [vmem:[#allocation0] sm:$0x1] %vm21, %v20
    %s23 = scalar_lea.vmem %s0, 8
    %v24 = vld [vmem:[%s23] sm:$0x1]
    %25 = vrot.lane.b32.xlu0 %v24, 48
    %v26 = vpop.permute.xlu0 %25
    %vm27 = vcmask 441728
    %28 = vst.msk [vmem:[#allocation0] sm:$0x1] %vm27, %v26
    %s29 = scalar_lea.vmem %s0, 7
    %v30 = vld [vmem:[%s29] sm:$0x1]
    %31 = vrot.lane.b32.xlu0 %v30, 42
    %v32 = vpop.permute.xlu0 %31
    %vm33 = vcmask 392528
    %34 = vst.msk [vmem:[#allocation0] sm:$0x1] %vm33, %v32
    %s35 = scalar_lea.vmem %s0, 6
    %v36 = vld [vmem:[%s35] sm:$0x1]
    %37 = vrot.lane.b32.xlu0 %v36, 36
    %v38 = vpop.permute.xlu0 %37
    %vm39 = vcmask 343328
    %40 = vst.msk [vmem:[#allocation0] sm:$0x1] %vm39, %v38
    %s41 = scalar_lea.vmem %s0, 5
    %v42 = vld [vmem:[%s41] sm:$0x1]
    %43 = vrot.lane.b32.xlu0 %v42, 30
    %v44 = vpop.permute.xlu0 %43
    %vm45 = vcmask 294128
    %46 = vst.msk [vmem:[#allocation0] sm:$0x1] %vm45, %v44
    %s47 = scalar_lea.vmem %s0, 4
    %v48 = vld [vmem:[%s47] sm:$0x1]
    %49 = vrot.lane.b32.xlu0 %v48, 24
    %v50 = vpop.permute.xlu0 %49
    %vm51 = vcmask 244928
    %52 = vst.msk [vmem:[#allocation0] sm:$0x1] %vm51, %v50
    %s53 = scalar_lea.vmem %s0, 3
    %v54 = vld [vmem:[%s53] sm:$0x1]
    %55 = vrot.lane.b32.xlu0 %v54, 18
    %v56 = vpop.permute.xlu0 %55
    %vm57 = vcmask 195728
    %58 = vst.msk [vmem:[#allocation0] sm:$0x1] %vm57, %v56
    %s59 = scalar_lea.vmem %s0, 2
    %v60 = vld [vmem:[%s59] sm:$0x1]
    %61 = vrot.lane.b32.xlu0 %v60, 12
    %v62 = vpop.permute.xlu0 %61
    %vm63 = vcmask 146528
    %64 = vst.msk [vmem:[#allocation0] sm:$0x1] %vm63, %v62
    %s65 = scalar_lea.vmem %s0, 1
    %v66 = vld [vmem:[%s65] sm:$0x1]
    %67 = vrot.lane.b32.xlu0 %v66, 6
    %v68 = vpop.permute.xlu0 %67
    %vm69 = vcmask 97328
    %70 = vst.msk [vmem:[#allocation0] sm:$0x1] %vm69, %v68
    %s72 = ssub.s32 2, 1
    %v73 = vld [vmem:[#allocation0] sm:%s72]
    %s75 = ssub.s32 2, 1
    %76 = vst [vmem:[%s1] sm:%s75] %v73

// kernel: contracting_pallas.1
$region0: #{contracting_pallas.1}
  #allocation0 [shape = 'u32[]', space=smem, size = 0x4, offset = 0x4, fixed_abs, tag = 'smem constant byte address 0x4 - core index']
  #allocation1 [shape = 'u32[72,128]{1,0:T(1,128)}', space=vmem, size = 0x9000, scoped, tag = 'internal scratch']
  %s0 = inlined_call_operand.vmem [shape: f32[2,16,48], index: 0, kind: input, shape index: {}]
  %s1 = inlined_call_operand.vmem [shape: f32[3,48,84], index: 1, kind: input, shape index: {}]
  %s2 = inlined_call_operand.vmem [shape: f32[1,84], index: 2, kind: input, shape index: {}]
  %s3 = inlined_call_operand.vmem [shape: f32[3,84,72], index: 3, kind: input, shape index: {}]
  %s4 = inlined_call_operand.vmem [shape: f32[1,72], index: 4, kind: input, shape index: {}]
  %s5 = inlined_call_operand.vmem [shape: f32[2,72,36], index: 5, kind: input, shape index: {}]
  %s6 = inlined_call_operand.vmem [shape: f32[2,6,12], index: 6, kind: input, shape index: {}]
  %s7 = inlined_call_operand.vmem [shape: f32[2,6,36], index: 7, kind: output, shape index: {}]
  %s8 = sld [smem:[#allocation0]]
  $region61: #{contracting_pallas.1} parent=0
    _
  %s10 = ssub.s32 1, %s8
  %s11 = scalar_select 0, %s10, %s8
  loop: start=0, step=1, limit=4
  $region2: #{contracting_pallas.1} parent=0 // loop_pre_header
    _
  $region3: #{contracting_pallas.1} parent=0 // loop_header
    %s13 = sphi 0, %s17
    %p14 = scmp.ge.s32.totalorder %s13, 4
    %s23 = sphi 0, %s25
    %s26 = sphi 0, %s23
    %s27 = sphi 0, %s26
    %s43 = sphi 0, %s27
    %s47 = sphi 0, %s47
    %s49 = sphi 0, %s47
    %s50 = sphi 0, %s49
    %s64 = sphi 0, %s50
    %s68 = sphi 0, %s68
    %s70 = sphi 0, %s68
    %s71 = sphi 0, %s70
    %s85 = sphi 0, %s71
    %s89 = sphi 0, %s89
    %s91 = sphi 0, %s89
    %s92 = sphi 0, %s91
    %s106 = sphi 0, %s92
    %s110 = sphi 0, %s110
    %s112 = sphi 0, %s110
    %s113 = sphi 0, %s112
    %s127 = sphi 0, %s113
    %s131 = sphi 0, %s131
    %s133 = sphi 0, %s131
    %s134 = sphi 0, %s133
    %s148 = sphi 0, %s134
    %s152 = sphi 0, %s152
    %s154 = sphi 0, %s152
    %s155 = sphi 0, %s154
    %s169 = sphi 0, %s155
    %s175 = sphi 0, %s177
    %s178 = sphi 0, %s175
    %s179 = sphi 0, %s178
    %s195 = sphi 0, %s179
  $region4: #{contracting_pallas.1} parent=0 // loop_header_branch
    %16 = sbr.rel (%p14) target = $region8
  $region5: #{contracting_pallas.1} parent=0 // loop_body
    %s18 = ssub.s32 %s13, 1
    %s19 = ssub.s32 %s13, 2
    %s20 = sadd.s32 %s13, 1
    %s21 = ssub.s32 %s13, %s20
    %p22 = scmp.eq.s32.totalorder %s21, 0
    %s24 = sadd.s32 %s23, 1
    %s25 = scalar_select %p22, %s23, %s24
    %p28 = pneg %p22
    %p29 = scmp.eq.s32.totalorder %s13, 1
    %p30 = por %p28, %p29
    %p31 = scmp.ne.s32.totalorder %s23, %s26
    %p32 = scmp.eq.s32.totalorder %s13, 0
    %p33 = por %p31, %p32
    %p34 = scmp.ne.s32.totalorder %s23, %s26
    %p35 = scmp.eq.s32.totalorder %s18, 1
    %p36 = por %p34, %p35
    %p37 = scmp.ne.s32.totalorder %s26, %s27
    %p38 = scmp.eq.s32.totalorder %s18, 0
    %p39 = por %p37, %p38
    %p40 = scmp.ne.s32.totalorder %s26, %s27
    %p41 = scmp.eq.s32.totalorder %s19, 1
    %p42 = por %p40, %p41
    %p44 = scmp.ne.s32.totalorder %s27, %s43
    %p45 = scmp.eq.s32.totalorder %s19, 0
    %p46 = por %p44, %p45
    %s48 = sadd.s32 %s47, 1
    %p51 = scmp.eq.s32.totalorder %s13, 1
    %p52 = scmp.ne.s32.totalorder %s47, %s49
    %p53 = scmp.eq.s32.totalorder %s13, 0
    %p54 = por %p52, %p53
    %p55 = scmp.ne.s32.totalorder %s47, %s49
    %p56 = scmp.eq.s32.totalorder %s18, 1
    %p57 = por %p55, %p56
    %p58 = scmp.ne.s32.totalorder %s49, %s50
    %p59 = scmp.eq.s32.totalorder %s18, 0
    %p60 = por %p58, %p59
    %p61 = scmp.ne.s32.totalorder %s49, %s50
    %p62 = scmp.eq.s32.totalorder %s19, 1
    %p63 = por %p61, %p62
    %p65 = scmp.ne.s32.totalorder %s50, %s64
    %p66 = scmp.eq.s32.totalorder %s19, 0
    %p67 = por %p65, %p66
    %s69 = sadd.s32 %s68, 1
    %p72 = scmp.eq.s32.totalorder %s13, 1
    %p73 = scmp.ne.s32.totalorder %s68, %s70
    %p74 = scmp.eq.s32.totalorder %s13, 0
    %p75 = por %p73, %p74
    %p76 = scmp.ne.s32.totalorder %s68, %s70
    %p77 = scmp.eq.s32.totalorder %s18, 1
    %p78 = por %p76, %p77
    %p79 = scmp.ne.s32.totalorder %s70, %s71
    %p80 = scmp.eq.s32.totalorder %s18, 0
    %p81 = por %p79, %p80
    %p82 = scmp.ne.s32.totalorder %s70, %s71
    %p83 = scmp.eq.s32.totalorder %s19, 1
    %p84 = por %p82, %p83
    %p86 = scmp.ne.s32.totalorder %s71, %s85
    %p87 = scmp.eq.s32.totalorder %s19, 0
    %p88 = por %p86, %p87
    %s90 = sadd.s32 %s89, 1
    %p93 = scmp.eq.s32.totalorder %s13, 1
    %p94 = scmp.ne.s32.totalorder %s89, %s91
    %p95 = scmp.eq.s32.totalorder %s13, 0
    %p96 = por %p94, %p95
    %p97 = scmp.ne.s32.totalorder %s89, %s91
    %p98 = scmp.eq.s32.totalorder %s18, 1
    %p99 = por %p97, %p98
    %p100 = scmp.ne.s32.totalorder %s91, %s92
    %p101 = scmp.eq.s32.totalorder %s18, 0
    %p102 = por %p100, %p101
    %p103 = scmp.ne.s32.totalorder %s91, %s92
    %p104 = scmp.eq.s32.totalorder %s19, 1
    %p105 = por %p103, %p104
    %p107 = scmp.ne.s32.totalorder %s92, %s106
    %p108 = scmp.eq.s32.totalorder %s19, 0
    %p109 = por %p107, %p108
    %s111 = sadd.s32 %s110, 1
    %p114 = scmp.eq.s32.totalorder %s13, 1
    %p115 = scmp.ne.s32.totalorder %s110, %s112
    %p116 = scmp.eq.s32.totalorder %s13, 0
    %p117 = por %p115, %p116
    %p118 = scmp.ne.s32.totalorder %s110, %s112
    %p119 = scmp.eq.s32.totalorder %s18, 1
    %p120 = por %p118, %p119
    %p121 = scmp.ne.s32.totalorder %s112, %s113
    %p122 = scmp.eq.s32.totalorder %s18, 0
    %p123 = por %p121, %p122
    %p124 = scmp.ne.s32.totalorder %s112, %s113
    %p125 = scmp.eq.s32.totalorder %s19, 1
    %p126 = por %p124, %p125
    %p128 = scmp.ne.s32.totalorder %s113, %s127
    %p129 = scmp.eq.s32.totalorder %s19, 0
    %p130 = por %p128, %p129
    %s132 = sadd.s32 %s131, 1
    %p135 = scmp.eq.s32.totalorder %s13, 1
    %p136 = scmp.ne.s32.totalorder %s131, %s133
    %p137 = scmp.eq.s32.totalorder %s13, 0
    %p138 = por %p136, %p137
    %p139 = scmp.ne.s32.totalorder %s131, %s133
    %p140 = scmp.eq.s32.totalorder %s18, 1
    %p141 = por %p139, %p140
    %p142 = scmp.ne.s32.totalorder %s133, %s134
    %p143 = scmp.eq.s32.totalorder %s18, 0
    %p144 = por %p142, %p143
    %p145 = scmp.ne.s32.totalorder %s133, %s134
    %p146 = scmp.eq.s32.totalorder %s19, 1
    %p147 = por %p145, %p146
    %p149 = scmp.ne.s32.totalorder %s134, %s148
    %p150 = scmp.eq.s32.totalorder %s19, 0
    %p151 = por %p149, %p150
    %s153 = sadd.s32 %s152, 1
    %p156 = scmp.eq.s32.totalorder %s13, 1
    %p157 = scmp.ne.s32.totalorder %s152, %s154
    %p158 = scmp.eq.s32.totalorder %s13, 0
    %p159 = por %p157, %p158
    %p160 = scmp.ne.s32.totalorder %s152, %s154
    %p161 = scmp.eq.s32.totalorder %s18, 1
    %p162 = por %p160, %p161
    %p163 = scmp.ne.s32.totalorder %s154, %s155
    %p164 = scmp.eq.s32.totalorder %s18, 0
    %p165 = por %p163, %p164
    %p166 = scmp.ne.s32.totalorder %s154, %s155
    %p167 = scmp.eq.s32.totalorder %s19, 1
    %p168 = por %p166, %p167
    %p170 = scmp.ne.s32.totalorder %s155, %s169
    %p171 = scmp.eq.s32.totalorder %s19, 0
    %p172 = por %p170, %p171
    %s173 = ssub.s32 %s13, %s20
    %p174 = scmp.eq.s32.totalorder %s173, 0
    %s176 = sadd.s32 %s175, 1
    %s177 = scalar_select %p174, %s175, %s176
    %p180 = pneg %p174
    %p181 = scmp.eq.s32.totalorder %s13, 1
    %p182 = por %p180, %p181
    %p183 = scmp.ne.s32.totalorder %s175, %s178
    %p184 = scmp.eq.s32.totalorder %s13, 0
    %p185 = por %p183, %p184
    %p186 = scmp.ne.s32.totalorder %s175, %s178
    %p187 = scmp.eq.s32.totalorder %s18, 1
    %p188 = por %p186, %p187
    %p189 = scmp.ne.s32.totalorder %s178, %s179
    %p190 = scmp.eq.s32.totalorder %s18, 0
    %p191 = por %p189, %p190
    %p192 = scmp.ne.s32.totalorder %s178, %s179
    %p193 = scmp.eq.s32.totalorder %s19, 1
    %p194 = por %p192, %p193
    %p196 = scmp.ne.s32.totalorder %s179, %s195
    %p197 = scmp.eq.s32.totalorder %s19, 0
    %p198 = por %p196, %p197
    %p199 = scmp.le.s32.totalorder 1, %s13
    %p200 = scmp.lt.s32.totalorder %s13, 3
    %p201 = pnand %p199, %p200
    %p202 = pneg %p201
    // Predicated region
    $region9: #{contracting_pallas.1} parent=5 // pred_check
      _
    $region10: #{contracting_pallas.1} parent=5 // pred_check_branch
      %204 = sbr.rel (%p201) target = $region12
    $region11: #{contracting_pallas.1} parent=5 // pred_region
      %s205 = ssub.s32 %s13, 1
      // Predicated region
      $region13: #{contracting_pallas.1} parent=11 // pred_check
        %p206 = pneg %p60
      $region14: #{contracting_pallas.1} parent=11 // pred_check_branch
        %208 = sbr.rel (%p206) target = $region16
      $region15: #{contracting_pallas.1} parent=11 // pred_region
        _
      $region16: #{contracting_pallas.1} parent=11 // pred_fallthru
        _
      // Predicated region
      $region17: #{contracting_pallas.1} parent=11 // pred_check
        %p209 = pneg %p81
      $region18: #{contracting_pallas.1} parent=11 // pred_check_branch
        %211 = sbr.rel (%p209) target = $region20
      $region19: #{contracting_pallas.1} parent=11 // pred_region
        _
      $region20: #{contracting_pallas.1} parent=11 // pred_fallthru
        _
      // Predicated region
      $region21: #{contracting_pallas.1} parent=11 // pred_check
        %p212 = pneg %p102
      $region22: #{contracting_pallas.1} parent=11 // pred_check_branch
        %214 = sbr.rel (%p212) target = $region24
      $region23: #{contracting_pallas.1} parent=11 // pred_region
        _
      $region24: #{contracting_pallas.1} parent=11 // pred_fallthru
        _
      // Predicated region
      $region25: #{contracting_pallas.1} parent=11 // pred_check
        %p215 = pneg %p123
      $region26: #{contracting_pallas.1} parent=11 // pred_check_branch
        %217 = sbr.rel (%p215) target = $region28
      $region27: #{contracting_pallas.1} parent=11 // pred_region
        _
      $region28: #{contracting_pallas.1} parent=11 // pred_fallthru
        _
      // Predicated region
      $region29: #{contracting_pallas.1} parent=11 // pred_check
        %p218 = pneg %p144
      $region30: #{contracting_pallas.1} parent=11 // pred_check_branch
        %220 = sbr.rel (%p218) target = $region32
      $region31: #{contracting_pallas.1} parent=11 // pred_region
        _
      $region32: #{contracting_pallas.1} parent=11 // pred_fallthru
        _
      // Predicated region
      $region33: #{contracting_pallas.1} parent=11 // pred_check
        %p221 = pneg %p165
      $region34: #{contracting_pallas.1} parent=11 // pred_check_branch
        %223 = sbr.rel (%p221) target = $region36
      $region35: #{contracting_pallas.1} parent=11 // pred_region
        _
      $region36: #{contracting_pallas.1} parent=11 // pred_fallthru
        _
    $region12: #{contracting_pallas.1} parent=5 // pred_fallthru
      _
    %p224 = scmp.lt.s32.totalorder %s13, 2
    // Predicated region
    $region37: #{contracting_pallas.1} parent=5 // pred_check
      %p225 = pneg %p224
    $region38: #{contracting_pallas.1} parent=5 // pred_check_branch
      %227 = sbr.rel (%p225) target = $region40
    $region39: #{contracting_pallas.1} parent=5 // pred_region
      // Predicated region
      $region41: #{contracting_pallas.1} parent=39 // pred_check
        %p228 = pneg %p33
      $region42: #{contracting_pallas.1} parent=39 // pred_check_branch
        %230 = sbr.rel (%p228) target = $region44
      $region43: #{contracting_pallas.1} parent=39 // pred_region
        %p231 = scmp.lt.s32.totalorder %s13, 1
        %s232 = scalar_select %p231, %s13, 1
        %s233 = smul.addr %s232, 2
        %s234 = smul.addr %s233, 8
        %s235 = scalar_lea.vmem %s0, %s234
      $region44: #{contracting_pallas.1} parent=39 // pred_fallthru
        _
    $region40: #{contracting_pallas.1} parent=5 // pred_fallthru
      _
    %p236 = scmp.le.s32.totalorder 1, %s13
    %p237 = scmp.lt.s32.totalorder %s13, 3
    %p238 = pnand %p236, %p237
    %p239 = pneg %p238
    // Predicated region
    $region45: #{contracting_pallas.1} parent=5 // pred_check
      _
    $region46: #{contracting_pallas.1} parent=5 // pred_check_branch
      %241 = sbr.rel (%p238) target = $region48
    $region47: #{contracting_pallas.1} parent=5 // pred_region
      %s242 = ssub.s32 %s13, 1
      %p243 = scmp.lt.s32.totalorder %s18, 1
      %s244 = scalar_select %p243, %s18, 1
      %s245 = smul.addr %s244, 2
      %s246 = smul.addr %s245, 8
      %s247 = scalar_lea.vmem %s0, %s246
      %p248 = pneg %p39
      %p249 = pneg %p36
      %p250 = pneg %p60
      %p251 = pneg %p57
      %p252 = pneg %p81
      %p253 = pneg %p78
      %p254 = pneg %p102
      %p255 = pneg %p99
      %p256 = pneg %p123
      %p257 = pneg %p120
      %p258 = pneg %p144
      %p259 = pneg %p141
      %p260 = pneg %p165
      %p261 = pneg %p162
      %p262 = pneg %p191
      %p263 = pneg %p188
      %p264 = scmp.lt.s32.totalorder %s18, 1
      %s265 = scalar_select %p264, %s18, 1
      %s266 = smul.addr %s265, 8
      %s267 = scalar_lea.vmem %s7, %s266
      %p268 = scmp.lt.s32.totalorder %s18, 1
      %s269 = scalar_select %p268, %s18, 1
      %s270 = smul.addr %s269, 2
      %s271 = smul.addr %s270, 8
      %s272 = scalar_lea.vmem %s0, %s271
      %p273 = scmp.lt.s32.totalorder %s18, 1
      %s274 = scalar_select %p273, %s18, 1
      %s275 = smul.addr %s274, 8
      %s276 = scalar_lea.vmem %s7, %s275
      %v277 = vld [vmem:[%s272] sm:$0xff]
      %v278 = vld [vmem:[%s272 + $0x8] sm:$0xff]
      %v279 = vld [vmem:[%s1] sm:$0xff]
      %v280 = vld [vmem:[%s1 + $0x8] sm:$0xff]
      %v281 = vld [vmem:[%s1 + $0x10] sm:$0xff]
      %v282 = vld [vmem:[%s1 + $0x18] sm:$0xff]
      %v283 = vld [vmem:[%s1 + $0x20] sm:$0xff]
      %v284 = vld [vmem:[%s1 + $0x28] sm:$0xff]
      %s285 = scalar_lea.vmem %s1, 48
      %v286 = vld [vmem:[%s285] sm:$0xff]
      %v287 = vld [vmem:[%s285 + $0x8] sm:$0xff]
      %v288 = vld [vmem:[%s285 + $0x10] sm:$0xff]
      %v289 = vld [vmem:[%s285 + $0x18] sm:$0xff]
      %v290 = vld [vmem:[%s285 + $0x20] sm:$0xff]
      %v291 = vld [vmem:[%s285 + $0x28] sm:$0xff]
      %vm294 = vcmask 1046528
      %v295 = vrot.slane %v277, 1
      %v296 = vrot.slane %v278, 1
      %v297 = vsel %vm294, %v295, %v296
      %vm298 = vcmask 392192
      %v299 = vsel %vm298, %v297, 0
      %v301 = vsel %vm298, %v296, 0
      %303 = vmatpush.msra.mxu0 0.0
      %304 = vmatpush.msra.mxu0 0.0
      %305 = vmatpush.msra.mxu0 0.0
      %306 = vmatpush.msra.mxu0 0.0
      %307 = vmatpush.msra.mxu0 0.0
      %308 = vmatpush.msra.mxu0 0.0
      %309 = vmatpush.msra.mxu0 0.0
      %310 = vmatpush.msra.mxu0 0.0
      %311 = vmatpush.msra.mxu0 0.0
      %312 = vmatpush.msra.mxu0 0.0
      %v313 = vand.u32 %v291, 4294901760
      %314 = vmatpush.msra.mxu0 %v313
      %v315 = vand.u32 %v290, 4294901760
      %316 = vmatpush.msra.mxu0 %v315
      %v317 = vand.u32 %v289, 4294901760
      %318 = vmatpush.msra.mxu0 %v317
      %v319 = vand.u32 %v288, 4294901760
      %320 = vmatpush.msra.mxu0 %v319
      %v321 = vand.u32 %v287, 4294901760
      %322 = vmatpush.msra.mxu0 %v321
      %v323 = vand.u32 %v286, 4294901760
      %324 = vmatpush.msra.mxu0 %v323
      %v325 = vand.u32 %v299, 4294901760
      %v326 = vsub.f32 %v299, %v325
      %v327 = vand.u32 %v326, 4294901760
      %v328 = vsub.f32 %v326, %v327
      %v329 = vand.u32 %v328, 4294901760
      %330 = vmatmul.f32.gmra.mxu0 %v329
      %v331 = vpop.f32.mrf.mxu0
      %v332 = vadd.f32 0.0, %v331
      %v333 = vand.u32 %v301, 4294901760
      %v334 = vsub.f32 %v301, %v333
      %v335 = vand.u32 %v334, 4294901760
      %v336 = vsub.f32 %v334, %v335
      %v337 = vand.u32 %v336, 4294901760
      %338 = vmatmul.f32.gmra.mxu0 %v337
      %v339 = vpop.f32.mrf.mxu0
      %v340 = vadd.f32 0.0, %v339
      %341 = vdwg.mxu0
      %342 = vmatpush.msra.mxu0 0.0
      %343 = vmatpush.msra.mxu0 0.0
      %344 = vmatpush.msra.mxu0 0.0
      %345 = vmatpush.msra.mxu0 0.0
      %346 = vmatpush.msra.mxu0 0.0
      %347 = vmatpush.msra.mxu0 0.0
      %348 = vmatpush.msra.mxu0 0.0
      %349 = vmatpush.msra.mxu0 0.0
      %350 = vmatpush.msra.mxu0 0.0
      %351 = vmatpush.msra.mxu0 0.0
      %v352 = vand.u32 %v291, 4294901760
      %v353 = vsub.f32 %v291, %v352
      %v354 = vand.u32 %v353, 4294901760
      %v355 = vsub.f32 %v353, %v354
      %v356 = vand.u32 %v355, 4294901760
      %357 = vmatpush.msra.mxu0 %v356
      %v358 = vand.u32 %v290, 4294901760
      %v359 = vsub.f32 %v290, %v358
      %v360 = vand.u32 %v359, 4294901760
      %v361 = vsub.f32 %v359, %v360
      %v362 = vand.u32 %v361, 4294901760
      %363 = vmatpush.msra.mxu0 %v362
      %v364 = vand.u32 %v289, 4294901760
      %v365 = vsub.f32 %v289, %v364
      %v366 = vand.u32 %v365, 4294901760
      %v367 = vsub.f32 %v365, %v366
      %v368 = vand.u32 %v367, 4294901760
      %369 = vmatpush.msra.mxu0 %v368
      %v370 = vand.u32 %v288, 4294901760
      %v371 = vsub.f32 %v288, %v370
      %v372 = vand.u32 %v371, 4294901760
      %v373 = vsub.f32 %v371, %v372
      %v374 = vand.u32 %v373, 4294901760
      %375 = vmatpush.msra.mxu0 %v374
      %v376 = vand.u32 %v287, 4294901760
      %v377 = vsub.f32 %v287, %v376
      %v378 = vand.u32 %v377, 4294901760
      %v379 = vsub.f32 %v377, %v378
      %v380 = vand.u32 %v379, 4294901760
      %381 = vmatpush.msra.mxu0 %v380
      %v382 = vand.u32 %v286, 4294901760
      %v383 = vsub.f32 %v286, %v382
      %v384 = vand.u32 %v383, 4294901760
      %v385 = vsub.f32 %v383, %v384
      %v386 = vand.u32 %v385, 4294901760
      %387 = vmatpush.msra.mxu0 %v386
      %v388 = vand.u32 %v299, 4294901760
      %389 = vmatmul.f32.gmra.mxu0 %v388
      %v390 = vpop.f32.mrf.mxu0
      %v391 = vadd.f32 %v332, %v390
      %v392 = vand.u32 %v301, 4294901760
      %393 = vmatmul.f32.gmra.mxu0 %v392
      %v394 = vpop.f32.mrf.mxu0
      %v395 = vadd.f32 %v340, %v394
      %396 = vdwg.mxu0
      %397 = vmatpush.msra.mxu0 0.0
      %398 = vmatpush.msra.mxu0 0.0
      %399 = vmatpush.msra.mxu0 0.0
      %400 = vmatpush.msra.mxu0 0.0
      %401 = vmatpush.msra.mxu0 0.0
      %402 = vmatpush.msra.mxu0 0.0
      %403 = vmatpush.msra.mxu0 0.0
      %404 = vmatpush.msra.mxu0 0.0
      %405 = vmatpush.msra.mxu0 0.0
      %406 = vmatpush.msra.mxu0 0.0
      %v407 = vand.u32 %v291, 4294901760
      %v408 = vsub.f32 %v291, %v407
      %409 = vmatpush.msra.mxu0 %v408
      %v410 = vand.u32 %v290, 4294901760
      %v411 = vsub.f32 %v290, %v410
      %412 = vmatpush.msra.mxu0 %v411
      %v413 = vand.u32 %v289, 4294901760
      %v414 = vsub.f32 %v289, %v413
      %415 = vmatpush.msra.mxu0 %v414
      %v416 = vand.u32 %v288, 4294901760
      %v417 = vsub.f32 %v288, %v416
      %418 = vmatpush.msra.mxu0 %v417
      %v419 = vand.u32 %v287, 4294901760
      %v420 = vsub.f32 %v287, %v419
      %421 = vmatpush.msra.mxu0 %v420
      %v422 = vand.u32 %v286, 4294901760
      %v423 = vsub.f32 %v286, %v422
      %424 = vmatpush.msra.mxu0 %v423
      %v425 = vand.u32 %v299, 4294901760
      %v426 = vsub.f32 %v299, %v425
      %427 = vmatmul.f32.gmra.mxu0 %v426
      %v428 = vpop.f32.mrf.mxu0
      %v429 = vadd.f32 %v391, %v428
      %v430 = vand.u32 %v301, 4294901760
      %v431 = vsub.f32 %v301, %v430
      %432 = vmatmul.f32.gmra.mxu0 %v431
      %v433 = vpop.f32.mrf.mxu0
      %v434 = vadd.f32 %v395, %v433
      %435 = vdwg.mxu0
      %436 = vmatpush.msra.mxu0 0.0
      %437 = vmatpush.msra.mxu0 0.0
      %438 = vmatpush.msra.mxu0 0.0
      %439 = vmatpush.msra.mxu0 0.0
      %440 = vmatpush.msra.mxu0 0.0
      %441 = vmatpush.msra.mxu0 0.0
      %442 = vmatpush.msra.mxu0 0.0
      %443 = vmatpush.msra.mxu0 0.0
      %444 = vmatpush.msra.mxu0 0.0
      %445 = vmatpush.msra.mxu0 0.0
      %v446 = vand.u32 %v291, 4294901760
      %447 = vmatpush.msra.mxu0 %v446
      %v448 = vand.u32 %v290, 4294901760
      %449 = vmatpush.msra.mxu0 %v448
      %v450 = vand.u32 %v289, 4294901760
      %451 = vmatpush.msra.mxu0 %v450
      %v452 = vand.u32 %v288, 4294901760
      %453 = vmatpush.msra.mxu0 %v452
      %v454 = vand.u32 %v287, 4294901760
      %455 = vmatpush.msra.mxu0 %v454
      %v456 = vand.u32 %v286, 4294901760
      %457 = vmatpush.msra.mxu0 %v456
      %v458 = vand.u32 %v299, 4294901760
      %v459 = vsub.f32 %v299, %v458
      %v460 = vand.u32 %v459, 4294901760
      %461 = vmatmul.f32.gmra.mxu0 %v460
      %v462 = vpop.f32.mrf.mxu0
      %v463 = vadd.f32 %v429, %v462
      %v464 = vand.u32 %v301, 4294901760
      %v465 = vsub.f32 %v301, %v464
      %v466 = vand.u32 %v465, 4294901760
      %467 = vmatmul.f32.gmra.mxu0 %v466
      %v468 = vpop.f32.mrf.mxu0
      %v469 = vadd.f32 %v434, %v468
      %470 = vdwg.mxu0
      %471 = vmatpush.msra.mxu0 0.0
      %472 = vmatpush.msra.mxu0 0.0
      %473 = vmatpush.msra.mxu0 0.0
      %474 = vmatpush.msra.mxu0 0.0
      %475 = vmatpush.msra.mxu0 0.0
      %476 = vmatpush.msra.mxu0 0.0
      %477 = vmatpush.msra.mxu0 0.0
      %478 = vmatpush.msra.mxu0 0.0
      %479 = vmatpush.msra.mxu0 0.0
      %480 = vmatpush.msra.mxu0 0.0
      %v481 = vand.u32 %v291, 4294901760
      %v482 = vsub.f32 %v291, %v481
      %v483 = vand.u32 %v482, 4294901760
      %484 = vmatpush.msra.mxu0 %v483
      %v485 = vand.u32 %v290, 4294901760
      %v486 = vsub.f32 %v290, %v485
      %v487 = vand.u32 %v486, 4294901760
      %488 = vmatpush.msra.mxu0 %v487
      %v489 = vand.u32 %v289, 4294901760
      %v490 = vsub.f32 %v289, %v489
      %v491 = vand.u32 %v490, 4294901760
      %492 = vmatpush.msra.mxu0 %v491
      %v493 = vand.u32 %v288, 4294901760
      %v494 = vsub.f32 %v288, %v493
      %v495 = vand.u32 %v494, 4294901760
      %496 = vmatpush.msra.mxu0 %v495
      %v497 = vand.u32 %v287, 4294901760
      %v498 = vsub.f32 %v287, %v497
      %v499 = vand.u32 %v498, 4294901760
      %500 = vmatpush.msra.mxu0 %v499
      %v501 = vand.u32 %v286, 4294901760
      %v502 = vsub.f32 %v286, %v501
      %v503 = vand.u32 %v502, 4294901760
      %504 = vmatpush.msra.mxu0 %v503
      %v505 = vand.u32 %v299, 4294901760
      %506 = vmatmul.f32.gmra.mxu0 %v505
      %v507 = vpop.f32.mrf.mxu0
      %v508 = vadd.f32 %v463, %v507
      %v509 = vand.u32 %v301, 4294901760
      %510 = vmatmul.f32.gmra.mxu0 %v509
      %v511 = vpop.f32.mrf.mxu0
      %v512 = vadd.f32 %v469, %v511
      %513 = vdwg.mxu0
      %514 = vmatpush.msra.mxu0 0.0
      %515 = vmatpush.msra.mxu0 0.0
      %516 = vmatpush.msra.mxu0 0.0
      %517 = vmatpush.msra.mxu0 0.0
      %518 = vmatpush.msra.mxu0 0.0
      %519 = vmatpush.msra.mxu0 0.0
      %520 = vmatpush.msra.mxu0 0.0
      %521 = vmatpush.msra.mxu0 0.0
      %522 = vmatpush.msra.mxu0 0.0
      %523 = vmatpush.msra.mxu0 0.0
      %v524 = vand.u32 %v291, 4294901760
      %525 = vmatpush.msra.mxu0 %v524
      %v526 = vand.u32 %v290, 4294901760
      %527 = vmatpush.msra.mxu0 %v526
      %v528 = vand.u32 %v289, 4294901760
      %529 = vmatpush.msra.mxu0 %v528
      %v530 = vand.u32 %v288, 4294901760
      %531 = vmatpush.msra.mxu0 %v530
      %v532 = vand.u32 %v287, 4294901760
      %533 = vmatpush.msra.mxu0 %v532
      %v534 = vand.u32 %v286, 4294901760
      %535 = vmatpush.msra.mxu0 %v534
      %v536 = vand.u32 %v299, 4294901760
      %537 = vmatmul.f32.gmra.mxu0 %v536
      %v538 = vpop.f32.mrf.mxu0
      %v539 = vadd.f32 %v508, %v538
      %v540 = vand.u32 %v301, 4294901760
      %541 = vmatmul.f32.gmra.mxu0 %v540
      %v542 = vpop.f32.mrf.mxu0
      %v543 = vadd.f32 %v512, %v542
      %544 = vdwg.mxu0
      %v545 = vsel %vm298, %v277, 0
      %v547 = vsel %vm298, %v278, 0
      %549 = vmatpush.msra.mxu0 0.0
      %550 = vmatpush.msra.mxu0 0.0
      %551 = vmatpush.msra.mxu0 0.0
      %552 = vmatpush.msra.mxu0 0.0
      %553 = vmatpush.msra.mxu0 0.0
      %554 = vmatpush.msra.mxu0 0.0
      %555 = vmatpush.msra.mxu0 0.0
      %556 = vmatpush.msra.mxu0 0.0
      %557 = vmatpush.msra.mxu0 0.0
      %558 = vmatpush.msra.mxu0 0.0
      %v559 = vand.u32 %v284, 4294901760
      %560 = vmatpush.msra.mxu0 %v559
      %v561 = vand.u32 %v283, 4294901760
      %562 = vmatpush.msra.mxu0 %v561
      %v563 = vand.u32 %v282, 4294901760
      %564 = vmatpush.msra.mxu0 %v563
      %v565 = vand.u32 %v281, 4294901760
      %566 = vmatpush.msra.mxu0 %v565
      %v567 = vand.u32 %v280, 4294901760
      %568 = vmatpush.msra.mxu0 %v567
      %v569 = vand.u32 %v279, 4294901760
      %570 = vmatpush.msra.mxu0 %v569
      %v571 = vand.u32 %v545, 4294901760
      %v572 = vsub.f32 %v545, %v571
      %v573 = vand.u32 %v572, 4294901760
      %v574 = vsub.f32 %v572, %v573
      %v575 = vand.u32 %v574, 4294901760
      %576 = vmatmul.f32.gmra.mxu0 %v575
      %v577 = vpop.f32.mrf.mxu0
      %v578 = vadd.f32 %v539, %v577
      %v579 = vand.u32 %v547, 4294901760
      %v580 = vsub.f32 %v547, %v579
      %v581 = vand.u32 %v580, 4294901760
      %v582 = vsub.f32 %v580, %v581
      %v583 = vand.u32 %v582, 4294901760
      %584 = vmatmul.f32.gmra.mxu0 %v583
      %v585 = vpop.f32.mrf.mxu0
      %v586 = vadd.f32 %v543, %v585
      %587 = vdwg.mxu0
      %588 = vmatpush.msra.mxu0 0.0
      %589 = vmatpush.msra.mxu0 0.0
      %590 = vmatpush.msra.mxu0 0.0
      %591 = vmatpush.msra.mxu0 0.0
      %592 = vmatpush.msra.mxu0 0.0
      %593 = vmatpush.msra.mxu0 0.0
      %594 = vmatpush.msra.mxu0 0.0
      %595 = vmatpush.msra.mxu0 0.0
      %596 = vmatpush.msra.mxu0 0.0
      %597 = vmatpush.msra.mxu0 0.0
      %v598 = vand.u32 %v284, 4294901760
      %v599 = vsub.f32 %v284, %v598
      %v600 = vand.u32 %v599, 4294901760
      %v601 = vsub.f32 %v599, %v600
      %v602 = vand.u32 %v601, 4294901760
      %603 = vmatpush.msra.mxu0 %v602
      %v604 = vand.u32 %v283, 4294901760
      %v605 = vsub.f32 %v283, %v604
      %v606 = vand.u32 %v605, 4294901760
      %v607 = vsub.f32 %v605, %v606
      %v608 = vand.u32 %v607, 4294901760
      %609 = vmatpush.msra.mxu0 %v608
      %v610 = vand.u32 %v282, 4294901760
      %v611 = vsub.f32 %v282, %v610
      %v612 = vand.u32 %v611, 4294901760
      %v613 = vsub.f32 %v611, %v612
      %v614 = vand.u32 %v613, 4294901760
      %615 = vmatpush.msra.mxu0 %v614
      %v616 = vand.u32 %v281, 4294901760
      %v617 = vsub.f32 %v281, %v616
      %v618 = vand.u32 %v617, 4294901760
      %v619 = vsub.f32 %v617, %v618
      %v620 = vand.u32 %v619, 4294901760
      %621 = vmatpush.msra.mxu0 %v620
      %v622 = vand.u32 %v280, 4294901760
      %v623 = vsub.f32 %v280, %v622
      %v624 = vand.u32 %v623, 4294901760
      %v625 = vsub.f32 %v623, %v624
      %v626 = vand.u32 %v625, 4294901760
      %627 = vmatpush.msra.mxu0 %v626
      %v628 = vand.u32 %v279, 4294901760
      %v629 = vsub.f32 %v279, %v628
      %v630 = vand.u32 %v629, 4294901760
      %v631 = vsub.f32 %v629, %v630
      %v632 = vand.u32 %v631, 4294901760
      %633 = vmatpush.msra.mxu0 %v632
      %v634 = vand.u32 %v545, 4294901760
      %635 = vmatmul.f32.gmra.mxu0 %v634
      %v636 = vpop.f32.mrf.mxu0
      %v637 = vadd.f32 %v578, %v636
      %v638 = vand.u32 %v547, 4294901760
      %639 = vmatmul.f32.gmra.mxu0 %v638
      %v640 = vpop.f32.mrf.mxu0
      %v641 = vadd.f32 %v586, %v640
      %642 = vdwg.mxu0
      %643 = vmatpush.msra.mxu0 0.0
      %644 = vmatpush.msra.mxu0 0.0
      %645 = vmatpush.msra.mxu0 0.0
      %646 = vmatpush.msra.mxu0 0.0
      %647 = vmatpush.msra.mxu0 0.0
      %648 = vmatpush.msra.mxu0 0.0
      %649 = vmatpush.msra.mxu0 0.0
      %650 = vmatpush.msra.mxu0 0.0
      %651 = vmatpush.msra.mxu0 0.0
      %652 = vmatpush.msra.mxu0 0.0
      %v653 = vand.u32 %v284, 4294901760
      %v654 = vsub.f32 %v284, %v653
      %655 = vmatpush.msra.mxu0 %v654
      %v656 = vand.u32 %v283, 4294901760
      %v657 = vsub.f32 %v283, %v656
      %658 = vmatpush.msra.mxu0 %v657
      %v659 = vand.u32 %v282, 4294901760
      %v660 = vsub.f32 %v282, %v659
      %661 = vmatpush.msra.mxu0 %v660
      %v662 = vand.u32 %v281, 4294901760
      %v663 = vsub.f32 %v281, %v662
      %664 = vmatpush.msra.mxu0 %v663
      %v665 = vand.u32 %v280, 4294901760
      %v666 = vsub.f32 %v280, %v665
      %667 = vmatpush.msra.mxu0 %v666
      %v668 = vand.u32 %v279, 4294901760
      %v669 = vsub.f32 %v279, %v668
      %670 = vmatpush.msra.mxu0 %v669
      %v671 = vand.u32 %v545, 4294901760
      %v672 = vsub.f32 %v545, %v671
      %673 = vmatmul.f32.gmra.mxu0 %v672
      %v674 = vpop.f32.mrf.mxu0
      %v675 = vadd.f32 %v637, %v674
      %v676 = vand.u32 %v547, 4294901760
      %v677 = vsub.f32 %v547, %v676
      %678 = vmatmul.f32.gmra.mxu0 %v677
      %v679 = vpop.f32.mrf.mxu0
      %v680 = vadd.f32 %v641, %v679
      %681 = vdwg.mxu0
      %682 = vmatpush.msra.mxu0 0.0
      %683 = vmatpush.msra.mxu0 0.0
      %684 = vmatpush.msra.mxu0 0.0
      %685 = vmatpush.msra.mxu0 0.0
      %686 = vmatpush.msra.mxu0 0.0
      %687 = vmatpush.msra.mxu0 0.0
      %688 = vmatpush.msra.mxu0 0.0
      %689 = vmatpush.msra.mxu0 0.0
      %690 = vmatpush.msra.mxu0 0.0
      %691 = vmatpush.msra.mxu0 0.0
      %v692 = vand.u32 %v284, 4294901760
      %693 = vmatpush.msra.mxu0 %v692
      %v694 = vand.u32 %v283, 4294901760
      %695 = vmatpush.msra.mxu0 %v694
      %v696 = vand.u32 %v282, 4294901760
      %697 = vmatpush.msra.mxu0 %v696
      %v698 = vand.u32 %v281, 4294901760
      %699 = vmatpush.msra.mxu0 %v698
      %v700 = vand.u32 %v280, 4294901760
      %701 = vmatpush.msra.mxu0 %v700
      %v702 = vand.u32 %v279, 4294901760
      %703 = vmatpush.msra.mxu0 %v702
      %v704 = vand.u32 %v545, 4294901760
      %v705 = vsub.f32 %v545, %v704
      %v706 = vand.u32 %v705, 4294901760
      %707 = vmatmul.f32.gmra.mxu0 %v706
      %v708 = vpop.f32.mrf.mxu0
      %v709 = vadd.f32 %v675, %v708
      %v710 = vand.u32 %v547, 4294901760
      %v711 = vsub.f32 %v547, %v710
      %v712 = vand.u32 %v711, 4294901760
      %713 = vmatmul.f32.gmra.mxu0 %v712
      %v714 = vpop.f32.mrf.mxu0
      %v715 = vadd.f32 %v680, %v714
      %716 = vdwg.mxu0
      %717 = vmatpush.msra.mxu0 0.0
      %718 = vmatpush.msra.mxu0 0.0
      %719 = vmatpush.msra.mxu0 0.0
      %720 = vmatpush.msra.mxu0 0.0
      %721 = vmatpush.msra.mxu0 0.0
      %722 = vmatpush.msra.mxu0 0.0
      %723 = vmatpush.msra.mxu0 0.0
      %724 = vmatpush.msra.mxu0 0.0
      %725 = vmatpush.msra.mxu0 0.0
      %726 = vmatpush.msra.mxu0 0.0
      %v727 = vand.u32 %v284, 4294901760
      %v728 = vsub.f32 %v284, %v727
      %v729 = vand.u32 %v728, 4294901760
      %730 = vmatpush.msra.mxu0 %v729
      %v731 = vand.u32 %v283, 4294901760
      %v732 = vsub.f32 %v283, %v731
      %v733 = vand.u32 %v732, 4294901760
      %734 = vmatpush.msra.mxu0 %v733
      %v735 = vand.u32 %v282, 4294901760
      %v736 = vsub.f32 %v282, %v735
      %v737 = vand.u32 %v736, 4294901760
      %738 = vmatpush.msra.mxu0 %v737
      %v739 = vand.u32 %v281, 4294901760
      %v740 = vsub.f32 %v281, %v739
      %v741 = vand.u32 %v740, 4294901760
      %742 = vmatpush.msra.mxu0 %v741
      %v743 = vand.u32 %v280, 4294901760
      %v744 = vsub.f32 %v280, %v743
      %v745 = vand.u32 %v744, 4294901760
      %746 = vmatpush.msra.mxu0 %v745
      %v747 = vand.u32 %v279, 4294901760
      %v748 = vsub.f32 %v279, %v747
      %v749 = vand.u32 %v748, 4294901760
      %750 = vmatpush.msra.mxu0 %v749
      %v751 = vand.u32 %v545, 4294901760
      %752 = vmatmul.f32.gmra.mxu0 %v751
      %v753 = vpop.f32.mrf.mxu0
      %v754 = vadd.f32 %v709, %v753
      %v755 = vand.u32 %v547, 4294901760
      %756 = vmatmul.f32.gmra.mxu0 %v755
      %v757 = vpop.f32.mrf.mxu0
      %v758 = vadd.f32 %v715, %v757
      %759 = vdwg.mxu0
      %760 = vmatpush.msra.mxu0 0.0
      %761 = vmatpush.msra.mxu0 0.0
      %762 = vmatpush.msra.mxu0 0.0
      %763 = vmatpush.msra.mxu0 0.0
      %764 = vmatpush.msra.mxu0 0.0
      %765 = vmatpush.msra.mxu0 0.0
      %766 = vmatpush.msra.mxu0 0.0
      %767 = vmatpush.msra.mxu0 0.0
      %768 = vmatpush.msra.mxu0 0.0
      %769 = vmatpush.msra.mxu0 0.0
      %v770 = vand.u32 %v284, 4294901760
      %771 = vmatpush.msra.mxu0 %v770
      %v772 = vand.u32 %v283, 4294901760
      %773 = vmatpush.msra.mxu0 %v772
      %v774 = vand.u32 %v282, 4294901760
      %775 = vmatpush.msra.mxu0 %v774
      %v776 = vand.u32 %v281, 4294901760
      %777 = vmatpush.msra.mxu0 %v776
      %v778 = vand.u32 %v280, 4294901760
      %779 = vmatpush.msra.mxu0 %v778
      %v780 = vand.u32 %v279, 4294901760
      %781 = vmatpush.msra.mxu0 %v780
      %v782 = vand.u32 %v545, 4294901760
      %783 = vmatmul.f32.gmra.mxu0 %v782
      %v784 = vpop.f32.mrf.mxu0
      %v785 = vadd.f32 %v754, %v784
      %v786 = vand.u32 %v547, 4294901760
      %787 = vmatmul.f32.gmra.mxu0 %v786
      %v788 = vpop.f32.mrf.mxu0
      %v789 = vadd.f32 %v758, %v788
      %790 = vdwg.mxu0
      %s791 = scalar_lea.vmem %s1, 96
      %v792 = vld [vmem:[%s791] sm:$0xff]
      %v793 = vld [vmem:[%s791 + $0x8] sm:$0xff]
      %v794 = vld [vmem:[%s791 + $0x10] sm:$0xff]
      %v795 = vld [vmem:[%s791 + $0x18] sm:$0xff]
      %v796 = vld [vmem:[%s791 + $0x20] sm:$0xff]
      %v797 = vld [vmem:[%s791 + $0x28] sm:$0xff]
      %vm798 = vcmask 1045504
      %v799 = vrot.slane %v277, 2
      %v800 = vrot.slane %v278, 2
      %v801 = vsel %vm798, %v799, %v800
      %v802 = vsel %vm298, %v801, 0
      %v804 = vsel %vm298, %v800, 0
      %806 = vmatpush.msra.mxu0 0.0
      %807 = vmatpush.msra.mxu0 0.0
      %808 = vmatpush.msra.mxu0 0.0
      %809 = vmatpush.msra.mxu0 0.0
      %810 = vmatpush.msra.mxu0 0.0
      %811 = vmatpush.msra.mxu0 0.0
      %812 = vmatpush.msra.mxu0 0.0
      %813 = vmatpush.msra.mxu0 0.0
      %814 = vmatpush.msra.mxu0 0.0
      %815 = vmatpush.msra.mxu0 0.0
      %v816 = vand.u32 %v797, 4294901760
      %817 = vmatpush.msra.mxu0 %v816
      %v818 = vand.u32 %v796, 4294901760
      %819 = vmatpush.msra.mxu0 %v818
      %v820 = vand.u32 %v795, 4294901760
      %821 = vmatpush.msra.mxu0 %v820
      %v822 = vand.u32 %v794, 4294901760
      %823 = vmatpush.msra.mxu0 %v822
      %v824 = vand.u32 %v793, 4294901760
      %825 = vmatpush.msra.mxu0 %v824
      %v826 = vand.u32 %v792, 4294901760
      %827 = vmatpush.msra.mxu0 %v826
      %v828 = vand.u32 %v802, 4294901760
      %v829 = vsub.f32 %v802, %v828
      %v830 = vand.u32 %v829, 4294901760
      %v831 = vsub.f32 %v829, %v830
      %v832 = vand.u32 %v831, 4294901760
      %833 = vmatmul.f32.gmra.mxu0 %v832
      %v834 = vpop.f32.mrf.mxu0
      %v835 = vadd.f32 0.0, %v834
      %v836 = vand.u32 %v804, 4294901760
      %v837 = vsub.f32 %v804, %v836
      %v838 = vand.u32 %v837, 4294901760
      %v839 = vsub.f32 %v837, %v838
      %v840 = vand.u32 %v839, 4294901760
      %841 = vmatmul.f32.gmra.mxu0 %v840
      %v842 = vpop.f32.mrf.mxu0
      %v843 = vadd.f32 0.0, %v842
      %844 = vdwg.mxu0
      %845 = vmatpush.msra.mxu0 0.0
      %846 = vmatpush.msra.mxu0 0.0
      %847 = vmatpush.msra.mxu0 0.0
      %848 = vmatpush.msra.mxu0 0.0
      %849 = vmatpush.msra.mxu0 0.0
      %850 = vmatpush.msra.mxu0 0.0
      %851 = vmatpush.msra.mxu0 0.0
      %852 = vmatpush.msra.mxu0 0.0
      %853 = vmatpush.msra.mxu0 0.0
      %854 = vmatpush.msra.mxu0 0.0
      %v855 = vand.u32 %v797, 4294901760
      %v856 = vsub.f32 %v797, %v855
      %v857 = vand.u32 %v856, 4294901760
      %v858 = vsub.f32 %v856, %v857
      %v859 = vand.u32 %v858, 4294901760
      %860 = vmatpush.msra.mxu0 %v859
      %v861 = vand.u32 %v796, 4294901760
      %v862 = vsub.f32 %v796, %v861
      %v863 = vand.u32 %v862, 4294901760
      %v864 = vsub.f32 %v862, %v863
      %v865 = vand.u32 %v864, 4294901760
      %866 = vmatpush.msra.mxu0 %v865
      %v867 = vand.u32 %v795, 4294901760
      %v868 = vsub.f32 %v795, %v867
      %v869 = vand.u32 %v868, 4294901760
      %v870 = vsub.f32 %v868, %v869
      %v871 = vand.u32 %v870, 4294901760
      %872 = vmatpush.msra.mxu0 %v871
      %v873 = vand.u32 %v794, 4294901760
      %v874 = vsub.f32 %v794, %v873
      %v875 = vand.u32 %v874, 4294901760
      %v876 = vsub.f32 %v874, %v875
      %v877 = vand.u32 %v876, 4294901760
      %878 = vmatpush.msra.mxu0 %v877
      %v879 = vand.u32 %v793, 4294901760
      %v880 = vsub.f32 %v793, %v879
      %v881 = vand.u32 %v880, 4294901760
      %v882 = vsub.f32 %v880, %v881
      %v883 = vand.u32 %v882, 4294901760
      %884 = vmatpush.msra.mxu0 %v883
      %v885 = vand.u32 %v792, 4294901760
      %v886 = vsub.f32 %v792, %v885
      %v887 = vand.u32 %v886, 4294901760
      %v888 = vsub.f32 %v886, %v887
      %v889 = vand.u32 %v888, 4294901760
      %890 = vmatpush.msra.mxu0 %v889
      %v891 = vand.u32 %v802, 4294901760
      %892 = vmatmul.f32.gmra.mxu0 %v891
      %v893 = vpop.f32.mrf.mxu0
      %v894 = vadd.f32 %v835, %v893
      %v895 = vand.u32 %v804, 4294901760
      %896 = vmatmul.f32.gmra.mxu0 %v895
      %v897 = vpop.f32.mrf.mxu0
      %v898 = vadd.f32 %v843, %v897
      %899 = vdwg.mxu0
      %900 = vmatpush.msra.mxu0 0.0
      %901 = vmatpush.msra.mxu0 0.0
      %902 = vmatpush.msra.mxu0 0.0
      %903 = vmatpush.msra.mxu0 0.0
      %904 = vmatpush.msra.mxu0 0.0
      %905 = vmatpush.msra.mxu0 0.0
      %906 = vmatpush.msra.mxu0 0.0
      %907 = vmatpush.msra.mxu0 0.0
      %908 = vmatpush.msra.mxu0 0.0
      %909 = vmatpush.msra.mxu0 0.0
      %v910 = vand.u32 %v797, 4294901760
      %v911 = vsub.f32 %v797, %v910
      %912 = vmatpush.msra.mxu0 %v911
      %v913 = vand.u32 %v796, 4294901760
      %v914 = vsub.f32 %v796, %v913
      %915 = vmatpush.msra.mxu0 %v914
      %v916 = vand.u32 %v795, 4294901760
      %v917 = vsub.f32 %v795, %v916
      %918 = vmatpush.msra.mxu0 %v917
      %v919 = vand.u32 %v794, 4294901760
      %v920 = vsub.f32 %v794, %v919
      %921 = vmatpush.msra.mxu0 %v920
      %v922 = vand.u32 %v793, 4294901760
      %v923 = vsub.f32 %v793, %v922
      %924 = vmatpush.msra.mxu0 %v923
      %v925 = vand.u32 %v792, 4294901760
      %v926 = vsub.f32 %v792, %v925
      %927 = vmatpush.msra.mxu0 %v926
      %v928 = vand.u32 %v802, 4294901760
      %v929 = vsub.f32 %v802, %v928
      %930 = vmatmul.f32.gmra.mxu0 %v929
      %v931 = vpop.f32.mrf.mxu0
      %v932 = vadd.f32 %v894, %v931
      %v933 = vand.u32 %v804, 4294901760
      %v934 = vsub.f32 %v804, %v933
      %935 = vmatmul.f32.gmra.mxu0 %v934
      %v936 = vpop.f32.mrf.mxu0
      %v937 = vadd.f32 %v898, %v936
      %938 = vdwg.mxu0
      %939 = vmatpush.msra.mxu0 0.0
      %940 = vmatpush.msra.mxu0 0.0
      %941 = vmatpush.msra.mxu0 0.0
      %942 = vmatpush.msra.mxu0 0.0
      %943 = vmatpush.msra.mxu0 0.0
      %944 = vmatpush.msra.mxu0 0.0
      %945 = vmatpush.msra.mxu0 0.0
      %946 = vmatpush.msra.mxu0 0.0
      %947 = vmatpush.msra.mxu0 0.0
      %948 = vmatpush.msra.mxu0 0.0
      %v949 = vand.u32 %v797, 4294901760
      %950 = vmatpush.msra.mxu0 %v949
      %v951 = vand.u32 %v796, 4294901760
      %952 = vmatpush.msra.mxu0 %v951
      %v953 = vand.u32 %v795, 4294901760
      %954 = vmatpush.msra.mxu0 %v953
      %v955 = vand.u32 %v794, 4294901760
      %956 = vmatpush.msra.mxu0 %v955
      %v957 = vand.u32 %v793, 4294901760
      %958 = vmatpush.msra.mxu0 %v957
      %v959 = vand.u32 %v792, 4294901760
      %960 = vmatpush.msra.mxu0 %v959
      %v961 = vand.u32 %v802, 4294901760
      %v962 = vsub.f32 %v802, %v961
      %v963 = vand.u32 %v962, 4294901760
      %964 = vmatmul.f32.gmra.mxu0 %v963
      %v965 = vpop.f32.mrf.mxu0
      %v966 = vadd.f32 %v932, %v965
      %v967 = vand.u32 %v804, 4294901760
      %v968 = vsub.f32 %v804, %v967
      %v969 = vand.u32 %v968, 4294901760
      %970 = vmatmul.f32.gmra.mxu0 %v969
      %v971 = vpop.f32.mrf.mxu0
      %v972 = vadd.f32 %v937, %v971
      %973 = vdwg.mxu0
      %974 = vmatpush.msra.mxu0 0.0
      %975 = vmatpush.msra.mxu0 0.0
      %976 = vmatpush.msra.mxu0 0.0
      %977 = vmatpush.msra.mxu0 0.0
      %978 = vmatpush.msra.mxu0 0.0
      %979 = vmatpush.msra.mxu0 0.0
      %980 = vmatpush.msra.mxu0 0.0
      %981 = vmatpush.msra.mxu0 0.0
      %982 = vmatpush.msra.mxu0 0.0
      %983 = vmatpush.msra.mxu0 0.0
      %v984 = vand.u32 %v797, 4294901760
      %v985 = vsub.f32 %v797, %v984
      %v986 = vand.u32 %v985, 4294901760
      %987 = vmatpush.msra.mxu0 %v986
      %v988 = vand.u32 %v796, 4294901760
      %v989 = vsub.f32 %v796, %v988
      %v990 = vand.u32 %v989, 4294901760
      %991 = vmatpush.msra.mxu0 %v990
      %v992 = vand.u32 %v795, 4294901760
      %v993 = vsub.f32 %v795, %v992
      %v994 = vand.u32 %v993, 4294901760
      %995 = vmatpush.msra.mxu0 %v994
      %v996 = vand.u32 %v794, 4294901760
      %v997 = vsub.f32 %v794, %v996
      %v998 = vand.u32 %v997, 4294901760
      %999 = vmatpush.msra.mxu0 %v998
      %v1000 = vand.u32 %v793, 4294901760
      %v1001 = vsub.f32 %v793, %v1000
      %v1002 = vand.u32 %v1001, 4294901760
      %1003 = vmatpush.msra.mxu0 %v1002
      %v1004 = vand.u32 %v792, 4294901760
      %v1005 = vsub.f32 %v792, %v1004
      %v1006 = vand.u32 %v1005, 4294901760
      %1007 = vmatpush.msra.mxu0 %v1006
      %v1008 = vand.u32 %v802, 4294901760
      %1009 = vmatmul.f32.gmra.mxu0 %v1008
      %v1010 = vpop.f32.mrf.mxu0
      %v1011 = vadd.f32 %v966, %v1010
      %v1012 = vand.u32 %v804, 4294901760
      %1013 = vmatmul.f32.gmra.mxu0 %v1012
      %v1014 = vpop.f32.mrf.mxu0
      %v1015 = vadd.f32 %v972, %v1014
      %1016 = vdwg.mxu0
      %1017 = vmatpush.msra.mxu0 0.0
      %1018 = vmatpush.msra.mxu0 0.0
      %1019 = vmatpush.msra.mxu0 0.0
      %1020 = vmatpush.msra.mxu0 0.0
      %1021 = vmatpush.msra.mxu0 0.0
      %1022 = vmatpush.msra.mxu0 0.0
      %1023 = vmatpush.msra.mxu0 0.0
      %1024 = vmatpush.msra.mxu0 0.0
      %1025 = vmatpush.msra.mxu0 0.0
      %1026 = vmatpush.msra.mxu0 0.0
      %v1027 = vand.u32 %v797, 4294901760
      %1028 = vmatpush.msra.mxu0 %v1027
      %v1029 = vand.u32 %v796, 4294901760
      %1030 = vmatpush.msra.mxu0 %v1029
      %v1031 = vand.u32 %v795, 4294901760
      %1032 = vmatpush.msra.mxu0 %v1031
      %v1033 = vand.u32 %v794, 4294901760
      %1034 = vmatpush.msra.mxu0 %v1033
      %v1035 = vand.u32 %v793, 4294901760
      %1036 = vmatpush.msra.mxu0 %v1035
      %v1037 = vand.u32 %v792, 4294901760
      %1038 = vmatpush.msra.mxu0 %v1037
      %v1039 = vand.u32 %v802, 4294901760
      %1040 = vmatmul.f32.gmra.mxu0 %v1039
      %v1041 = vpop.f32.mrf.mxu0
      %v1042 = vadd.f32 %v1011, %v1041
      %v1043 = vand.u32 %v804, 4294901760
      %1044 = vmatmul.f32.gmra.mxu0 %v1043
      %v1045 = vpop.f32.mrf.mxu0
      %v1046 = vadd.f32 %v1015, %v1045
      %1047 = vdwg.mxu0
      %v1048 = vadd.f32 %v785, %v1042
      %v1049 = vadd.f32 %v789, %v1046
      %v1050 = vld [vmem:[%s2] sm:$0x1]
      %v1052 = vperm.slane %v1050, 0
      %v1054 = vadd.f32 %v1048, %v1052
      %v1055 = vadd.f32 %v1049, %v1052
      %v1056 = vmax.f32 %v1054, 0.0
      %v1057 = vmax.f32 %v1055, 0.0
      %v1058 = vld [vmem:[%s3] sm:$0xff]
      %v1059 = vld [vmem:[%s3 + $0x8] sm:$0xff]
      %v1060 = vld [vmem:[%s3 + $0x10] sm:$0xff]
      %v1061 = vld [vmem:[%s3 + $0x18] sm:$0xff]
      %v1062 = vld [vmem:[%s3 + $0x20] sm:$0xff]
      %v1063 = vld [vmem:[%s3 + $0x28] sm:$0xff]
      %v1064 = vld [vmem:[%s3 + $0x30] sm:$0xff]
      %v1065 = vld [vmem:[%s3 + $0x38] sm:$0xff]
      %v1066 = vld [vmem:[%s3 + $0x40] sm:$0xff]
      %v1067 = vld [vmem:[%s3 + $0x48] sm:$0xff]
      %v1068 = vld [vmem:[%s3 + $0x50] sm:$0xf]
      %s1069 = scalar_lea.vmem %s3, 88
      %v1070 = vld [vmem:[%s1069] sm:$0xff]
      %v1071 = vld [vmem:[%s1069 + $0x8] sm:$0xff]
      %v1072 = vld [vmem:[%s1069 + $0x10] sm:$0xff]
      %v1073 = vld [vmem:[%s1069 + $0x18] sm:$0xff]
      %v1074 = vld [vmem:[%s1069 + $0x20] sm:$0xff]
      %v1075 = vld [vmem:[%s1069 + $0x28] sm:$0xff]
      %v1076 = vld [vmem:[%s1069 + $0x30] sm:$0xff]
      %v1077 = vld [vmem:[%s1069 + $0x38] sm:$0xff]
      %v1078 = vld [vmem:[%s1069 + $0x40] sm:$0xff]
      %v1079 = vld [vmem:[%s1069 + $0x48] sm:$0xff]
      %v1080 = vld [vmem:[%s1069 + $0x50] sm:$0xf]
      %v1083 = vrot.slane %v1056, 1
      %v1084 = vrot.slane %v1057, 1
      %v1085 = vsel %vm294, %v1083, %v1084
      %vm1086 = vcmask 687104
      %v1087 = vsel %vm1086, %v1085, 0
      %v1089 = vsel %vm1086, %v1084, 0
      %vm1091 = vcmask 1043456
      %v1093 = vsel %vm1091, %v1080, 0
      %1095 = vmatpush.msra.mxu0 0.0
      %1096 = vmatpush.msra.mxu0 0.0
      %1097 = vmatpush.msra.mxu0 0.0
      %1098 = vmatpush.msra.mxu0 0.0
      %1099 = vmatpush.msra.mxu0 0.0
      %v1100 = vand.u32 %v1093, 4294901760
      %1101 = vmatpush.msra.mxu0 %v1100
      %v1102 = vand.u32 %v1079, 4294901760
      %1103 = vmatpush.msra.mxu0 %v1102
      %v1104 = vand.u32 %v1078, 4294901760
      %1105 = vmatpush.msra.mxu0 %v1104
      %v1106 = vand.u32 %v1077, 4294901760
      %1107 = vmatpush.msra.mxu0 %v1106
      %v1108 = vand.u32 %v1076, 4294901760
      %1109 = vmatpush.msra.mxu0 %v1108
      %v1110 = vand.u32 %v1075, 4294901760
      %1111 = vmatpush.msra.mxu0 %v1110
      %v1112 = vand.u32 %v1074, 4294901760
      %1113 = vmatpush.msra.mxu0 %v1112
      %v1114 = vand.u32 %v1073, 4294901760
      %1115 = vmatpush.msra.mxu0 %v1114
      %v1116 = vand.u32 %v1072, 4294901760
      %1117 = vmatpush.msra.mxu0 %v1116
      %v1118 = vand.u32 %v1071, 4294901760
      %1119 = vmatpush.msra.mxu0 %v1118
      %v1120 = vand.u32 %v1070, 4294901760
      %1121 = vmatpush.msra.mxu0 %v1120
      %v1122 = vand.u32 %v1087, 4294901760
      %v1123 = vsub.f32 %v1087, %v1122
      %v1124 = vand.u32 %v1123, 4294901760
      %v1125 = vsub.f32 %v1123, %v1124
      %v1126 = vand.u32 %v1125, 4294901760
      %1127 = vmatmul.f32.gmra.mxu0 %v1126
      %v1128 = vpop.f32.mrf.mxu0
      %v1129 = vadd.f32 0.0, %v1128
      %v1130 = vand.u32 %v1089, 4294901760
      %v1131 = vsub.f32 %v1089, %v1130
      %v1132 = vand.u32 %v1131, 4294901760
      %v1133 = vsub.f32 %v1131, %v1132
      %v1134 = vand.u32 %v1133, 4294901760
      %1135 = vmatmul.f32.gmra.mxu0 %v1134
      %v1136 = vpop.f32.mrf.mxu0
      %v1137 = vadd.f32 0.0, %v1136
      %1138 = vdwg.mxu0
      %1139 = vmatpush.msra.mxu0 0.0
      %1140 = vmatpush.msra.mxu0 0.0
      %1141 = vmatpush.msra.mxu0 0.0
      %1142 = vmatpush.msra.mxu0 0.0
      %1143 = vmatpush.msra.mxu0 0.0
      %v1144 = vand.u32 %v1093, 4294901760
      %v1145 = vsub.f32 %v1093, %v1144
      %v1146 = vand.u32 %v1145, 4294901760
      %v1147 = vsub.f32 %v1145, %v1146
      %v1148 = vand.u32 %v1147, 4294901760
      %1149 = vmatpush.msra.mxu0 %v1148
      %v1150 = vand.u32 %v1079, 4294901760
      %v1151 = vsub.f32 %v1079, %v1150
      %v1152 = vand.u32 %v1151, 4294901760
      %v1153 = vsub.f32 %v1151, %v1152
      %v1154 = vand.u32 %v1153, 4294901760
      %1155 = vmatpush.msra.mxu0 %v1154
      %v1156 = vand.u32 %v1078, 4294901760
      %v1157 = vsub.f32 %v1078, %v1156
      %v1158 = vand.u32 %v1157, 4294901760
      %v1159 = vsub.f32 %v1157, %v1158
      %v1160 = vand.u32 %v1159, 4294901760
      %1161 = vmatpush.msra.mxu0 %v1160
      %v1162 = vand.u32 %v1077, 4294901760
      %v1163 = vsub.f32 %v1077, %v1162
      %v1164 = vand.u32 %v1163, 4294901760
      %v1165 = vsub.f32 %v1163, %v1164
      %v1166 = vand.u32 %v1165, 4294901760
      %1167 = vmatpush.msra.mxu0 %v1166
      %v1168 = vand.u32 %v1076, 4294901760
      %v1169 = vsub.f32 %v1076, %v1168
      %v1170 = vand.u32 %v1169, 4294901760
      %v1171 = vsub.f32 %v1169, %v1170
      %v1172 = vand.u32 %v1171, 4294901760
      %1173 = vmatpush.msra.mxu0 %v1172
      %v1174 = vand.u32 %v1075, 4294901760
      %v1175 = vsub.f32 %v1075, %v1174
      %v1176 = vand.u32 %v1175, 4294901760
      %v1177 = vsub.f32 %v1175, %v1176
      %v1178 = vand.u32 %v1177, 4294901760
      %1179 = vmatpush.msra.mxu0 %v1178
      %v1180 = vand.u32 %v1074, 4294901760
      %v1181 = vsub.f32 %v1074, %v1180
      %v1182 = vand.u32 %v1181, 4294901760
      %v1183 = vsub.f32 %v1181, %v1182
      %v1184 = vand.u32 %v1183, 4294901760
      %1185 = vmatpush.msra.mxu0 %v1184
      %v1186 = vand.u32 %v1073, 4294901760
      %v1187 = vsub.f32 %v1073, %v1186
      %v1188 = vand.u32 %v1187, 4294901760
      %v1189 = vsub.f32 %v1187, %v1188
      %v1190 = vand.u32 %v1189, 4294901760
      %1191 = vmatpush.msra.mxu0 %v1190
      %v1192 = vand.u32 %v1072, 4294901760
      %v1193 = vsub.f32 %v1072, %v1192
      %v1194 = vand.u32 %v1193, 4294901760
      %v1195 = vsub.f32 %v1193, %v1194
      %v1196 = vand.u32 %v1195, 4294901760
      %1197 = vmatpush.msra.mxu0 %v1196
      %v1198 = vand.u32 %v1071, 4294901760
      %v1199 = vsub.f32 %v1071, %v1198
      %v1200 = vand.u32 %v1199, 4294901760
      %v1201 = vsub.f32 %v1199, %v1200
      %v1202 = vand.u32 %v1201, 4294901760
      %1203 = vmatpush.msra.mxu0 %v1202
      %v1204 = vand.u32 %v1070, 4294901760
      %v1205 = vsub.f32 %v1070, %v1204
      %v1206 = vand.u32 %v1205, 4294901760
      %v1207 = vsub.f32 %v1205, %v1206
      %v1208 = vand.u32 %v1207, 4294901760
      %1209 = vmatpush.msra.mxu0 %v1208
      %v1210 = vand.u32 %v1087, 4294901760
      %1211 = vmatmul.f32.gmra.mxu0 %v1210
      %v1212 = vpop.f32.mrf.mxu0
      %v1213 = vadd.f32 %v1129, %v1212
      %v1214 = vand.u32 %v1089, 4294901760
      %1215 = vmatmul.f32.gmra.mxu0 %v1214
      %v1216 = vpop.f32.mrf.mxu0
      %v1217 = vadd.f32 %v1137, %v1216
      %1218 = vdwg.mxu0
      %1219 = vmatpush.msra.mxu0 0.0
      %1220 = vmatpush.msra.mxu0 0.0
      %1221 = vmatpush.msra.mxu0 0.0
      %1222 = vmatpush.msra.mxu0 0.0
      %1223 = vmatpush.msra.mxu0 0.0
      %v1224 = vand.u32 %v1093, 4294901760
      %v1225 = vsub.f32 %v1093, %v1224
      %1226 = vmatpush.msra.mxu0 %v1225
      %v1227 = vand.u32 %v1079, 4294901760
      %v1228 = vsub.f32 %v1079, %v1227
      %1229 = vmatpush.msra.mxu0 %v1228
      %v1230 = vand.u32 %v1078, 4294901760
      %v1231 = vsub.f32 %v1078, %v1230
      %1232 = vmatpush.msra.mxu0 %v1231
      %v1233 = vand.u32 %v1077, 4294901760
      %v1234 = vsub.f32 %v1077, %v1233
      %1235 = vmatpush.msra.mxu0 %v1234
      %v1236 = vand.u32 %v1076, 4294901760
      %v1237 = vsub.f32 %v1076, %v1236
      %1238 = vmatpush.msra.mxu0 %v1237
      %v1239 = vand.u32 %v1075, 4294901760
      %v1240 = vsub.f32 %v1075, %v1239
      %1241 = vmatpush.msra.mxu0 %v1240
      %v1242 = vand.u32 %v1074, 4294901760
      %v1243 = vsub.f32 %v1074, %v1242
      %1244 = vmatpush.msra.mxu0 %v1243
      %v1245 = vand.u32 %v1073, 4294901760
      %v1246 = vsub.f32 %v1073, %v1245
      %1247 = vmatpush.msra.mxu0 %v1246
      %v1248 = vand.u32 %v1072, 4294901760
      %v1249 = vsub.f32 %v1072, %v1248
      %1250 = vmatpush.msra.mxu0 %v1249
      %v1251 = vand.u32 %v1071, 4294901760
      %v1252 = vsub.f32 %v1071, %v1251
      %1253 = vmatpush.msra.mxu0 %v1252
      %v1254 = vand.u32 %v1070, 4294901760
      %v1255 = vsub.f32 %v1070, %v1254
      %1256 = vmatpush.msra.mxu0 %v1255
      %v1257 = vand.u32 %v1087, 4294901760
      %v1258 = vsub.f32 %v1087, %v1257
      %1259 = vmatmul.f32.gmra.mxu0 %v1258
      %v1260 = vpop.f32.mrf.mxu0
      %v1261 = vadd.f32 %v1213, %v1260
      %v1262 = vand.u32 %v1089, 4294901760
      %v1263 = vsub.f32 %v1089, %v1262
      %1264 = vmatmul.f32.gmra.mxu0 %v1263
      %v1265 = vpop.f32.mrf.mxu0
      %v1266 = vadd.f32 %v1217, %v1265
      %1267 = vdwg.mxu0
      %1268 = vmatpush.msra.mxu0 0.0
      %1269 = vmatpush.msra.mxu0 0.0
      %1270 = vmatpush.msra.mxu0 0.0
      %1271 = vmatpush.msra.mxu0 0.0
      %1272 = vmatpush.msra.mxu0 0.0
      %v1273 = vand.u32 %v1093, 4294901760
      %1274 = vmatpush.msra.mxu0 %v1273
      %v1275 = vand.u32 %v1079, 4294901760
      %1276 = vmatpush.msra.mxu0 %v1275
      %v1277 = vand.u32 %v1078, 4294901760
      %1278 = vmatpush.msra.mxu0 %v1277
      %v1279 = vand.u32 %v1077, 4294901760
      %1280 = vmatpush.msra.mxu0 %v1279
      %v1281 = vand.u32 %v1076, 4294901760
      %1282 = vmatpush.msra.mxu0 %v1281
      %v1283 = vand.u32 %v1075, 4294901760
      %1284 = vmatpush.msra.mxu0 %v1283
      %v1285 = vand.u32 %v1074, 4294901760
      %1286 = vmatpush.msra.mxu0 %v1285
      %v1287 = vand.u32 %v1073, 4294901760
      %1288 = vmatpush.msra.mxu0 %v1287
      %v1289 = vand.u32 %v1072, 4294901760
      %1290 = vmatpush.msra.mxu0 %v1289
      %v1291 = vand.u32 %v1071, 4294901760
      %1292 = vmatpush.msra.mxu0 %v1291
      %v1293 = vand.u32 %v1070, 4294901760
      %1294 = vmatpush.msra.mxu0 %v1293
      %v1295 = vand.u32 %v1087, 4294901760
      %v1296 = vsub.f32 %v1087, %v1295
      %v1297 = vand.u32 %v1296, 4294901760
      %1298 = vmatmul.f32.gmra.mxu0 %v1297
      %v1299 = vpop.f32.mrf.mxu0
      %v1300 = vadd.f32 %v1261, %v1299
      %v1301 = vand.u32 %v1089, 4294901760
      %v1302 = vsub.f32 %v1089, %v1301
      %v1303 = vand.u32 %v1302, 4294901760
      %1304 = vmatmul.f32.gmra.mxu0 %v1303
      %v1305 = vpop.f32.mrf.mxu0
      %v1306 = vadd.f32 %v1266, %v1305
      %1307 = vdwg.mxu0
      %1308 = vmatpush.msra.mxu0 0.0
      %1309 = vmatpush.msra.mxu0 0.0
      %1310 = vmatpush.msra.mxu0 0.0
      %1311 = vmatpush.msra.mxu0 0.0
      %1312 = vmatpush.msra.mxu0 0.0
      %v1313 = vand.u32 %v1093, 4294901760
      %v1314 = vsub.f32 %v1093, %v1313
      %v1315 = vand.u32 %v1314, 4294901760
      %1316 = vmatpush.msra.mxu0 %v1315
      %v1317 = vand.u32 %v1079, 4294901760
      %v1318 = vsub.f32 %v1079, %v1317
      %v1319 = vand.u32 %v1318, 4294901760
      %1320 = vmatpush.msra.mxu0 %v1319
      %v1321 = vand.u32 %v1078, 4294901760
      %v1322 = vsub.f32 %v1078, %v1321
      %v1323 = vand.u32 %v1322, 4294901760
      %1324 = vmatpush.msra.mxu0 %v1323
      %v1325 = vand.u32 %v1077, 4294901760
      %v1326 = vsub.f32 %v1077, %v1325
      %v1327 = vand.u32 %v1326, 4294901760
      %1328 = vmatpush.msra.mxu0 %v1327
      %v1329 = vand.u32 %v1076, 4294901760
      %v1330 = vsub.f32 %v1076, %v1329
      %v1331 = vand.u32 %v1330, 4294901760
      %1332 = vmatpush.msra.mxu0 %v1331
      %v1333 = vand.u32 %v1075, 4294901760
      %v1334 = vsub.f32 %v1075, %v1333
      %v1335 = vand.u32 %v1334, 4294901760
      %1336 = vmatpush.msra.mxu0 %v1335
      %v1337 = vand.u32 %v1074, 4294901760
      %v1338 = vsub.f32 %v1074, %v1337
      %v1339 = vand.u32 %v1338, 4294901760
      %1340 = vmatpush.msra.mxu0 %v1339
      %v1341 = vand.u32 %v1073, 4294901760
      %v1342 = vsub.f32 %v1073, %v1341
      %v1343 = vand.u32 %v1342, 4294901760
      %1344 = vmatpush.msra.mxu0 %v1343
      %v1345 = vand.u32 %v1072, 4294901760
      %v1346 = vsub.f32 %v1072, %v1345
      %v1347 = vand.u32 %v1346, 4294901760
      %1348 = vmatpush.msra.mxu0 %v1347
      %v1349 = vand.u32 %v1071, 4294901760
      %v1350 = vsub.f32 %v1071, %v1349
      %v1351 = vand.u32 %v1350, 4294901760
      %1352 = vmatpush.msra.mxu0 %v1351
      %v1353 = vand.u32 %v1070, 4294901760
      %v1354 = vsub.f32 %v1070, %v1353
      %v1355 = vand.u32 %v1354, 4294901760
      %1356 = vmatpush.msra.mxu0 %v1355
      %v1357 = vand.u32 %v1087, 4294901760
      %1358 = vmatmul.f32.gmra.mxu0 %v1357
      %v1359 = vpop.f32.mrf.mxu0
      %v1360 = vadd.f32 %v1300, %v1359
      %v1361 = vand.u32 %v1089, 4294901760
      %1362 = vmatmul.f32.gmra.mxu0 %v1361
      %v1363 = vpop.f32.mrf.mxu0
      %v1364 = vadd.f32 %v1306, %v1363
      %1365 = vdwg.mxu0
      %1366 = vmatpush.msra.mxu0 0.0
      %1367 = vmatpush.msra.mxu0 0.0
      %1368 = vmatpush.msra.mxu0 0.0
      %1369 = vmatpush.msra.mxu0 0.0
      %1370 = vmatpush.msra.mxu0 0.0
      %v1371 = vand.u32 %v1093, 4294901760
      %1372 = vmatpush.msra.mxu0 %v1371
      %v1373 = vand.u32 %v1079, 4294901760
      %1374 = vmatpush.msra.mxu0 %v1373
      %v1375 = vand.u32 %v1078, 4294901760
      %1376 = vmatpush.msra.mxu0 %v1375
      %v1377 = vand.u32 %v1077, 4294901760
      %1378 = vmatpush.msra.mxu0 %v1377
      %v1379 = vand.u32 %v1076, 4294901760
      %1380 = vmatpush.msra.mxu0 %v1379
      %v1381 = vand.u32 %v1075, 4294901760
      %1382 = vmatpush.msra.mxu0 %v1381
      %v1383 = vand.u32 %v1074, 4294901760
      %1384 = vmatpush.msra.mxu0 %v1383
      %v1385 = vand.u32 %v1073, 4294901760
      %1386 = vmatpush.msra.mxu0 %v1385
      %v1387 = vand.u32 %v1072, 4294901760
      %1388 = vmatpush.msra.mxu0 %v1387
      %v1389 = vand.u32 %v1071, 4294901760
      %1390 = vmatpush.msra.mxu0 %v1389
      %v1391 = vand.u32 %v1070, 4294901760
      %1392 = vmatpush.msra.mxu0 %v1391
      %v1393 = vand.u32 %v1087, 4294901760
      %1394 = vmatmul.f32.gmra.mxu0 %v1393
      %v1395 = vpop.f32.mrf.mxu0
      %v1396 = vadd.f32 %v1360, %v1395
      %v1397 = vand.u32 %v1089, 4294901760
      %1398 = vmatmul.f32.gmra.mxu0 %v1397
      %v1399 = vpop.f32.mrf.mxu0
      %v1400 = vadd.f32 %v1364, %v1399
      %1401 = vdwg.mxu0
      %v1402 = vsel %vm1086, %v1056, 0
      %v1404 = vsel %vm1086, %v1057, 0
      %v1407 = vsel %vm1091, %v1068, 0
      %1409 = vmatpush.msra.mxu0 0.0
      %1410 = vmatpush.msra.mxu0 0.0
      %1411 = vmatpush.msra.mxu0 0.0
      %1412 = vmatpush.msra.mxu0 0.0
      %1413 = vmatpush.msra.mxu0 0.0
      %v1414 = vand.u32 %v1407, 4294901760
      %1415 = vmatpush.msra.mxu0 %v1414
      %v1416 = vand.u32 %v1067, 4294901760
      %1417 = vmatpush.msra.mxu0 %v1416
      %v1418 = vand.u32 %v1066, 4294901760
      %1419 = vmatpush.msra.mxu0 %v1418
      %v1420 = vand.u32 %v1065, 4294901760
      %1421 = vmatpush.msra.mxu0 %v1420
      %v1422 = vand.u32 %v1064, 4294901760
      %1423 = vmatpush.msra.mxu0 %v1422
      %v1424 = vand.u32 %v1063, 4294901760
      %1425 = vmatpush.msra.mxu0 %v1424
      %v1426 = vand.u32 %v1062, 4294901760
      %1427 = vmatpush.msra.mxu0 %v1426
      %v1428 = vand.u32 %v1061, 4294901760
      %1429 = vmatpush.msra.mxu0 %v1428
      %v1430 = vand.u32 %v1060, 4294901760
      %1431 = vmatpush.msra.mxu0 %v1430
      %v1432 = vand.u32 %v1059, 4294901760
      %1433 = vmatpush.msra.mxu0 %v1432
      %v1434 = vand.u32 %v1058, 4294901760
      %1435 = vmatpush.msra.mxu0 %v1434
      %v1436 = vand.u32 %v1402, 4294901760
      %v1437 = vsub.f32 %v1402, %v1436
      %v1438 = vand.u32 %v1437, 4294901760
      %v1439 = vsub.f32 %v1437, %v1438
      %v1440 = vand.u32 %v1439, 4294901760
      %1441 = vmatmul.f32.gmra.mxu0 %v1440
      %v1442 = vpop.f32.mrf.mxu0
      %v1443 = vadd.f32 %v1396, %v1442
      %v1444 = vand.u32 %v1404, 4294901760
      %v1445 = vsub.f32 %v1404, %v1444
      %v1446 = vand.u32 %v1445, 4294901760
      %v1447 = vsub.f32 %v1445, %v1446
      %v1448 = vand.u32 %v1447, 4294901760
      %1449 = vmatmul.f32.gmra.mxu0 %v1448
      %v1450 = vpop.f32.mrf.mxu0
      %v1451 = vadd.f32 %v1400, %v1450
      %1452 = vdwg.mxu0
      %1453 = vmatpush.msra.mxu0 0.0
      %1454 = vmatpush.msra.mxu0 0.0
      %1455 = vmatpush.msra.mxu0 0.0
      %1456 = vmatpush.msra.mxu0 0.0
      %1457 = vmatpush.msra.mxu0 0.0
      %v1458 = vand.u32 %v1407, 4294901760
      %v1459 = vsub.f32 %v1407, %v1458
      %v1460 = vand.u32 %v1459, 4294901760
      %v1461 = vsub.f32 %v1459, %v1460
      %v1462 = vand.u32 %v1461, 4294901760
      %1463 = vmatpush.msra.mxu0 %v1462
      %v1464 = vand.u32 %v1067, 4294901760
      %v1465 = vsub.f32 %v1067, %v1464
      %v1466 = vand.u32 %v1465, 4294901760
      %v1467 = vsub.f32 %v1465, %v1466
      %v1468 = vand.u32 %v1467, 4294901760
      %1469 = vmatpush.msra.mxu0 %v1468
      %v1470 = vand.u32 %v1066, 4294901760
      %v1471 = vsub.f32 %v1066, %v1470
      %v1472 = vand.u32 %v1471, 4294901760
      %v1473 = vsub.f32 %v1471, %v1472
      %v1474 = vand.u32 %v1473, 4294901760
      %1475 = vmatpush.msra.mxu0 %v1474
      %v1476 = vand.u32 %v1065, 4294901760
      %v1477 = vsub.f32 %v1065, %v1476
      %v1478 = vand.u32 %v1477, 4294901760
      %v1479 = vsub.f32 %v1477, %v1478
      %v1480 = vand.u32 %v1479, 4294901760
      %1481 = vmatpush.msra.mxu0 %v1480
      %v1482 = vand.u32 %v1064, 4294901760
      %v1483 = vsub.f32 %v1064, %v1482
      %v1484 = vand.u32 %v1483, 4294901760
      %v1485 = vsub.f32 %v1483, %v1484
      %v1486 = vand.u32 %v1485, 4294901760
      %1487 = vmatpush.msra.mxu0 %v1486
      %v1488 = vand.u32 %v1063, 4294901760
      %v1489 = vsub.f32 %v1063, %v1488
      %v1490 = vand.u32 %v1489, 4294901760
      %v1491 = vsub.f32 %v1489, %v1490
      %v1492 = vand.u32 %v1491, 4294901760
      %1493 = vmatpush.msra.mxu0 %v1492
      %v1494 = vand.u32 %v1062, 4294901760
      %v1495 = vsub.f32 %v1062, %v1494
      %v1496 = vand.u32 %v1495, 4294901760
      %v1497 = vsub.f32 %v1495, %v1496
      %v1498 = vand.u32 %v1497, 4294901760
      %1499 = vmatpush.msra.mxu0 %v1498
      %v1500 = vand.u32 %v1061, 4294901760
      %v1501 = vsub.f32 %v1061, %v1500
      %v1502 = vand.u32 %v1501, 4294901760
      %v1503 = vsub.f32 %v1501, %v1502
      %v1504 = vand.u32 %v1503, 4294901760
      %1505 = vmatpush.msra.mxu0 %v1504
      %v1506 = vand.u32 %v1060, 4294901760
      %v1507 = vsub.f32 %v1060, %v1506
      %v1508 = vand.u32 %v1507, 4294901760
      %v1509 = vsub.f32 %v1507, %v1508
      %v1510 = vand.u32 %v1509, 4294901760
      %1511 = vmatpush.msra.mxu0 %v1510
      %v1512 = vand.u32 %v1059, 4294901760
      %v1513 = vsub.f32 %v1059, %v1512
      %v1514 = vand.u32 %v1513, 4294901760
      %v1515 = vsub.f32 %v1513, %v1514
      %v1516 = vand.u32 %v1515, 4294901760
      %1517 = vmatpush.msra.mxu0 %v1516
      %v1518 = vand.u32 %v1058, 4294901760
      %v1519 = vsub.f32 %v1058, %v1518
      %v1520 = vand.u32 %v1519, 4294901760
      %v1521 = vsub.f32 %v1519, %v1520
      %v1522 = vand.u32 %v1521, 4294901760
      %1523 = vmatpush.msra.mxu0 %v1522
      %v1524 = vand.u32 %v1402, 4294901760
      %1525 = vmatmul.f32.gmra.mxu0 %v1524
      %v1526 = vpop.f32.mrf.mxu0
      %v1527 = vadd.f32 %v1443, %v1526
      %v1528 = vand.u32 %v1404, 4294901760
      %1529 = vmatmul.f32.gmra.mxu0 %v1528
      %v1530 = vpop.f32.mrf.mxu0
      %v1531 = vadd.f32 %v1451, %v1530
      %1532 = vdwg.mxu0
      %1533 = vmatpush.msra.mxu0 0.0
      %1534 = vmatpush.msra.mxu0 0.0
      %1535 = vmatpush.msra.mxu0 0.0
      %1536 = vmatpush.msra.mxu0 0.0
      %1537 = vmatpush.msra.mxu0 0.0
      %v1538 = vand.u32 %v1407, 4294901760
      %v1539 = vsub.f32 %v1407, %v1538
      %1540 = vmatpush.msra.mxu0 %v1539
      %v1541 = vand.u32 %v1067, 4294901760
      %v1542 = vsub.f32 %v1067, %v1541
      %1543 = vmatpush.msra.mxu0 %v1542
      %v1544 = vand.u32 %v1066, 4294901760
      %v1545 = vsub.f32 %v1066, %v1544
      %1546 = vmatpush.msra.mxu0 %v1545
      %v1547 = vand.u32 %v1065, 4294901760
      %v1548 = vsub.f32 %v1065, %v1547
      %1549 = vmatpush.msra.mxu0 %v1548
      %v1550 = vand.u32 %v1064, 4294901760
      %v1551 = vsub.f32 %v1064, %v1550
      %1552 = vmatpush.msra.mxu0 %v1551
      %v1553 = vand.u32 %v1063, 4294901760
      %v1554 = vsub.f32 %v1063, %v1553
      %1555 = vmatpush.msra.mxu0 %v1554
      %v1556 = vand.u32 %v1062, 4294901760
      %v1557 = vsub.f32 %v1062, %v1556
      %1558 = vmatpush.msra.mxu0 %v1557
      %v1559 = vand.u32 %v1061, 4294901760
      %v1560 = vsub.f32 %v1061, %v1559
      %1561 = vmatpush.msra.mxu0 %v1560
      %v1562 = vand.u32 %v1060, 4294901760
      %v1563 = vsub.f32 %v1060, %v1562
      %1564 = vmatpush.msra.mxu0 %v1563
      %v1565 = vand.u32 %v1059, 4294901760
      %v1566 = vsub.f32 %v1059, %v1565
      %1567 = vmatpush.msra.mxu0 %v1566
      %v1568 = vand.u32 %v1058, 4294901760
      %v1569 = vsub.f32 %v1058, %v1568
      %1570 = vmatpush.msra.mxu0 %v1569
      %v1571 = vand.u32 %v1402, 4294901760
      %v1572 = vsub.f32 %v1402, %v1571
      %1573 = vmatmul.f32.gmra.mxu0 %v1572
      %v1574 = vpop.f32.mrf.mxu0
      %v1575 = vadd.f32 %v1527, %v1574
      %v1576 = vand.u32 %v1404, 4294901760
      %v1577 = vsub.f32 %v1404, %v1576
      %1578 = vmatmul.f32.gmra.mxu0 %v1577
      %v1579 = vpop.f32.mrf.mxu0
      %v1580 = vadd.f32 %v1531, %v1579
      %1581 = vdwg.mxu0
      %1582 = vmatpush.msra.mxu0 0.0
      %1583 = vmatpush.msra.mxu0 0.0
      %1584 = vmatpush.msra.mxu0 0.0
      %1585 = vmatpush.msra.mxu0 0.0
      %1586 = vmatpush.msra.mxu0 0.0
      %v1587 = vand.u32 %v1407, 4294901760
      %1588 = vmatpush.msra.mxu0 %v1587
      %v1589 = vand.u32 %v1067, 4294901760
      %1590 = vmatpush.msra.mxu0 %v1589
      %v1591 = vand.u32 %v1066, 4294901760
      %1592 = vmatpush.msra.mxu0 %v1591
      %v1593 = vand.u32 %v1065, 4294901760
      %1594 = vmatpush.msra.mxu0 %v1593
      %v1595 = vand.u32 %v1064, 4294901760
      %1596 = vmatpush.msra.mxu0 %v1595
      %v1597 = vand.u32 %v1063, 4294901760
      %1598 = vmatpush.msra.mxu0 %v1597
      %v1599 = vand.u32 %v1062, 4294901760
      %1600 = vmatpush.msra.mxu0 %v1599
      %v1601 = vand.u32 %v1061, 4294901760
      %1602 = vmatpush.msra.mxu0 %v1601
      %v1603 = vand.u32 %v1060, 4294901760
      %1604 = vmatpush.msra.mxu0 %v1603
      %v1605 = vand.u32 %v1059, 4294901760
      %1606 = vmatpush.msra.mxu0 %v1605
      %v1607 = vand.u32 %v1058, 4294901760
      %1608 = vmatpush.msra.mxu0 %v1607
      %v1609 = vand.u32 %v1402, 4294901760
      %v1610 = vsub.f32 %v1402, %v1609
      %v1611 = vand.u32 %v1610, 4294901760
      %1612 = vmatmul.f32.gmra.mxu0 %v1611
      %v1613 = vpop.f32.mrf.mxu0
      %v1614 = vadd.f32 %v1575, %v1613
      %v1615 = vand.u32 %v1404, 4294901760
      %v1616 = vsub.f32 %v1404, %v1615
      %v1617 = vand.u32 %v1616, 4294901760
      %1618 = vmatmul.f32.gmra.mxu0 %v1617
      %v1619 = vpop.f32.mrf.mxu0
      %v1620 = vadd.f32 %v1580, %v1619
      %1621 = vdwg.mxu0
      %1622 = vmatpush.msra.mxu0 0.0
      %1623 = vmatpush.msra.mxu0 0.0
      %1624 = vmatpush.msra.mxu0 0.0
      %1625 = vmatpush.msra.mxu0 0.0
      %1626 = vmatpush.msra.mxu0 0.0
      %v1627 = vand.u32 %v1407, 4294901760
      %v1628 = vsub.f32 %v1407, %v1627
      %v1629 = vand.u32 %v1628, 4294901760
      %1630 = vmatpush.msra.mxu0 %v1629
      %v1631 = vand.u32 %v1067, 4294901760
      %v1632 = vsub.f32 %v1067, %v1631
      %v1633 = vand.u32 %v1632, 4294901760
      %1634 = vmatpush.msra.mxu0 %v1633
      %v1635 = vand.u32 %v1066, 4294901760
      %v1636 = vsub.f32 %v1066, %v1635
      %v1637 = vand.u32 %v1636, 4294901760
      %1638 = vmatpush.msra.mxu0 %v1637
      %v1639 = vand.u32 %v1065, 4294901760
      %v1640 = vsub.f32 %v1065, %v1639
      %v1641 = vand.u32 %v1640, 4294901760
      %1642 = vmatpush.msra.mxu0 %v1641
      %v1643 = vand.u32 %v1064, 4294901760
      %v1644 = vsub.f32 %v1064, %v1643
      %v1645 = vand.u32 %v1644, 4294901760
      %1646 = vmatpush.msra.mxu0 %v1645
      %v1647 = vand.u32 %v1063, 4294901760
      %v1648 = vsub.f32 %v1063, %v1647
      %v1649 = vand.u32 %v1648, 4294901760
      %1650 = vmatpush.msra.mxu0 %v1649
      %v1651 = vand.u32 %v1062, 4294901760
      %v1652 = vsub.f32 %v1062, %v1651
      %v1653 = vand.u32 %v1652, 4294901760
      %1654 = vmatpush.msra.mxu0 %v1653
      %v1655 = vand.u32 %v1061, 4294901760
      %v1656 = vsub.f32 %v1061, %v1655
      %v1657 = vand.u32 %v1656, 4294901760
      %1658 = vmatpush.msra.mxu0 %v1657
      %v1659 = vand.u32 %v1060, 4294901760
      %v1660 = vsub.f32 %v1060, %v1659
      %v1661 = vand.u32 %v1660, 4294901760
      %1662 = vmatpush.msra.mxu0 %v1661
      %v1663 = vand.u32 %v1059, 4294901760
      %v1664 = vsub.f32 %v1059, %v1663
      %v1665 = vand.u32 %v1664, 4294901760
      %1666 = vmatpush.msra.mxu0 %v1665
      %v1667 = vand.u32 %v1058, 4294901760
      %v1668 = vsub.f32 %v1058, %v1667
      %v1669 = vand.u32 %v1668, 4294901760
      %1670 = vmatpush.msra.mxu0 %v1669
      %v1671 = vand.u32 %v1402, 4294901760
      %1672 = vmatmul.f32.gmra.mxu0 %v1671
      %v1673 = vpop.f32.mrf.mxu0
      %v1674 = vadd.f32 %v1614, %v1673
      %v1675 = vand.u32 %v1404, 4294901760
      %1676 = vmatmul.f32.gmra.mxu0 %v1675
      %v1677 = vpop.f32.mrf.mxu0
      %v1678 = vadd.f32 %v1620, %v1677
      %1679 = vdwg.mxu0
      %1680 = vmatpush.msra.mxu0 0.0
      %1681 = vmatpush.msra.mxu0 0.0
      %1682 = vmatpush.msra.mxu0 0.0
      %1683 = vmatpush.msra.mxu0 0.0
      %1684 = vmatpush.msra.mxu0 0.0
      %v1685 = vand.u32 %v1407, 4294901760
      %1686 = vmatpush.msra.mxu0 %v1685
      %v1687 = vand.u32 %v1067, 4294901760
      %1688 = vmatpush.msra.mxu0 %v1687
      %v1689 = vand.u32 %v1066, 4294901760
      %1690 = vmatpush.msra.mxu0 %v1689
      %v1691 = vand.u32 %v1065, 4294901760
      %1692 = vmatpush.msra.mxu0 %v1691
      %v1693 = vand.u32 %v1064, 4294901760
      %1694 = vmatpush.msra.mxu0 %v1693
      %v1695 = vand.u32 %v1063, 4294901760
      %1696 = vmatpush.msra.mxu0 %v1695
      %v1697 = vand.u32 %v1062, 4294901760
      %1698 = vmatpush.msra.mxu0 %v1697
      %v1699 = vand.u32 %v1061, 4294901760
      %1700 = vmatpush.msra.mxu0 %v1699
      %v1701 = vand.u32 %v1060, 4294901760
      %1702 = vmatpush.msra.mxu0 %v1701
      %v1703 = vand.u32 %v1059, 4294901760
      %1704 = vmatpush.msra.mxu0 %v1703
      %v1705 = vand.u32 %v1058, 4294901760
      %1706 = vmatpush.msra.mxu0 %v1705
      %v1707 = vand.u32 %v1402, 4294901760
      %1708 = vmatmul.f32.gmra.mxu0 %v1707
      %v1709 = vpop.f32.mrf.mxu0
      %v1710 = vadd.f32 %v1674, %v1709
      %v1711 = vand.u32 %v1404, 4294901760
      %1712 = vmatmul.f32.gmra.mxu0 %v1711
      %v1713 = vpop.f32.mrf.mxu0
      %v1714 = vadd.f32 %v1678, %v1713
      %1715 = vdwg.mxu0
      %s1716 = scalar_lea.vmem %s3, 176
      %v1717 = vld [vmem:[%s1716] sm:$0xff]
      %v1718 = vld [vmem:[%s1716 + $0x8] sm:$0xff]
      %v1719 = vld [vmem:[%s1716 + $0x10] sm:$0xff]
      %v1720 = vld [vmem:[%s1716 + $0x18] sm:$0xff]
      %v1721 = vld [vmem:[%s1716 + $0x20] sm:$0xff]
      %v1722 = vld [vmem:[%s1716 + $0x28] sm:$0xff]
      %v1723 = vld [vmem:[%s1716 + $0x30] sm:$0xff]
      %v1724 = vld [vmem:[%s1716 + $0x38] sm:$0xff]
      %v1725 = vld [vmem:[%s1716 + $0x40] sm:$0xff]
      %v1726 = vld [vmem:[%s1716 + $0x48] sm:$0xff]
      %v1727 = vld [vmem:[%s1716 + $0x50] sm:$0xf]
      %v1728 = vrot.slane %v1056, 2
      %v1729 = vrot.slane %v1057, 2
      %v1730 = vsel %vm798, %v1728, %v1729
      %v1731 = vsel %vm1086, %v1730, 0
      %v1733 = vsel %vm1086, %v1729, 0
      %v1736 = vsel %vm1091, %v1727, 0
      %1738 = vmatpush.msra.mxu0 0.0
      %1739 = vmatpush.msra.mxu0 0.0
      %1740 = vmatpush.msra.mxu0 0.0
      %1741 = vmatpush.msra.mxu0 0.0
      %1742 = vmatpush.msra.mxu0 0.0
      %v1743 = vand.u32 %v1736, 4294901760
      %1744 = vmatpush.msra.mxu0 %v1743
      %v1745 = vand.u32 %v1726, 4294901760
      %1746 = vmatpush.msra.mxu0 %v1745
      %v1747 = vand.u32 %v1725, 4294901760
      %1748 = vmatpush.msra.mxu0 %v1747
      %v1749 = vand.u32 %v1724, 4294901760
      %1750 = vmatpush.msra.mxu0 %v1749
      %v1751 = vand.u32 %v1723, 4294901760
      %1752 = vmatpush.msra.mxu0 %v1751
      %v1753 = vand.u32 %v1722, 4294901760
      %1754 = vmatpush.msra.mxu0 %v1753
      %v1755 = vand.u32 %v1721, 4294901760
      %1756 = vmatpush.msra.mxu0 %v1755
      %v1757 = vand.u32 %v1720, 4294901760
      %1758 = vmatpush.msra.mxu0 %v1757
      %v1759 = vand.u32 %v1719, 4294901760
      %1760 = vmatpush.msra.mxu0 %v1759
      %v1761 = vand.u32 %v1718, 4294901760
      %1762 = vmatpush.msra.mxu0 %v1761
      %v1763 = vand.u32 %v1717, 4294901760
      %1764 = vmatpush.msra.mxu0 %v1763
      %v1765 = vand.u32 %v1731, 4294901760
      %v1766 = vsub.f32 %v1731, %v1765
      %v1767 = vand.u32 %v1766, 4294901760
      %v1768 = vsub.f32 %v1766, %v1767
      %v1769 = vand.u32 %v1768, 4294901760
      %1770 = vmatmul.f32.gmra.mxu0 %v1769
      %v1771 = vpop.f32.mrf.mxu0
      %v1772 = vadd.f32 0.0, %v1771
      %v1773 = vand.u32 %v1733, 4294901760
      %v1774 = vsub.f32 %v1733, %v1773
      %v1775 = vand.u32 %v1774, 4294901760
      %v1776 = vsub.f32 %v1774, %v1775
      %v1777 = vand.u32 %v1776, 4294901760
      %1778 = vmatmul.f32.gmra.mxu0 %v1777
      %v1779 = vpop.f32.mrf.mxu0
      %v1780 = vadd.f32 0.0, %v1779
      %1781 = vdwg.mxu0
      %1782 = vmatpush.msra.mxu0 0.0
      %1783 = vmatpush.msra.mxu0 0.0
      %1784 = vmatpush.msra.mxu0 0.0
      %1785 = vmatpush.msra.mxu0 0.0
      %1786 = vmatpush.msra.mxu0 0.0
      %v1787 = vand.u32 %v1736, 4294901760
      %v1788 = vsub.f32 %v1736, %v1787
      %v1789 = vand.u32 %v1788, 4294901760
      %v1790 = vsub.f32 %v1788, %v1789
      %v1791 = vand.u32 %v1790, 4294901760
      %1792 = vmatpush.msra.mxu0 %v1791
      %v1793 = vand.u32 %v1726, 4294901760
      %v1794 = vsub.f32 %v1726, %v1793
      %v1795 = vand.u32 %v1794, 4294901760
      %v1796 = vsub.f32 %v1794, %v1795
      %v1797 = vand.u32 %v1796, 4294901760
      %1798 = vmatpush.msra.mxu0 %v1797
      %v1799 = vand.u32 %v1725, 4294901760
      %v1800 = vsub.f32 %v1725, %v1799
      %v1801 = vand.u32 %v1800, 4294901760
      %v1802 = vsub.f32 %v1800, %v1801
      %v1803 = vand.u32 %v1802, 4294901760
      %1804 = vmatpush.msra.mxu0 %v1803
      %v1805 = vand.u32 %v1724, 4294901760
      %v1806 = vsub.f32 %v1724, %v1805
      %v1807 = vand.u32 %v1806, 4294901760
      %v1808 = vsub.f32 %v1806, %v1807
      %v1809 = vand.u32 %v1808, 4294901760
      %1810 = vmatpush.msra.mxu0 %v1809
      %v1811 = vand.u32 %v1723, 4294901760
      %v1812 = vsub.f32 %v1723, %v1811
      %v1813 = vand.u32 %v1812, 4294901760
      %v1814 = vsub.f32 %v1812, %v1813
      %v1815 = vand.u32 %v1814, 4294901760
      %1816 = vmatpush.msra.mxu0 %v1815
      %v1817 = vand.u32 %v1722, 4294901760
      %v1818 = vsub.f32 %v1722, %v1817
      %v1819 = vand.u32 %v1818, 4294901760
      %v1820 = vsub.f32 %v1818, %v1819
      %v1821 = vand.u32 %v1820, 4294901760
      %1822 = vmatpush.msra.mxu0 %v1821
      %v1823 = vand.u32 %v1721, 4294901760
      %v1824 = vsub.f32 %v1721, %v1823
      %v1825 = vand.u32 %v1824, 4294901760
      %v1826 = vsub.f32 %v1824, %v1825
      %v1827 = vand.u32 %v1826, 4294901760
      %1828 = vmatpush.msra.mxu0 %v1827
      %v1829 = vand.u32 %v1720, 4294901760
      %v1830 = vsub.f32 %v1720, %v1829
      %v1831 = vand.u32 %v1830, 4294901760
      %v1832 = vsub.f32 %v1830, %v1831
      %v1833 = vand.u32 %v1832, 4294901760
      %1834 = vmatpush.msra.mxu0 %v1833
      %v1835 = vand.u32 %v1719, 4294901760
      %v1836 = vsub.f32 %v1719, %v1835
      %v1837 = vand.u32 %v1836, 4294901760
      %v1838 = vsub.f32 %v1836, %v1837
      %v1839 = vand.u32 %v1838, 4294901760
      %1840 = vmatpush.msra.mxu0 %v1839
      %v1841 = vand.u32 %v1718, 4294901760
      %v1842 = vsub.f32 %v1718, %v1841
      %v1843 = vand.u32 %v1842, 4294901760
      %v1844 = vsub.f32 %v1842, %v1843
      %v1845 = vand.u32 %v1844, 4294901760
      %1846 = vmatpush.msra.mxu0 %v1845
      %v1847 = vand.u32 %v1717, 4294901760
      %v1848 = vsub.f32 %v1717, %v1847
      %v1849 = vand.u32 %v1848, 4294901760
      %v1850 = vsub.f32 %v1848, %v1849
      %v1851 = vand.u32 %v1850, 4294901760
      %1852 = vmatpush.msra.mxu0 %v1851
      %v1853 = vand.u32 %v1731, 4294901760
      %1854 = vmatmul.f32.gmra.mxu0 %v1853
      %v1855 = vpop.f32.mrf.mxu0
      %v1856 = vadd.f32 %v1772, %v1855
      %v1857 = vand.u32 %v1733, 4294901760
      %1858 = vmatmul.f32.gmra.mxu0 %v1857
      %v1859 = vpop.f32.mrf.mxu0
      %v1860 = vadd.f32 %v1780, %v1859
      %1861 = vdwg.mxu0
      %1862 = vmatpush.msra.mxu0 0.0
      %1863 = vmatpush.msra.mxu0 0.0
      %1864 = vmatpush.msra.mxu0 0.0
      %1865 = vmatpush.msra.mxu0 0.0
      %1866 = vmatpush.msra.mxu0 0.0
      %v1867 = vand.u32 %v1736, 4294901760
      %v1868 = vsub.f32 %v1736, %v1867
      %1869 = vmatpush.msra.mxu0 %v1868
      %v1870 = vand.u32 %v1726, 4294901760
      %v1871 = vsub.f32 %v1726, %v1870
      %1872 = vmatpush.msra.mxu0 %v1871
      %v1873 = vand.u32 %v1725, 4294901760
      %v1874 = vsub.f32 %v1725, %v1873
      %1875 = vmatpush.msra.mxu0 %v1874
      %v1876 = vand.u32 %v1724, 4294901760
      %v1877 = vsub.f32 %v1724, %v1876
      %1878 = vmatpush.msra.mxu0 %v1877
      %v1879 = vand.u32 %v1723, 4294901760
      %v1880 = vsub.f32 %v1723, %v1879
      %1881 = vmatpush.msra.mxu0 %v1880
      %v1882 = vand.u32 %v1722, 4294901760
      %v1883 = vsub.f32 %v1722, %v1882
      %1884 = vmatpush.msra.mxu0 %v1883
      %v1885 = vand.u32 %v1721, 4294901760
      %v1886 = vsub.f32 %v1721, %v1885
      %1887 = vmatpush.msra.mxu0 %v1886
      %v1888 = vand.u32 %v1720, 4294901760
      %v1889 = vsub.f32 %v1720, %v1888
      %1890 = vmatpush.msra.mxu0 %v1889
      %v1891 = vand.u32 %v1719, 4294901760
      %v1892 = vsub.f32 %v1719, %v1891
      %1893 = vmatpush.msra.mxu0 %v1892
      %v1894 = vand.u32 %v1718, 4294901760
      %v1895 = vsub.f32 %v1718, %v1894
      %1896 = vmatpush.msra.mxu0 %v1895
      %v1897 = vand.u32 %v1717, 4294901760
      %v1898 = vsub.f32 %v1717, %v1897
      %1899 = vmatpush.msra.mxu0 %v1898
      %v1900 = vand.u32 %v1731, 4294901760
      %v1901 = vsub.f32 %v1731, %v1900
      %1902 = vmatmul.f32.gmra.mxu0 %v1901
      %v1903 = vpop.f32.mrf.mxu0
      %v1904 = vadd.f32 %v1856, %v1903
      %v1905 = vand.u32 %v1733, 4294901760
      %v1906 = vsub.f32 %v1733, %v1905
      %1907 = vmatmul.f32.gmra.mxu0 %v1906
      %v1908 = vpop.f32.mrf.mxu0
      %v1909 = vadd.f32 %v1860, %v1908
      %1910 = vdwg.mxu0
      %1911 = vmatpush.msra.mxu0 0.0
      %1912 = vmatpush.msra.mxu0 0.0
      %1913 = vmatpush.msra.mxu0 0.0
      %1914 = vmatpush.msra.mxu0 0.0
      %1915 = vmatpush.msra.mxu0 0.0
      %v1916 = vand.u32 %v1736, 4294901760
      %1917 = vmatpush.msra.mxu0 %v1916
      %v1918 = vand.u32 %v1726, 4294901760
      %1919 = vmatpush.msra.mxu0 %v1918
      %v1920 = vand.u32 %v1725, 4294901760
      %1921 = vmatpush.msra.mxu0 %v1920
      %v1922 = vand.u32 %v1724, 4294901760
      %1923 = vmatpush.msra.mxu0 %v1922
      %v1924 = vand.u32 %v1723, 4294901760
      %1925 = vmatpush.msra.mxu0 %v1924
      %v1926 = vand.u32 %v1722, 4294901760
      %1927 = vmatpush.msra.mxu0 %v1926
      %v1928 = vand.u32 %v1721, 4294901760
      %1929 = vmatpush.msra.mxu0 %v1928
      %v1930 = vand.u32 %v1720, 4294901760
      %1931 = vmatpush.msra.mxu0 %v1930
      %v1932 = vand.u32 %v1719, 4294901760
      %1933 = vmatpush.msra.mxu0 %v1932
      %v1934 = vand.u32 %v1718, 4294901760
      %1935 = vmatpush.msra.mxu0 %v1934
      %v1936 = vand.u32 %v1717, 4294901760
      %1937 = vmatpush.msra.mxu0 %v1936
      %v1938 = vand.u32 %v1731, 4294901760
      %v1939 = vsub.f32 %v1731, %v1938
      %v1940 = vand.u32 %v1939, 4294901760
      %1941 = vmatmul.f32.gmra.mxu0 %v1940
      %v1942 = vpop.f32.mrf.mxu0
      %v1943 = vadd.f32 %v1904, %v1942
      %v1944 = vand.u32 %v1733, 4294901760
      %v1945 = vsub.f32 %v1733, %v1944
      %v1946 = vand.u32 %v1945, 4294901760
      %1947 = vmatmul.f32.gmra.mxu0 %v1946
      %v1948 = vpop.f32.mrf.mxu0
      %v1949 = vadd.f32 %v1909, %v1948
      %1950 = vdwg.mxu0
      %1951 = vmatpush.msra.mxu0 0.0
      %1952 = vmatpush.msra.mxu0 0.0
      %1953 = vmatpush.msra.mxu0 0.0
      %1954 = vmatpush.msra.mxu0 0.0
      %1955 = vmatpush.msra.mxu0 0.0
      %v1956 = vand.u32 %v1736, 4294901760
      %v1957 = vsub.f32 %v1736, %v1956
      %v1958 = vand.u32 %v1957, 4294901760
      %1959 = vmatpush.msra.mxu0 %v1958
      %v1960 = vand.u32 %v1726, 4294901760
      %v1961 = vsub.f32 %v1726, %v1960
      %v1962 = vand.u32 %v1961, 4294901760
      %1963 = vmatpush.msra.mxu0 %v1962
      %v1964 = vand.u32 %v1725, 4294901760
      %v1965 = vsub.f32 %v1725, %v1964
      %v1966 = vand.u32 %v1965, 4294901760
      %1967 = vmatpush.msra.mxu0 %v1966
      %v1968 = vand.u32 %v1724, 4294901760
      %v1969 = vsub.f32 %v1724, %v1968
      %v1970 = vand.u32 %v1969, 4294901760
      %1971 = vmatpush.msra.mxu0 %v1970
      %v1972 = vand.u32 %v1723, 4294901760
      %v1973 = vsub.f32 %v1723, %v1972
      %v1974 = vand.u32 %v1973, 4294901760
      %1975 = vmatpush.msra.mxu0 %v1974
      %v1976 = vand.u32 %v1722, 4294901760
      %v1977 = vsub.f32 %v1722, %v1976
      %v1978 = vand.u32 %v1977, 4294901760
      %1979 = vmatpush.msra.mxu0 %v1978
      %v1980 = vand.u32 %v1721, 4294901760
      %v1981 = vsub.f32 %v1721, %v1980
      %v1982 = vand.u32 %v1981, 4294901760
      %1983 = vmatpush.msra.mxu0 %v1982
      %v1984 = vand.u32 %v1720, 4294901760
      %v1985 = vsub.f32 %v1720, %v1984
      %v1986 = vand.u32 %v1985, 4294901760
      %1987 = vmatpush.msra.mxu0 %v1986
      %v1988 = vand.u32 %v1719, 4294901760
      %v1989 = vsub.f32 %v1719, %v1988
      %v1990 = vand.u32 %v1989, 4294901760
      %1991 = vmatpush.msra.mxu0 %v1990
      %v1992 = vand.u32 %v1718, 4294901760
      %v1993 = vsub.f32 %v1718, %v1992
      %v1994 = vand.u32 %v1993, 4294901760
      %1995 = vmatpush.msra.mxu0 %v1994
      %v1996 = vand.u32 %v1717, 4294901760
      %v1997 = vsub.f32 %v1717, %v1996
      %v1998 = vand.u32 %v1997, 4294901760
      %1999 = vmatpush.msra.mxu0 %v1998
      %v2000 = vand.u32 %v1731, 4294901760
      %2001 = vmatmul.f32.gmra.mxu0 %v2000
      %v2002 = vpop.f32.mrf.mxu0
      %v2003 = vadd.f32 %v1943, %v2002
      %v2004 = vand.u32 %v1733, 4294901760
      %2005 = vmatmul.f32.gmra.mxu0 %v2004
      %v2006 = vpop.f32.mrf.mxu0
      %v2007 = vadd.f32 %v1949, %v2006
      %2008 = vdwg.mxu0
      %2009 = vmatpush.msra.mxu0 0.0
      %2010 = vmatpush.msra.mxu0 0.0
      %2011 = vmatpush.msra.mxu0 0.0
      %2012 = vmatpush.msra.mxu0 0.0
      %2013 = vmatpush.msra.mxu0 0.0
      %v2014 = vand.u32 %v1736, 4294901760
      %2015 = vmatpush.msra.mxu0 %v2014
      %v2016 = vand.u32 %v1726, 4294901760
      %2017 = vmatpush.msra.mxu0 %v2016
      %v2018 = vand.u32 %v1725, 4294901760
      %2019 = vmatpush.msra.mxu0 %v2018
      %v2020 = vand.u32 %v1724, 4294901760
      %2021 = vmatpush.msra.mxu0 %v2020
      %v2022 = vand.u32 %v1723, 4294901760
      %2023 = vmatpush.msra.mxu0 %v2022
      %v2024 = vand.u32 %v1722, 4294901760
      %2025 = vmatpush.msra.mxu0 %v2024
      %v2026 = vand.u32 %v1721, 4294901760
      %2027 = vmatpush.msra.mxu0 %v2026
      %v2028 = vand.u32 %v1720, 4294901760
      %2029 = vmatpush.msra.mxu0 %v2028
      %v2030 = vand.u32 %v1719, 4294901760
      %2031 = vmatpush.msra.mxu0 %v2030
      %v2032 = vand.u32 %v1718, 4294901760
      %2033 = vmatpush.msra.mxu0 %v2032
      %v2034 = vand.u32 %v1717, 4294901760
      %2035 = vmatpush.msra.mxu0 %v2034
      %v2036 = vand.u32 %v1731, 4294901760
      %2037 = vmatmul.f32.gmra.mxu0 %v2036
      %v2038 = vpop.f32.mrf.mxu0
      %v2039 = vadd.f32 %v2003, %v2038
      %v2040 = vand.u32 %v1733, 4294901760
      %2041 = vmatmul.f32.gmra.mxu0 %v2040
      %v2042 = vpop.f32.mrf.mxu0
      %v2043 = vadd.f32 %v2007, %v2042
      %2044 = vdwg.mxu0
      %v2045 = vadd.f32 %v1710, %v2039
      %v2046 = vadd.f32 %v1714, %v2043
      %v2047 = vld [vmem:[%s4] sm:$0x1]
      %v2049 = vperm.slane %v2047, 0
      %v2051 = vadd.f32 %v2045, %v2049
      %v2052 = vadd.f32 %v2046, %v2049
      %v2053 = vmax.f32 %v2051, 0.0
      %v2054 = vmax.f32 %v2052, 0.0
      %v2055 = vld [vmem:[%s5] sm:$0xff]
      %v2056 = vld [vmem:[%s5 + $0x8] sm:$0xff]
      %v2057 = vld [vmem:[%s5 + $0x10] sm:$0xff]
      %v2058 = vld [vmem:[%s5 + $0x18] sm:$0xff]
      %v2059 = vld [vmem:[%s5 + $0x20] sm:$0xff]
      %v2060 = vld [vmem:[%s5 + $0x28] sm:$0xff]
      %v2061 = vld [vmem:[%s5 + $0x30] sm:$0xff]
      %v2062 = vld [vmem:[%s5 + $0x38] sm:$0xff]
      %v2063 = vld [vmem:[%s5 + $0x40] sm:$0xff]
      %vm2064 = vcmask 588800
      %v2066 = vsel %vm2064, %v2053, 0
      %v2069 = vsel %vm2064, %v2054, 0
      %2071 = vmatpush.msra.mxu0 0.0
      %2072 = vmatpush.msra.mxu0 0.0
      %2073 = vmatpush.msra.mxu0 0.0
      %2074 = vmatpush.msra.mxu0 0.0
      %2075 = vmatpush.msra.mxu0 0.0
      %2076 = vmatpush.msra.mxu0 0.0
      %2077 = vmatpush.msra.mxu0 0.0
      %v2078 = vand.u32 %v2063, 4294901760
      %2079 = vmatpush.msra.mxu0 %v2078
      %v2080 = vand.u32 %v2062, 4294901760
      %2081 = vmatpush.msra.mxu0 %v2080
      %v2082 = vand.u32 %v2061, 4294901760
      %2083 = vmatpush.msra.mxu0 %v2082
      %v2084 = vand.u32 %v2060, 4294901760
      %2085 = vmatpush.msra.mxu0 %v2084
      %v2086 = vand.u32 %v2059, 4294901760
      %2087 = vmatpush.msra.mxu0 %v2086
      %v2088 = vand.u32 %v2058, 4294901760
      %2089 = vmatpush.msra.mxu0 %v2088
      %v2090 = vand.u32 %v2057, 4294901760
      %2091 = vmatpush.msra.mxu0 %v2090
      %v2092 = vand.u32 %v2056, 4294901760
      %2093 = vmatpush.msra.mxu0 %v2092
      %v2094 = vand.u32 %v2055, 4294901760
      %2095 = vmatpush.msra.mxu0 %v2094
      %v2096 = vand.u32 %v2066, 4294901760
      %v2097 = vsub.f32 %v2066, %v2096
      %v2098 = vand.u32 %v2097, 4294901760
      %v2099 = vsub.f32 %v2097, %v2098
      %v2100 = vand.u32 %v2099, 4294901760
      %2101 = vmatmul.f32.gmra.mxu0 %v2100
      %v2102 = vpop.f32.mrf.mxu0
      %v2103 = vadd.f32 0.0, %v2102
      %v2104 = vand.u32 %v2069, 4294901760
      %v2105 = vsub.f32 %v2069, %v2104
      %v2106 = vand.u32 %v2105, 4294901760
      %v2107 = vsub.f32 %v2105, %v2106
      %v2108 = vand.u32 %v2107, 4294901760
      %2109 = vmatmul.f32.gmra.mxu0 %v2108
      %v2110 = vpop.f32.mrf.mxu0
      %v2111 = vadd.f32 0.0, %v2110
      %2112 = vdwg.mxu0
      %2113 = vmatpush.msra.mxu0 0.0
      %2114 = vmatpush.msra.mxu0 0.0
      %2115 = vmatpush.msra.mxu0 0.0
      %2116 = vmatpush.msra.mxu0 0.0
      %2117 = vmatpush.msra.mxu0 0.0
      %2118 = vmatpush.msra.mxu0 0.0
      %2119 = vmatpush.msra.mxu0 0.0
      %v2120 = vand.u32 %v2063, 4294901760
      %v2121 = vsub.f32 %v2063, %v2120
      %v2122 = vand.u32 %v2121, 4294901760
      %v2123 = vsub.f32 %v2121, %v2122
      %v2124 = vand.u32 %v2123, 4294901760
      %2125 = vmatpush.msra.mxu0 %v2124
      %v2126 = vand.u32 %v2062, 4294901760
      %v2127 = vsub.f32 %v2062, %v2126
      %v2128 = vand.u32 %v2127, 4294901760
      %v2129 = vsub.f32 %v2127, %v2128
      %v2130 = vand.u32 %v2129, 4294901760
      %2131 = vmatpush.msra.mxu0 %v2130
      %v2132 = vand.u32 %v2061, 4294901760
      %v2133 = vsub.f32 %v2061, %v2132
      %v2134 = vand.u32 %v2133, 4294901760
      %v2135 = vsub.f32 %v2133, %v2134
      %v2136 = vand.u32 %v2135, 4294901760
      %2137 = vmatpush.msra.mxu0 %v2136
      %v2138 = vand.u32 %v2060, 4294901760
      %v2139 = vsub.f32 %v2060, %v2138
      %v2140 = vand.u32 %v2139, 4294901760
      %v2141 = vsub.f32 %v2139, %v2140
      %v2142 = vand.u32 %v2141, 4294901760
      %2143 = vmatpush.msra.mxu0 %v2142
      %v2144 = vand.u32 %v2059, 4294901760
      %v2145 = vsub.f32 %v2059, %v2144
      %v2146 = vand.u32 %v2145, 4294901760
      %v2147 = vsub.f32 %v2145, %v2146
      %v2148 = vand.u32 %v2147, 4294901760
      %2149 = vmatpush.msra.mxu0 %v2148
      %v2150 = vand.u32 %v2058, 4294901760
      %v2151 = vsub.f32 %v2058, %v2150
      %v2152 = vand.u32 %v2151, 4294901760
      %v2153 = vsub.f32 %v2151, %v2152
      %v2154 = vand.u32 %v2153, 4294901760
      %2155 = vmatpush.msra.mxu0 %v2154
      %v2156 = vand.u32 %v2057, 4294901760
      %v2157 = vsub.f32 %v2057, %v2156
      %v2158 = vand.u32 %v2157, 4294901760
      %v2159 = vsub.f32 %v2157, %v2158
      %v2160 = vand.u32 %v2159, 4294901760
      %2161 = vmatpush.msra.mxu0 %v2160
      %v2162 = vand.u32 %v2056, 4294901760
      %v2163 = vsub.f32 %v2056, %v2162
      %v2164 = vand.u32 %v2163, 4294901760
      %v2165 = vsub.f32 %v2163, %v2164
      %v2166 = vand.u32 %v2165, 4294901760
      %2167 = vmatpush.msra.mxu0 %v2166
      %v2168 = vand.u32 %v2055, 4294901760
      %v2169 = vsub.f32 %v2055, %v2168
      %v2170 = vand.u32 %v2169, 4294901760
      %v2171 = vsub.f32 %v2169, %v2170
      %v2172 = vand.u32 %v2171, 4294901760
      %2173 = vmatpush.msra.mxu0 %v2172
      %v2174 = vand.u32 %v2066, 4294901760
      %2175 = vmatmul.f32.gmra.mxu0 %v2174
      %v2176 = vpop.f32.mrf.mxu0
      %v2177 = vadd.f32 %v2103, %v2176
      %v2178 = vand.u32 %v2069, 4294901760
      %2179 = vmatmul.f32.gmra.mxu0 %v2178
      %v2180 = vpop.f32.mrf.mxu0
      %v2181 = vadd.f32 %v2111, %v2180
      %2182 = vdwg.mxu0
      %2183 = vmatpush.msra.mxu0 0.0
      %2184 = vmatpush.msra.mxu0 0.0
      %2185 = vmatpush.msra.mxu0 0.0
      %2186 = vmatpush.msra.mxu0 0.0
      %2187 = vmatpush.msra.mxu0 0.0
      %2188 = vmatpush.msra.mxu0 0.0
      %2189 = vmatpush.msra.mxu0 0.0
      %v2190 = vand.u32 %v2063, 4294901760
      %v2191 = vsub.f32 %v2063, %v2190
      %2192 = vmatpush.msra.mxu0 %v2191
      %v2193 = vand.u32 %v2062, 4294901760
      %v2194 = vsub.f32 %v2062, %v2193
      %2195 = vmatpush.msra.mxu0 %v2194
      %v2196 = vand.u32 %v2061, 4294901760
      %v2197 = vsub.f32 %v2061, %v2196
      %2198 = vmatpush.msra.mxu0 %v2197
      %v2199 = vand.u32 %v2060, 4294901760
      %v2200 = vsub.f32 %v2060, %v2199
      %2201 = vmatpush.msra.mxu0 %v2200
      %v2202 = vand.u32 %v2059, 4294901760
      %v2203 = vsub.f32 %v2059, %v2202
      %2204 = vmatpush.msra.mxu0 %v2203
      %v2205 = vand.u32 %v2058, 4294901760
      %v2206 = vsub.f32 %v2058, %v2205
      %2207 = vmatpush.msra.mxu0 %v2206
      %v2208 = vand.u32 %v2057, 4294901760
      %v2209 = vsub.f32 %v2057, %v2208
      %2210 = vmatpush.msra.mxu0 %v2209
      %v2211 = vand.u32 %v2056, 4294901760
      %v2212 = vsub.f32 %v2056, %v2211
      %2213 = vmatpush.msra.mxu0 %v2212
      %v2214 = vand.u32 %v2055, 4294901760
      %v2215 = vsub.f32 %v2055, %v2214
      %2216 = vmatpush.msra.mxu0 %v2215
      %v2217 = vand.u32 %v2066, 4294901760
      %v2218 = vsub.f32 %v2066, %v2217
      %2219 = vmatmul.f32.gmra.mxu0 %v2218
      %v2220 = vpop.f32.mrf.mxu0
      %v2221 = vadd.f32 %v2177, %v2220
      %v2222 = vand.u32 %v2069, 4294901760
      %v2223 = vsub.f32 %v2069, %v2222
      %2224 = vmatmul.f32.gmra.mxu0 %v2223
      %v2225 = vpop.f32.mrf.mxu0
      %v2226 = vadd.f32 %v2181, %v2225
      %2227 = vdwg.mxu0
      %2228 = vmatpush.msra.mxu0 0.0
      %2229 = vmatpush.msra.mxu0 0.0
      %2230 = vmatpush.msra.mxu0 0.0
      %2231 = vmatpush.msra.mxu0 0.0
      %2232 = vmatpush.msra.mxu0 0.0
      %2233 = vmatpush.msra.mxu0 0.0
      %2234 = vmatpush.msra.mxu0 0.0
      %v2235 = vand.u32 %v2063, 4294901760
      %2236 = vmatpush.msra.mxu0 %v2235
      %v2237 = vand.u32 %v2062, 4294901760
      %2238 = vmatpush.msra.mxu0 %v2237
      %v2239 = vand.u32 %v2061, 4294901760
      %2240 = vmatpush.msra.mxu0 %v2239
      %v2241 = vand.u32 %v2060, 4294901760
      %2242 = vmatpush.msra.mxu0 %v2241
      %v2243 = vand.u32 %v2059, 4294901760
      %2244 = vmatpush.msra.mxu0 %v2243
      %v2245 = vand.u32 %v2058, 4294901760
      %2246 = vmatpush.msra.mxu0 %v2245
      %v2247 = vand.u32 %v2057, 4294901760
      %2248 = vmatpush.msra.mxu0 %v2247
      %v2249 = vand.u32 %v2056, 4294901760
      %2250 = vmatpush.msra.mxu0 %v2249
      %v2251 = vand.u32 %v2055, 4294901760
      %2252 = vmatpush.msra.mxu0 %v2251
      %v2253 = vand.u32 %v2066, 4294901760
      %v2254 = vsub.f32 %v2066, %v2253
      %v2255 = vand.u32 %v2254, 4294901760
      %2256 = vmatmul.f32.gmra.mxu0 %v2255
      %v2257 = vpop.f32.mrf.mxu0
      %v2258 = vadd.f32 %v2221, %v2257
      %v2259 = vand.u32 %v2069, 4294901760
      %v2260 = vsub.f32 %v2069, %v2259
      %v2261 = vand.u32 %v2260, 4294901760
      %2262 = vmatmul.f32.gmra.mxu0 %v2261
      %v2263 = vpop.f32.mrf.mxu0
      %v2264 = vadd.f32 %v2226, %v2263
      %2265 = vdwg.mxu0
      %2266 = vmatpush.msra.mxu0 0.0
      %2267 = vmatpush.msra.mxu0 0.0
      %2268 = vmatpush.msra.mxu0 0.0
      %2269 = vmatpush.msra.mxu0 0.0
      %2270 = vmatpush.msra.mxu0 0.0
      %2271 = vmatpush.msra.mxu0 0.0
      %2272 = vmatpush.msra.mxu0 0.0
      %v2273 = vand.u32 %v2063, 4294901760
      %v2274 = vsub.f32 %v2063, %v2273
      %v2275 = vand.u32 %v2274, 4294901760
      %2276 = vmatpush.msra.mxu0 %v2275
      %v2277 = vand.u32 %v2062, 4294901760
      %v2278 = vsub.f32 %v2062, %v2277
      %v2279 = vand.u32 %v2278, 4294901760
      %2280 = vmatpush.msra.mxu0 %v2279
      %v2281 = vand.u32 %v2061, 4294901760
      %v2282 = vsub.f32 %v2061, %v2281
      %v2283 = vand.u32 %v2282, 4294901760
      %2284 = vmatpush.msra.mxu0 %v2283
      %v2285 = vand.u32 %v2060, 4294901760
      %v2286 = vsub.f32 %v2060, %v2285
      %v2287 = vand.u32 %v2286, 4294901760
      %2288 = vmatpush.msra.mxu0 %v2287
      %v2289 = vand.u32 %v2059, 4294901760
      %v2290 = vsub.f32 %v2059, %v2289
      %v2291 = vand.u32 %v2290, 4294901760
      %2292 = vmatpush.msra.mxu0 %v2291
      %v2293 = vand.u32 %v2058, 4294901760
      %v2294 = vsub.f32 %v2058, %v2293
      %v2295 = vand.u32 %v2294, 4294901760
      %2296 = vmatpush.msra.mxu0 %v2295
      %v2297 = vand.u32 %v2057, 4294901760
      %v2298 = vsub.f32 %v2057, %v2297
      %v2299 = vand.u32 %v2298, 4294901760
      %2300 = vmatpush.msra.mxu0 %v2299
      %v2301 = vand.u32 %v2056, 4294901760
      %v2302 = vsub.f32 %v2056, %v2301
      %v2303 = vand.u32 %v2302, 4294901760
      %2304 = vmatpush.msra.mxu0 %v2303
      %v2305 = vand.u32 %v2055, 4294901760
      %v2306 = vsub.f32 %v2055, %v2305
      %v2307 = vand.u32 %v2306, 4294901760
      %2308 = vmatpush.msra.mxu0 %v2307
      %v2309 = vand.u32 %v2066, 4294901760
      %2310 = vmatmul.f32.gmra.mxu0 %v2309
      %v2311 = vpop.f32.mrf.mxu0
      %v2312 = vadd.f32 %v2258, %v2311
      %v2313 = vand.u32 %v2069, 4294901760
      %2314 = vmatmul.f32.gmra.mxu0 %v2313
      %v2315 = vpop.f32.mrf.mxu0
      %v2316 = vadd.f32 %v2264, %v2315
      %2317 = vdwg.mxu0
      %2318 = vmatpush.msra.mxu0 0.0
      %2319 = vmatpush.msra.mxu0 0.0
      %2320 = vmatpush.msra.mxu0 0.0
      %2321 = vmatpush.msra.mxu0 0.0
      %2322 = vmatpush.msra.mxu0 0.0
      %2323 = vmatpush.msra.mxu0 0.0
      %2324 = vmatpush.msra.mxu0 0.0
      %v2325 = vand.u32 %v2063, 4294901760
      %2326 = vmatpush.msra.mxu0 %v2325
      %v2327 = vand.u32 %v2062, 4294901760
      %2328 = vmatpush.msra.mxu0 %v2327
      %v2329 = vand.u32 %v2061, 4294901760
      %2330 = vmatpush.msra.mxu0 %v2329
      %v2331 = vand.u32 %v2060, 4294901760
      %2332 = vmatpush.msra.mxu0 %v2331
      %v2333 = vand.u32 %v2059, 4294901760
      %2334 = vmatpush.msra.mxu0 %v2333
      %v2335 = vand.u32 %v2058, 4294901760
      %2336 = vmatpush.msra.mxu0 %v2335
      %v2337 = vand.u32 %v2057, 4294901760
      %2338 = vmatpush.msra.mxu0 %v2337
      %v2339 = vand.u32 %v2056, 4294901760
      %2340 = vmatpush.msra.mxu0 %v2339
      %v2341 = vand.u32 %v2055, 4294901760
      %2342 = vmatpush.msra.mxu0 %v2341
      %v2343 = vand.u32 %v2066, 4294901760
      %2344 = vmatmul.f32.gmra.mxu0 %v2343
      %v2345 = vpop.f32.mrf.mxu0
      %v2346 = vadd.f32 %v2312, %v2345
      %v2347 = vand.u32 %v2069, 4294901760
      %2348 = vmatmul.f32.gmra.mxu0 %v2347
      %v2349 = vpop.f32.mrf.mxu0
      %v2350 = vadd.f32 %v2316, %v2349
      %2351 = vdwg.mxu0
      %s2352 = scalar_lea.vmem %s5, 72
      %v2353 = vld [vmem:[%s2352] sm:$0xff]
      %v2354 = vld [vmem:[%s2352 + $0x8] sm:$0xff]
      %v2355 = vld [vmem:[%s2352 + $0x10] sm:$0xff]
      %v2356 = vld [vmem:[%s2352 + $0x18] sm:$0xff]
      %v2357 = vld [vmem:[%s2352 + $0x20] sm:$0xff]
      %v2358 = vld [vmem:[%s2352 + $0x28] sm:$0xff]
      %v2359 = vld [vmem:[%s2352 + $0x30] sm:$0xff]
      %v2360 = vld [vmem:[%s2352 + $0x38] sm:$0xff]
      %v2361 = vld [vmem:[%s2352 + $0x40] sm:$0xff]
      %2362 = vmatpush.msra.mxu0 0.0
      %2363 = vmatpush.msra.mxu0 0.0
      %2364 = vmatpush.msra.mxu0 0.0
      %2365 = vmatpush.msra.mxu0 0.0
      %2366 = vmatpush.msra.mxu0 0.0
      %2367 = vmatpush.msra.mxu0 0.0
      %2368 = vmatpush.msra.mxu0 0.0
      %v2369 = vand.u32 %v2361, 4294901760
      %2370 = vmatpush.msra.mxu0 %v2369
      %v2371 = vand.u32 %v2360, 4294901760
      %2372 = vmatpush.msra.mxu0 %v2371
      %v2373 = vand.u32 %v2359, 4294901760
      %2374 = vmatpush.msra.mxu0 %v2373
      %v2375 = vand.u32 %v2358, 4294901760
      %2376 = vmatpush.msra.mxu0 %v2375
      %v2377 = vand.u32 %v2357, 4294901760
      %2378 = vmatpush.msra.mxu0 %v2377
      %v2379 = vand.u32 %v2356, 4294901760
      %2380 = vmatpush.msra.mxu0 %v2379
      %v2381 = vand.u32 %v2355, 4294901760
      %2382 = vmatpush.msra.mxu0 %v2381
      %v2383 = vand.u32 %v2354, 4294901760
      %2384 = vmatpush.msra.mxu0 %v2383
      %v2385 = vand.u32 %v2353, 4294901760
      %2386 = vmatpush.msra.mxu0 %v2385
      %v2387 = vand.u32 %v2066, 4294901760
      %v2388 = vsub.f32 %v2066, %v2387
      %v2389 = vand.u32 %v2388, 4294901760
      %v2390 = vsub.f32 %v2388, %v2389
      %v2391 = vand.u32 %v2390, 4294901760
      %2392 = vmatmul.f32.gmra.mxu0 %v2391
      %v2393 = vpop.f32.mrf.mxu0
      %v2394 = vadd.f32 0.0, %v2393
      %v2395 = vand.u32 %v2069, 4294901760
      %v2396 = vsub.f32 %v2069, %v2395
      %v2397 = vand.u32 %v2396, 4294901760
      %v2398 = vsub.f32 %v2396, %v2397
      %v2399 = vand.u32 %v2398, 4294901760
      %2400 = vmatmul.f32.gmra.mxu0 %v2399
      %v2401 = vpop.f32.mrf.mxu0
      %v2402 = vadd.f32 0.0, %v2401
      %2403 = vdwg.mxu0
      %2404 = vmatpush.msra.mxu0 0.0
      %2405 = vmatpush.msra.mxu0 0.0
      %2406 = vmatpush.msra.mxu0 0.0
      %2407 = vmatpush.msra.mxu0 0.0
      %2408 = vmatpush.msra.mxu0 0.0
      %2409 = vmatpush.msra.mxu0 0.0
      %2410 = vmatpush.msra.mxu0 0.0
      %v2411 = vand.u32 %v2361, 4294901760
      %v2412 = vsub.f32 %v2361, %v2411
      %v2413 = vand.u32 %v2412, 4294901760
      %v2414 = vsub.f32 %v2412, %v2413
      %v2415 = vand.u32 %v2414, 4294901760
      %2416 = vmatpush.msra.mxu0 %v2415
      %v2417 = vand.u32 %v2360, 4294901760
      %v2418 = vsub.f32 %v2360, %v2417
      %v2419 = vand.u32 %v2418, 4294901760
      %v2420 = vsub.f32 %v2418, %v2419
      %v2421 = vand.u32 %v2420, 4294901760
      %2422 = vmatpush.msra.mxu0 %v2421
      %v2423 = vand.u32 %v2359, 4294901760
      %v2424 = vsub.f32 %v2359, %v2423
      %v2425 = vand.u32 %v2424, 4294901760
      %v2426 = vsub.f32 %v2424, %v2425
      %v2427 = vand.u32 %v2426, 4294901760
      %2428 = vmatpush.msra.mxu0 %v2427
      %v2429 = vand.u32 %v2358, 4294901760
      %v2430 = vsub.f32 %v2358, %v2429
      %v2431 = vand.u32 %v2430, 4294901760
      %v2432 = vsub.f32 %v2430, %v2431
      %v2433 = vand.u32 %v2432, 4294901760
      %2434 = vmatpush.msra.mxu0 %v2433
      %v2435 = vand.u32 %v2357, 4294901760
      %v2436 = vsub.f32 %v2357, %v2435
      %v2437 = vand.u32 %v2436, 4294901760
      %v2438 = vsub.f32 %v2436, %v2437
      %v2439 = vand.u32 %v2438, 4294901760
      %2440 = vmatpush.msra.mxu0 %v2439
      %v2441 = vand.u32 %v2356, 4294901760
      %v2442 = vsub.f32 %v2356, %v2441
      %v2443 = vand.u32 %v2442, 4294901760
      %v2444 = vsub.f32 %v2442, %v2443
      %v2445 = vand.u32 %v2444, 4294901760
      %2446 = vmatpush.msra.mxu0 %v2445
      %v2447 = vand.u32 %v2355, 4294901760
      %v2448 = vsub.f32 %v2355, %v2447
      %v2449 = vand.u32 %v2448, 4294901760
      %v2450 = vsub.f32 %v2448, %v2449
      %v2451 = vand.u32 %v2450, 4294901760
      %2452 = vmatpush.msra.mxu0 %v2451
      %v2453 = vand.u32 %v2354, 4294901760
      %v2454 = vsub.f32 %v2354, %v2453
      %v2455 = vand.u32 %v2454, 4294901760
      %v2456 = vsub.f32 %v2454, %v2455
      %v2457 = vand.u32 %v2456, 4294901760
      %2458 = vmatpush.msra.mxu0 %v2457
      %v2459 = vand.u32 %v2353, 4294901760
      %v2460 = vsub.f32 %v2353, %v2459
      %v2461 = vand.u32 %v2460, 4294901760
      %v2462 = vsub.f32 %v2460, %v2461
      %v2463 = vand.u32 %v2462, 4294901760
      %2464 = vmatpush.msra.mxu0 %v2463
      %v2465 = vand.u32 %v2066, 4294901760
      %2466 = vmatmul.f32.gmra.mxu0 %v2465
      %v2467 = vpop.f32.mrf.mxu0
      %v2468 = vadd.f32 %v2394, %v2467
      %v2469 = vand.u32 %v2069, 4294901760
      %2470 = vmatmul.f32.gmra.mxu0 %v2469
      %v2471 = vpop.f32.mrf.mxu0
      %v2472 = vadd.f32 %v2402, %v2471
      %2473 = vdwg.mxu0
      %2474 = vmatpush.msra.mxu0 0.0
      %2475 = vmatpush.msra.mxu0 0.0
      %2476 = vmatpush.msra.mxu0 0.0
      %2477 = vmatpush.msra.mxu0 0.0
      %2478 = vmatpush.msra.mxu0 0.0
      %2479 = vmatpush.msra.mxu0 0.0
      %2480 = vmatpush.msra.mxu0 0.0
      %v2481 = vand.u32 %v2361, 4294901760
      %v2482 = vsub.f32 %v2361, %v2481
      %2483 = vmatpush.msra.mxu0 %v2482
      %v2484 = vand.u32 %v2360, 4294901760
      %v2485 = vsub.f32 %v2360, %v2484
      %2486 = vmatpush.msra.mxu0 %v2485
      %v2487 = vand.u32 %v2359, 4294901760
      %v2488 = vsub.f32 %v2359, %v2487
      %2489 = vmatpush.msra.mxu0 %v2488
      %v2490 = vand.u32 %v2358, 4294901760
      %v2491 = vsub.f32 %v2358, %v2490
      %2492 = vmatpush.msra.mxu0 %v2491
      %v2493 = vand.u32 %v2357, 4294901760
      %v2494 = vsub.f32 %v2357, %v2493
      %2495 = vmatpush.msra.mxu0 %v2494
      %v2496 = vand.u32 %v2356, 4294901760
      %v2497 = vsub.f32 %v2356, %v2496
      %2498 = vmatpush.msra.mxu0 %v2497
      %v2499 = vand.u32 %v2355, 4294901760
      %v2500 = vsub.f32 %v2355, %v2499
      %2501 = vmatpush.msra.mxu0 %v2500
      %v2502 = vand.u32 %v2354, 4294901760
      %v2503 = vsub.f32 %v2354, %v2502
      %2504 = vmatpush.msra.mxu0 %v2503
      %v2505 = vand.u32 %v2353, 4294901760
      %v2506 = vsub.f32 %v2353, %v2505
      %2507 = vmatpush.msra.mxu0 %v2506
      %v2508 = vand.u32 %v2066, 4294901760
      %v2509 = vsub.f32 %v2066, %v2508
      %2510 = vmatmul.f32.gmra.mxu0 %v2509
      %v2511 = vpop.f32.mrf.mxu0
      %v2512 = vadd.f32 %v2468, %v2511
      %v2513 = vand.u32 %v2069, 4294901760
      %v2514 = vsub.f32 %v2069, %v2513
      %2515 = vmatmul.f32.gmra.mxu0 %v2514
      %v2516 = vpop.f32.mrf.mxu0
      %v2517 = vadd.f32 %v2472, %v2516
      %2518 = vdwg.mxu0
      %2519 = vmatpush.msra.mxu0 0.0
      %2520 = vmatpush.msra.mxu0 0.0
      %2521 = vmatpush.msra.mxu0 0.0
      %2522 = vmatpush.msra.mxu0 0.0
      %2523 = vmatpush.msra.mxu0 0.0
      %2524 = vmatpush.msra.mxu0 0.0
      %2525 = vmatpush.msra.mxu0 0.0
      %v2526 = vand.u32 %v2361, 4294901760
      %2527 = vmatpush.msra.mxu0 %v2526
      %v2528 = vand.u32 %v2360, 4294901760
      %2529 = vmatpush.msra.mxu0 %v2528
      %v2530 = vand.u32 %v2359, 4294901760
      %2531 = vmatpush.msra.mxu0 %v2530
      %v2532 = vand.u32 %v2358, 4294901760
      %2533 = vmatpush.msra.mxu0 %v2532
      %v2534 = vand.u32 %v2357, 4294901760
      %2535 = vmatpush.msra.mxu0 %v2534
      %v2536 = vand.u32 %v2356, 4294901760
      %2537 = vmatpush.msra.mxu0 %v2536
      %v2538 = vand.u32 %v2355, 4294901760
      %2539 = vmatpush.msra.mxu0 %v2538
      %v2540 = vand.u32 %v2354, 4294901760
      %2541 = vmatpush.msra.mxu0 %v2540
      %v2542 = vand.u32 %v2353, 4294901760
      %2543 = vmatpush.msra.mxu0 %v2542
      %v2544 = vand.u32 %v2066, 4294901760
      %v2545 = vsub.f32 %v2066, %v2544
      %v2546 = vand.u32 %v2545, 4294901760
      %2547 = vmatmul.f32.gmra.mxu0 %v2546
      %v2548 = vpop.f32.mrf.mxu0
      %v2549 = vadd.f32 %v2512, %v2548
      %v2550 = vand.u32 %v2069, 4294901760
      %v2551 = vsub.f32 %v2069, %v2550
      %v2552 = vand.u32 %v2551, 4294901760
      %2553 = vmatmul.f32.gmra.mxu0 %v2552
      %v2554 = vpop.f32.mrf.mxu0
      %v2555 = vadd.f32 %v2517, %v2554
      %2556 = vdwg.mxu0
      %2557 = vmatpush.msra.mxu0 0.0
      %2558 = vmatpush.msra.mxu0 0.0
      %2559 = vmatpush.msra.mxu0 0.0
      %2560 = vmatpush.msra.mxu0 0.0
      %2561 = vmatpush.msra.mxu0 0.0
      %2562 = vmatpush.msra.mxu0 0.0
      %2563 = vmatpush.msra.mxu0 0.0
      %v2564 = vand.u32 %v2361, 4294901760
      %v2565 = vsub.f32 %v2361, %v2564
      %v2566 = vand.u32 %v2565, 4294901760
      %2567 = vmatpush.msra.mxu0 %v2566
      %v2568 = vand.u32 %v2360, 4294901760
      %v2569 = vsub.f32 %v2360, %v2568
      %v2570 = vand.u32 %v2569, 4294901760
      %2571 = vmatpush.msra.mxu0 %v2570
      %v2572 = vand.u32 %v2359, 4294901760
      %v2573 = vsub.f32 %v2359, %v2572
      %v2574 = vand.u32 %v2573, 4294901760
      %2575 = vmatpush.msra.mxu0 %v2574
      %v2576 = vand.u32 %v2358, 4294901760
      %v2577 = vsub.f32 %v2358, %v2576
      %v2578 = vand.u32 %v2577, 4294901760
      %2579 = vmatpush.msra.mxu0 %v2578
      %v2580 = vand.u32 %v2357, 4294901760
      %v2581 = vsub.f32 %v2357, %v2580
      %v2582 = vand.u32 %v2581, 4294901760
      %2583 = vmatpush.msra.mxu0 %v2582
      %v2584 = vand.u32 %v2356, 4294901760
      %v2585 = vsub.f32 %v2356, %v2584
      %v2586 = vand.u32 %v2585, 4294901760
      %2587 = vmatpush.msra.mxu0 %v2586
      %v2588 = vand.u32 %v2355, 4294901760
      %v2589 = vsub.f32 %v2355, %v2588
      %v2590 = vand.u32 %v2589, 4294901760
      %2591 = vmatpush.msra.mxu0 %v2590
      %v2592 = vand.u32 %v2354, 4294901760
      %v2593 = vsub.f32 %v2354, %v2592
      %v2594 = vand.u32 %v2593, 4294901760
      %2595 = vmatpush.msra.mxu0 %v2594
      %v2596 = vand.u32 %v2353, 4294901760
      %v2597 = vsub.f32 %v2353, %v2596
      %v2598 = vand.u32 %v2597, 4294901760
      %2599 = vmatpush.msra.mxu0 %v2598
      %v2600 = vand.u32 %v2066, 4294901760
      %2601 = vmatmul.f32.gmra.mxu0 %v2600
      %v2602 = vpop.f32.mrf.mxu0
      %v2603 = vadd.f32 %v2549, %v2602
      %v2604 = vand.u32 %v2069, 4294901760
      %2605 = vmatmul.f32.gmra.mxu0 %v2604
      %v2606 = vpop.f32.mrf.mxu0
      %v2607 = vadd.f32 %v2555, %v2606
      %2608 = vdwg.mxu0
      %2609 = vmatpush.msra.mxu0 0.0
      %2610 = vmatpush.msra.mxu0 0.0
      %2611 = vmatpush.msra.mxu0 0.0
      %2612 = vmatpush.msra.mxu0 0.0
      %2613 = vmatpush.msra.mxu0 0.0
      %2614 = vmatpush.msra.mxu0 0.0
      %2615 = vmatpush.msra.mxu0 0.0
      %v2616 = vand.u32 %v2361, 4294901760
      %2617 = vmatpush.msra.mxu0 %v2616
      %v2618 = vand.u32 %v2360, 4294901760
      %2619 = vmatpush.msra.mxu0 %v2618
      %v2620 = vand.u32 %v2359, 4294901760
      %2621 = vmatpush.msra.mxu0 %v2620
      %v2622 = vand.u32 %v2358, 4294901760
      %2623 = vmatpush.msra.mxu0 %v2622
      %v2624 = vand.u32 %v2357, 4294901760
      %2625 = vmatpush.msra.mxu0 %v2624
      %v2626 = vand.u32 %v2356, 4294901760
      %2627 = vmatpush.msra.mxu0 %v2626
      %v2628 = vand.u32 %v2355, 4294901760
      %2629 = vmatpush.msra.mxu0 %v2628
      %v2630 = vand.u32 %v2354, 4294901760
      %2631 = vmatpush.msra.mxu0 %v2630
      %v2632 = vand.u32 %v2353, 4294901760
      %2633 = vmatpush.msra.mxu0 %v2632
      %v2634 = vand.u32 %v2066, 4294901760
      %2635 = vmatmul.f32.gmra.mxu0 %v2634
      %v2636 = vpop.f32.mrf.mxu0
      %v2637 = vadd.f32 %v2603, %v2636
      %v2638 = vand.u32 %v2069, 4294901760
      %2639 = vmatmul.f32.gmra.mxu0 %v2638
      %v2640 = vpop.f32.mrf.mxu0
      %v2641 = vadd.f32 %v2607, %v2640
      %2642 = vdwg.mxu0
      %v2643 = vmax.f32 %v2346, %v2637
      %v2644 = vmax.f32 %v2350, %v2641
      %v2645 = vld [vmem:[%s6] sm:$0x3f]
      %vm2646 = vcmask 97280
      %v2648 = vsel %vm2646, %v2645, 0
      %v2651 = vsel %vm1091, %v2644, 0
      %2653 = vmatpush.msra.mxu0 0.0
      %2654 = vmatpush.msra.mxu0 0.0
      %2655 = vmatpush.msra.mxu0 0.0
      %2656 = vmatpush.msra.mxu0 0.0
      %2657 = vmatpush.msra.mxu0 0.0
      %2658 = vmatpush.msra.mxu0 0.0
      %2659 = vmatpush.msra.mxu0 0.0
      %2660 = vmatpush.msra.mxu0 0.0
      %2661 = vmatpush.msra.mxu0 0.0
      %2662 = vmatpush.msra.mxu0 0.0
      %2663 = vmatpush.msra.mxu0 0.0
      %2664 = vmatpush.msra.mxu0 0.0
      %2665 = vmatpush.msra.mxu0 0.0
      %2666 = vmatpush.msra.mxu0 0.0
      %v2667 = vand.u32 %v2651, 4294901760
      %2668 = vmatpush.msra.mxu0 %v2667
      %v2669 = vand.u32 %v2643, 4294901760
      %2670 = vmatpush.msra.mxu0 %v2669
      %v2671 = vand.u32 %v2648, 4294901760
      %v2672 = vsub.f32 %v2648, %v2671
      %v2673 = vand.u32 %v2672, 4294901760
      %v2674 = vsub.f32 %v2672, %v2673
      %v2675 = vand.u32 %v2674, 4294901760
      %2676 = vmatmul.f32.gmra.mxu0 %v2675
      %v2677 = vpop.f32.mrf.mxu0
      %v2678 = vadd.f32 0.0, %v2677
      %2679 = vdwg.mxu0
      %2680 = vmatpush.msra.mxu0 0.0
      %2681 = vmatpush.msra.mxu0 0.0
      %2682 = vmatpush.msra.mxu0 0.0
      %2683 = vmatpush.msra.mxu0 0.0
      %2684 = vmatpush.msra.mxu0 0.0
      %2685 = vmatpush.msra.mxu0 0.0
      %2686 = vmatpush.msra.mxu0 0.0
      %2687 = vmatpush.msra.mxu0 0.0
      %2688 = vmatpush.msra.mxu0 0.0
      %2689 = vmatpush.msra.mxu0 0.0
      %2690 = vmatpush.msra.mxu0 0.0
      %2691 = vmatpush.msra.mxu0 0.0
      %2692 = vmatpush.msra.mxu0 0.0
      %2693 = vmatpush.msra.mxu0 0.0
      %v2694 = vand.u32 %v2651, 4294901760
      %v2695 = vsub.f32 %v2651, %v2694
      %v2696 = vand.u32 %v2695, 4294901760
      %v2697 = vsub.f32 %v2695, %v2696
      %v2698 = vand.u32 %v2697, 4294901760
      %2699 = vmatpush.msra.mxu0 %v2698
      %v2700 = vand.u32 %v2643, 4294901760
      %v2701 = vsub.f32 %v2643, %v2700
      %v2702 = vand.u32 %v2701, 4294901760
      %v2703 = vsub.f32 %v2701, %v2702
      %v2704 = vand.u32 %v2703, 4294901760
      %2705 = vmatpush.msra.mxu0 %v2704
      %v2706 = vand.u32 %v2648, 4294901760
      %2707 = vmatmul.f32.gmra.mxu0 %v2706
      %v2708 = vpop.f32.mrf.mxu0
      %v2709 = vadd.f32 %v2678, %v2708
      %2710 = vdwg.mxu0
      %2711 = vmatpush.msra.mxu0 0.0
      %2712 = vmatpush.msra.mxu0 0.0
      %2713 = vmatpush.msra.mxu0 0.0
      %2714 = vmatpush.msra.mxu0 0.0
      %2715 = vmatpush.msra.mxu0 0.0
      %2716 = vmatpush.msra.mxu0 0.0
      %2717 = vmatpush.msra.mxu0 0.0
      %2718 = vmatpush.msra.mxu0 0.0
      %2719 = vmatpush.msra.mxu0 0.0
      %2720 = vmatpush.msra.mxu0 0.0
      %2721 = vmatpush.msra.mxu0 0.0
      %2722 = vmatpush.msra.mxu0 0.0
      %2723 = vmatpush.msra.mxu0 0.0
      %2724 = vmatpush.msra.mxu0 0.0
      %v2725 = vand.u32 %v2651, 4294901760
      %v2726 = vsub.f32 %v2651, %v2725
      %2727 = vmatpush.msra.mxu0 %v2726
      %v2728 = vand.u32 %v2643, 4294901760
      %v2729 = vsub.f32 %v2643, %v2728
      %2730 = vmatpush.msra.mxu0 %v2729
      %v2731 = vand.u32 %v2648, 4294901760
      %v2732 = vsub.f32 %v2648, %v2731
      %2733 = vmatmul.f32.gmra.mxu0 %v2732
      %v2734 = vpop.f32.mrf.mxu0
      %v2735 = vadd.f32 %v2709, %v2734
      %2736 = vdwg.mxu0
      %2737 = vmatpush.msra.mxu0 0.0
      %2738 = vmatpush.msra.mxu0 0.0
      %2739 = vmatpush.msra.mxu0 0.0
      %2740 = vmatpush.msra.mxu0 0.0
      %2741 = vmatpush.msra.mxu0 0.0
      %2742 = vmatpush.msra.mxu0 0.0
      %2743 = vmatpush.msra.mxu0 0.0
      %2744 = vmatpush.msra.mxu0 0.0
      %2745 = vmatpush.msra.mxu0 0.0
      %2746 = vmatpush.msra.mxu0 0.0
      %2747 = vmatpush.msra.mxu0 0.0
      %2748 = vmatpush.msra.mxu0 0.0
      %2749 = vmatpush.msra.mxu0 0.0
      %2750 = vmatpush.msra.mxu0 0.0
      %v2751 = vand.u32 %v2651, 4294901760
      %2752 = vmatpush.msra.mxu0 %v2751
      %v2753 = vand.u32 %v2643, 4294901760
      %2754 = vmatpush.msra.mxu0 %v2753
      %v2755 = vand.u32 %v2648, 4294901760
      %v2756 = vsub.f32 %v2648, %v2755
      %v2757 = vand.u32 %v2756, 4294901760
      %2758 = vmatmul.f32.gmra.mxu0 %v2757
      %v2759 = vpop.f32.mrf.mxu0
      %v2760 = vadd.f32 %v2735, %v2759
      %2761 = vdwg.mxu0
      %2762 = vmatpush.msra.mxu0 0.0
      %2763 = vmatpush.msra.mxu0 0.0
      %2764 = vmatpush.msra.mxu0 0.0
      %2765 = vmatpush.msra.mxu0 0.0
      %2766 = vmatpush.msra.mxu0 0.0
      %2767 = vmatpush.msra.mxu0 0.0
      %2768 = vmatpush.msra.mxu0 0.0
      %2769 = vmatpush.msra.mxu0 0.0
      %2770 = vmatpush.msra.mxu0 0.0
      %2771 = vmatpush.msra.mxu0 0.0
      %2772 = vmatpush.msra.mxu0 0.0
      %2773 = vmatpush.msra.mxu0 0.0
      %2774 = vmatpush.msra.mxu0 0.0
      %2775 = vmatpush.msra.mxu0 0.0
      %v2776 = vand.u32 %v2651, 4294901760
      %v2777 = vsub.f32 %v2651, %v2776
      %v2778 = vand.u32 %v2777, 4294901760
      %2779 = vmatpush.msra.mxu0 %v2778
      %v2780 = vand.u32 %v2643, 4294901760
      %v2781 = vsub.f32 %v2643, %v2780
      %v2782 = vand.u32 %v2781, 4294901760
      %2783 = vmatpush.msra.mxu0 %v2782
      %v2784 = vand.u32 %v2648, 4294901760
      %2785 = vmatmul.f32.gmra.mxu0 %v2784
      %v2786 = vpop.f32.mrf.mxu0
      %v2787 = vadd.f32 %v2760, %v2786
      %2788 = vdwg.mxu0
      %2789 = vmatpush.msra.mxu0 0.0
      %2790 = vmatpush.msra.mxu0 0.0
      %2791 = vmatpush.msra.mxu0 0.0
      %2792 = vmatpush.msra.mxu0 0.0
      %2793 = vmatpush.msra.mxu0 0.0
      %2794 = vmatpush.msra.mxu0 0.0
      %2795 = vmatpush.msra.mxu0 0.0
      %2796 = vmatpush.msra.mxu0 0.0
      %2797 = vmatpush.msra.mxu0 0.0
      %2798 = vmatpush.msra.mxu0 0.0
      %2799 = vmatpush.msra.mxu0 0.0
      %2800 = vmatpush.msra.mxu0 0.0
      %2801 = vmatpush.msra.mxu0 0.0
      %2802 = vmatpush.msra.mxu0 0.0
      %v2803 = vand.u32 %v2651, 4294901760
      %2804 = vmatpush.msra.mxu0 %v2803
      %v2805 = vand.u32 %v2643, 4294901760
      %2806 = vmatpush.msra.mxu0 %v2805
      %v2807 = vand.u32 %v2648, 4294901760
      %2808 = vmatmul.f32.gmra.mxu0 %v2807
      %v2809 = vpop.f32.mrf.mxu0
      %v2810 = vadd.f32 %v2787, %v2809
      %2811 = vdwg.mxu0
      %s2812 = scalar_lea.vmem %s6, 8
      %v2813 = vld [vmem:[%s2812] sm:$0x3f]
      %v2815 = vsel %vm2646, %v2813, 0
      %2817 = vmatpush.msra.mxu0 0.0
      %2818 = vmatpush.msra.mxu0 0.0
      %2819 = vmatpush.msra.mxu0 0.0
      %2820 = vmatpush.msra.mxu0 0.0
      %2821 = vmatpush.msra.mxu0 0.0
      %2822 = vmatpush.msra.mxu0 0.0
      %2823 = vmatpush.msra.mxu0 0.0
      %2824 = vmatpush.msra.mxu0 0.0
      %2825 = vmatpush.msra.mxu0 0.0
      %2826 = vmatpush.msra.mxu0 0.0
      %2827 = vmatpush.msra.mxu0 0.0
      %2828 = vmatpush.msra.mxu0 0.0
      %2829 = vmatpush.msra.mxu0 0.0
      %2830 = vmatpush.msra.mxu0 0.0
      %v2831 = vand.u32 %v2651, 4294901760
      %2832 = vmatpush.msra.mxu0 %v2831
      %v2833 = vand.u32 %v2643, 4294901760
      %2834 = vmatpush.msra.mxu0 %v2833
      %v2835 = vand.u32 %v2815, 4294901760
      %v2836 = vsub.f32 %v2815, %v2835
      %v2837 = vand.u32 %v2836, 4294901760
      %v2838 = vsub.f32 %v2836, %v2837
      %v2839 = vand.u32 %v2838, 4294901760
      %2840 = vmatmul.f32.gmra.mxu0 %v2839
      %v2841 = vpop.f32.mrf.mxu0
      %v2842 = vadd.f32 0.0, %v2841
      %2843 = vdwg.mxu0
      %2844 = vmatpush.msra.mxu0 0.0
      %2845 = vmatpush.msra.mxu0 0.0
      %2846 = vmatpush.msra.mxu0 0.0
      %2847 = vmatpush.msra.mxu0 0.0
      %2848 = vmatpush.msra.mxu0 0.0
      %2849 = vmatpush.msra.mxu0 0.0
      %2850 = vmatpush.msra.mxu0 0.0
      %2851 = vmatpush.msra.mxu0 0.0
      %2852 = vmatpush.msra.mxu0 0.0
      %2853 = vmatpush.msra.mxu0 0.0
      %2854 = vmatpush.msra.mxu0 0.0
      %2855 = vmatpush.msra.mxu0 0.0
      %2856 = vmatpush.msra.mxu0 0.0
      %2857 = vmatpush.msra.mxu0 0.0
      %v2858 = vand.u32 %v2651, 4294901760
      %v2859 = vsub.f32 %v2651, %v2858
      %v2860 = vand.u32 %v2859, 4294901760
      %v2861 = vsub.f32 %v2859, %v2860
      %v2862 = vand.u32 %v2861, 4294901760
      %2863 = vmatpush.msra.mxu0 %v2862
      %v2864 = vand.u32 %v2643, 4294901760
      %v2865 = vsub.f32 %v2643, %v2864
      %v2866 = vand.u32 %v2865, 4294901760
      %v2867 = vsub.f32 %v2865, %v2866
      %v2868 = vand.u32 %v2867, 4294901760
      %2869 = vmatpush.msra.mxu0 %v2868
      %v2870 = vand.u32 %v2815, 4294901760
      %2871 = vmatmul.f32.gmra.mxu0 %v2870
      %v2872 = vpop.f32.mrf.mxu0
      %v2873 = vadd.f32 %v2842, %v2872
      %2874 = vdwg.mxu0
      %2875 = vmatpush.msra.mxu0 0.0
      %2876 = vmatpush.msra.mxu0 0.0
      %2877 = vmatpush.msra.mxu0 0.0
      %2878 = vmatpush.msra.mxu0 0.0
      %2879 = vmatpush.msra.mxu0 0.0
      %2880 = vmatpush.msra.mxu0 0.0
      %2881 = vmatpush.msra.mxu0 0.0
      %2882 = vmatpush.msra.mxu0 0.0
      %2883 = vmatpush.msra.mxu0 0.0
      %2884 = vmatpush.msra.mxu0 0.0
      %2885 = vmatpush.msra.mxu0 0.0
      %2886 = vmatpush.msra.mxu0 0.0
      %2887 = vmatpush.msra.mxu0 0.0
      %2888 = vmatpush.msra.mxu0 0.0
      %v2889 = vand.u32 %v2651, 4294901760
      %v2890 = vsub.f32 %v2651, %v2889
      %2891 = vmatpush.msra.mxu0 %v2890
      %v2892 = vand.u32 %v2643, 4294901760
      %v2893 = vsub.f32 %v2643, %v2892
      %2894 = vmatpush.msra.mxu0 %v2893
      %v2895 = vand.u32 %v2815, 4294901760
      %v2896 = vsub.f32 %v2815, %v2895
      %2897 = vmatmul.f32.gmra.mxu0 %v2896
      %v2898 = vpop.f32.mrf.mxu0
      %v2899 = vadd.f32 %v2873, %v2898
      %2900 = vdwg.mxu0
      %2901 = vmatpush.msra.mxu0 0.0
      %2902 = vmatpush.msra.mxu0 0.0
      %2903 = vmatpush.msra.mxu0 0.0
      %2904 = vmatpush.msra.mxu0 0.0
      %2905 = vmatpush.msra.mxu0 0.0
      %2906 = vmatpush.msra.mxu0 0.0
      %2907 = vmatpush.msra.mxu0 0.0
      %2908 = vmatpush.msra.mxu0 0.0
      %2909 = vmatpush.msra.mxu0 0.0
      %2910 = vmatpush.msra.mxu0 0.0
      %2911 = vmatpush.msra.mxu0 0.0
      %2912 = vmatpush.msra.mxu0 0.0
      %2913 = vmatpush.msra.mxu0 0.0
      %2914 = vmatpush.msra.mxu0 0.0
      %v2915 = vand.u32 %v2651, 4294901760
      %2916 = vmatpush.msra.mxu0 %v2915
      %v2917 = vand.u32 %v2643, 4294901760
      %2918 = vmatpush.msra.mxu0 %v2917
      %v2919 = vand.u32 %v2815, 4294901760
      %v2920 = vsub.f32 %v2815, %v2919
      %v2921 = vand.u32 %v2920, 4294901760
      %2922 = vmatmul.f32.gmra.mxu0 %v2921
      %v2923 = vpop.f32.mrf.mxu0
      %v2924 = vadd.f32 %v2899, %v2923
      %2925 = vdwg.mxu0
      %2926 = vmatpush.msra.mxu0 0.0
      %2927 = vmatpush.msra.mxu0 0.0
      %2928 = vmatpush.msra.mxu0 0.0
      %2929 = vmatpush.msra.mxu0 0.0
      %2930 = vmatpush.msra.mxu0 0.0
      %2931 = vmatpush.msra.mxu0 0.0
      %2932 = vmatpush.msra.mxu0 0.0
      %2933 = vmatpush.msra.mxu0 0.0
      %2934 = vmatpush.msra.mxu0 0.0
      %2935 = vmatpush.msra.mxu0 0.0
      %2936 = vmatpush.msra.mxu0 0.0
      %2937 = vmatpush.msra.mxu0 0.0
      %2938 = vmatpush.msra.mxu0 0.0
      %2939 = vmatpush.msra.mxu0 0.0
      %v2940 = vand.u32 %v2651, 4294901760
      %v2941 = vsub.f32 %v2651, %v2940
      %v2942 = vand.u32 %v2941, 4294901760
      %2943 = vmatpush.msra.mxu0 %v2942
      %v2944 = vand.u32 %v2643, 4294901760
      %v2945 = vsub.f32 %v2643, %v2944
      %v2946 = vand.u32 %v2945, 4294901760
      %2947 = vmatpush.msra.mxu0 %v2946
      %v2948 = vand.u32 %v2815, 4294901760
      %2949 = vmatmul.f32.gmra.mxu0 %v2948
      %v2950 = vpop.f32.mrf.mxu0
      %v2951 = vadd.f32 %v2924, %v2950
      %2952 = vdwg.mxu0
      %2953 = vmatpush.msra.mxu0 0.0
      %2954 = vmatpush.msra.mxu0 0.0
      %2955 = vmatpush.msra.mxu0 0.0
      %2956 = vmatpush.msra.mxu0 0.0
      %2957 = vmatpush.msra.mxu0 0.0
      %2958 = vmatpush.msra.mxu0 0.0
      %2959 = vmatpush.msra.mxu0 0.0
      %2960 = vmatpush.msra.mxu0 0.0
      %2961 = vmatpush.msra.mxu0 0.0
      %2962 = vmatpush.msra.mxu0 0.0
      %2963 = vmatpush.msra.mxu0 0.0
      %2964 = vmatpush.msra.mxu0 0.0
      %2965 = vmatpush.msra.mxu0 0.0
      %2966 = vmatpush.msra.mxu0 0.0
      %v2967 = vand.u32 %v2651, 4294901760
      %2968 = vmatpush.msra.mxu0 %v2967
      %v2969 = vand.u32 %v2643, 4294901760
      %2970 = vmatpush.msra.mxu0 %v2969
      %v2971 = vand.u32 %v2815, 4294901760
      %2972 = vmatmul.f32.gmra.mxu0 %v2971
      %v2973 = vpop.f32.mrf.mxu0
      %v2974 = vadd.f32 %v2951, %v2973
      %2975 = vdwg.mxu0
      %v2976 = vmax.f32 %v2810, %v2974
      %vm2977 = vcmask 291840
      %2978 = vst.msk [vmem:[%s276] sm:$0x3f] %vm2977, %v2976
      %p2979 = scmp.lt.s32.totalorder %s18, 1
      %s2980 = scalar_select %p2979, %s18, 1
      %s2981 = smul.addr %s2980, 8
      %s2982 = scalar_lea.vmem %s7, %s2981
      // Predicated region
      $region49: #{contracting_pallas.1} parent=47 // pred_check
        %p2983 = pneg %p188
      $region50: #{contracting_pallas.1} parent=47 // pred_check_branch
        %2985 = sbr.rel (%p2983) target = $region52
      $region51: #{contracting_pallas.1} parent=47 // pred_region
        _
      $region52: #{contracting_pallas.1} parent=47 // pred_fallthru
        _
    $region48: #{contracting_pallas.1} parent=5 // pred_fallthru
      _
    %p2986 = scmp.le.s32.totalorder 2, %s13
    // Predicated region
    $region53: #{contracting_pallas.1} parent=5 // pred_check
      %p2987 = pneg %p2986
    $region54: #{contracting_pallas.1} parent=5 // pred_check_branch
      %2989 = sbr.rel (%p2987) target = $region56
    $region55: #{contracting_pallas.1} parent=5 // pred_region
      %s2990 = ssub.s32 %s13, 2
      // Predicated region
      $region57: #{contracting_pallas.1} parent=55 // pred_check
        %p2991 = pneg %p194
      $region58: #{contracting_pallas.1} parent=55 // pred_check_branch
        %2993 = sbr.rel (%p2991) target = $region60
      $region59: #{contracting_pallas.1} parent=55 // pred_region
        %p2994 = scmp.lt.s32.totalorder %s19, 1
        %s2995 = scalar_select %p2994, %s19, 1
        %s2996 = smul.addr %s2995, 8
        %s2997 = scalar_lea.vmem %s7, %s2996
      $region60: #{contracting_pallas.1} parent=55 // pred_fallthru
        _
    $region56: #{contracting_pallas.1} parent=5 // pred_fallthru
      _
  $region6: #{contracting_pallas.1} parent=0 // loop_footer
    %s17 = sadd.s32 1, %s13
  $region7: #{contracting_pallas.1} parent=0 // loop_footer_branch
    %12 = sbr.rel target = $region3
  $region8: #{contracting_pallas.1} parent=0 // loop_exit
    _

</llo_original>
